<compile_context>
chip_gen: v6e
topology: v6e:2x2x1
jax: 0.10.0
libtpu: 0.0.40
codegen_flags: <defaults>
</compile_context>

<pallas_src>
import functools

import jax
import jax.numpy as jnp
from jax.experimental import pallas as pl
from jax.experimental.pallas import tpu as pltpu


def _round_up(x, m):
    return (x + m - 1) // m * m


# --------------------------------------------------------------------------- #
# Fused kernel: conv1 -> ReLU -> conv2 -> (+residual | +1x1 downsample) -> ReLU
# --------------------------------------------------------------------------- #
def _fused_block_kernel(*refs, kh, kw, dh, dw, H, Wp, shift, downsample):
    """Whole ResidualBlock for one batch element, entirely in VMEM.

    Spatial layout is "flattened row-padded": index j = h*Wp + wp of a length
    L = H*Wp vector is output row h (time), padded column wp.  A dilated conv
    tap (ki, kj) is then the contiguous window [off, off+L) of the padded
    input (length Lp) with off = ki*dh*Wp + kj*dw.  Columns wp >= W of any
    conv output are garbage: they are zeroed with `mask_ref` before being fed
    to conv2, and simply dropped by the wrapper for the final output.
    """
    if downsample:
        (x_ref, mask_ref, w1_ref, b1_ref, w2_ref, b2_ref,
         wds_ref, bds_ref, o_ref, h1p_ref) = refs
    else:
        (x_ref, mask_ref, w1_ref, b1_ref, w2_ref, b2_ref,
         o_ref, h1p_ref) = refs

    L = H * Wp
    ph = (kh - 1) * dh
    pw = ((kw - 1) * dw) // 2
    n_taps = kh * kw

    # ---- conv1: per-tap (Cout,Cin)@(Cin,L) matmuls, f32 accumulation ----
    acc1 = None
    for t in range(n_taps):
        ki, kj = divmod(t, kw)
        off = ki * dh * Wp + kj * dw
        xt = x_ref[:, off:off + L]                                 # (Cin, L)
        part = jnp.dot(w1_ref[t], xt, preferred_element_type=jnp.float32)
        acc1 = part if acc1 is None else acc1 + part
    # bias + ReLU, then zero the W-padding columns so conv2 sees true zeros.
    h1 = jnp.maximum(acc1 + b1_ref[...], 0.0) * mask_ref[...]      # (Cout, L) f32

    # ---- stage relu(conv1) into the zero-padded VMEM scratch ----
    # scratch = causal-H pad + symmetric-W pad built as leading zeros; `shift`
    # extra zeros make the data store start at a 128-lane-aligned offset.
    h1p_ref[...] = jnp.zeros_like(h1p_ref)
    store_off = shift + ph * Wp + pw
    h1p_ref[:, pl.ds(store_off, L)] = h1.astype(h1p_ref.dtype)

    # ---- conv2: per-tap (Cout,Cout)@(Cout,L) matmuls ----
    acc2 = None
    for t in range(n_taps):
        ki, kj = divmod(t, kw)
        off = shift + ki * dh * Wp + kj * dw
        ht = h1p_ref[:, off:off + L]                               # (Cout, L)
        part = jnp.dot(w2_ref[t], ht, preferred_element_type=jnp.float32)
        acc2 = part if acc2 is None else acc2 + part
    acc2 = acc2 + b2_ref[...]

    # ---- residual from the same VMEM-resident input block (compute dtype) ----
    res = x_ref[:, ph * Wp + pw:ph * Wp + pw + L]                  # == original x
    if downsample:
        acc2 = acc2 + jnp.dot(wds_ref[...], res, preferred_element_type=jnp.float32)
        acc2 = acc2 + bds_ref[...]
    else:
        acc2 = acc2 + res.astype(jnp.float32)

    o_ref[...] = jnp.maximum(acc2, 0.0).astype(o_ref.dtype)


# --------------------------------------------------------------------------- #
# Wrapper: layout prep (pad + flatten), specs, single pallas_call.
# --------------------------------------------------------------------------- #
def residual_block_forward(x_nchw, params, kernel_size, dilation, *,
                           compute_dtype=jnp.bfloat16):
    kh, kw = kernel_size
    dh, dw = dilation
    ph = (kh - 1) * dh
    assert ((kw - 1) * dw) % 2 == 0, (
        "ResidualBlock requires (kernel_size[1]-1)*dilation[1] to be even; "
        "otherwise the PyTorch module's residual add itself shape-errors.")
    pw = ((kw - 1) * dw) // 2

    N, Cin, H, W = x_nchw.shape
    Cout = params["w1"].shape[0]
    out_dtype = x_nchw.dtype

    Wp = W + 2 * pw                  # padded row width
    Hp = H + ph                      # padded (causal) height
    L = H * Wp                       # flattened output length per channel
    Lp = Hp * Wp + 2 * pw            # flattened padded input length (+ tail for tap reads)

    downsample = params.get("w_ds") is not None
    if not downsample and Cin != Cout:
        raise ValueError("identity residual needs in_channels == out_channels")

    # -- host-side layout prep (cheap, O(input) bytes; no im2col inflation) --
    xp = jnp.pad(x_nchw.astype(compute_dtype), ((0, 0), (0, 0), (ph, 0), (pw, pw)))
    xflat = jnp.pad(xp.reshape(N, Cin, Hp * Wp), ((0, 0), (0, 0), (0, Lp - Hp * Wp)))

    # valid-column mask (zeroes the W-pad columns of the conv1 output rows)
    col = jnp.arange(L, dtype=jnp.int32) % Wp
    mask = (col < W).astype(jnp.float32).reshape(1, L)

    n_taps = kh * kw
    w1 = jnp.transpose(params["w1"], (2, 3, 0, 1)).reshape(n_taps, Cout, Cin)
    w2 = jnp.transpose(params["w2"], (2, 3, 0, 1)).reshape(n_taps, Cout, Cout)
    w1 = w1.astype(compute_dtype)
    w2 = w2.astype(compute_dtype)
    b1 = params["b1"].astype(jnp.float32).reshape(Cout, 1)
    b2 = params["b2"].astype(jnp.float32).reshape(Cout, 1)

    # scratch geometry: data store starts at a 128-aligned lane offset
    D = ph * Wp + pw
    D_round = _round_up(D, 128)
    shift = D_round - D
    L2p = _round_up(shift + ph * Wp + 2 * pw + L, 128)

    # -- VMEM accounting (all double-buffered blocks + scratch + f32 live values) --
    cbytes = jnp.dtype(compute_dtype).itemsize
    obytes = jnp.dtype(out_dtype).itemsize
    vmem_est = (2 * Cin * Lp * cbytes                      # x block, double-buffered
                + 2 * Cout * L * obytes                    # out block, double-buffered
                + Cout * L2p * cbytes                      # h1 scratch
                + n_taps * Cout * (Cin + Cout) * cbytes    # weights (resident)
                + (2 * Cout + Cin * Cout + Cout) * 4       # biases + downsample
                + L * 4                                    # mask (resident)
                + 4 * Cout * L * 4)                        # f32 accumulators / temps
    vmem_budget = 40 * 1024 * 1024                         # conservative for v7x (64 MiB)
    if vmem_est > vmem_budget:
        # TODO(synk): tile H (time) with a 2*(kh-1)*dh dilated halo for large H*W.
        raise NotImplementedError(
            f"per-step VMEM footprint {vmem_est} B exceeds budget {vmem_budget} B")

    kernel = functools.partial(
        _fused_block_kernel, kh=kh, kw=kw, dh=dh, dw=dw,
        H=H, Wp=Wp, shift=shift, downsample=downsample)

    in_specs = [
        pl.BlockSpec((pl.Squeezed(), Cin, Lp), lambda n: (n, 0, 0)),   # padded input
        pl.BlockSpec((1, L), lambda n: (0, 0)),                        # column mask
        pl.BlockSpec((n_taps, Cout, Cin), lambda n: (0, 0, 0)),        # w1 (tap-major)
        pl.BlockSpec((Cout, 1), lambda n: (0, 0)),                     # b1
        pl.BlockSpec((n_taps, Cout, Cout), lambda n: (0, 0, 0)),       # w2 (tap-major)
        pl.BlockSpec((Cout, 1), lambda n: (0, 0)),                     # b2
    ]
    args = [xflat, mask, w1, b1, w2, b2]
    if downsample:
        wds = params["w_ds"].reshape(Cout, Cin).astype(compute_dtype)
        bds = params["b_ds"].astype(jnp.float32).reshape(Cout, 1)
        in_specs += [pl.BlockSpec((Cout, Cin), lambda n: (0, 0)),
                     pl.BlockSpec((Cout, 1), lambda n: (0, 0))]
        args += [wds, bds]

    flops = 2 * N * Cout * L * (n_taps * (Cin + Cout) + (Cin if downsample else 0))
    bytes_accessed = (xflat.size * cbytes + N * Cout * L * obytes
                      + (w1.size + w2.size) * cbytes + mask.size * 4 + 2 * Cout * 4)
    if downsample:
        bytes_accessed += (Cin * Cout) * cbytes + Cout * 4

    out_flat = pl.pallas_call(
        kernel,
        out_shape=jax.ShapeDtypeStruct((N, Cout, L), out_dtype),
        grid_spec=pltpu.PrefetchScalarGridSpec(
            num_scalar_prefetch=0,
            grid=(N,),
            in_specs=in_specs,
            out_specs=pl.BlockSpec((pl.Squeezed(), Cout, L), lambda n: (n, 0, 0)),
            scratch_shapes=[pltpu.VMEM((Cout, L2p), compute_dtype)],
        ),
        compiler_params=pltpu.CompilerParams(
            dimension_semantics=("parallel",),
            vmem_limit_bytes=int(min(48 * 1024 * 1024,
                                     max(32 * 1024 * 1024, 2 * vmem_est))),
        ),
        cost_estimate=pl.CostEstimate(
            flops=int(flops), transcendentals=0, bytes_accessed=int(bytes_accessed)),
    )(*args)

    # drop the W-padding columns of the flattened output rows -> (N, Cout, H, W)
    return out_flat.reshape(N, Cout, H, Wp)[:, :, :, :W]


# --------------------------------------------------------------------------- #
# Pure-JAX reference (matches the PyTorch forward; optional bf16 MXU operands).
# --------------------------------------------------------------------------- #
def residual_block_reference(x, params, kernel_size, dilation,
                             compute_dtype=jnp.float32):
    kh, kw = kernel_size
    dh, dw = dilation
    ph = (kh - 1) * dh
    pw = (kw - 1) * dw // 2

    def conv(inp, w, b, rhs_dil):
        y = jax.lax.conv_general_dilated(
            inp.astype(compute_dtype), w.astype(compute_dtype),
            window_strides=(1, 1), padding="VALID", rhs_dilation=rhs_dil,
            dimension_numbers=("NCHW", "OIHW", "NCHW"),
            preferred_element_type=jnp.float32,
            precision=jax.lax.Precision.HIGHEST,
        )
        return y + b[None, :, None, None].astype(jnp.float32)

    residual = x
    xp = jnp.pad(x, ((0, 0), (0, 0), (ph, 0), (pw, pw)))
    out = jax.nn.relu(conv(xp, params["w1"], params["b1"], (dh, dw)))
    outp = jnp.pad(out, ((0, 0), (0, 0), (ph, 0), (pw, pw)))
    out = conv(outp, params["w2"], params["b2"], (dh, dw))
    if params.get("w_ds") is not None:
        residual = conv(residual, params["w_ds"], params["b_ds"], (1, 1))
    return jax.nn.relu(out + residual.astype(jnp.float32))


def init_params(key, in_channels, out_channels, kernel_size):
    kh, kw = kernel_size
    ks = jax.random.split(key, 6)
    scale = 0.1
    params = {
        "w1": scale * jax.random.normal(ks[0], (out_channels, in_channels, kh, kw), jnp.float32),
        "b1": scale * jax.random.normal(ks[1], (out_channels,), jnp.float32),
        "w2": scale * jax.random.normal(ks[2], (out_channels, out_channels, kh, kw), jnp.float32),
        "b2": scale * jax.random.normal(ks[3], (out_channels,), jnp.float32),
    }
    if in_channels != out_channels:
        params["w_ds"] = scale * jax.random.normal(
            ks[4], (out_channels, in_channels, 1, 1), jnp.float32)
        params["b_ds"] = scale * jax.random.normal(ks[5], (out_channels,), jnp.float32)
    else:
        params["w_ds"] = None
        params["b_ds"] = None
    return params


if __name__ == "__main__":
    # batch=2, in_channels=4, out_channels=8, H=W=16, kernel_size=(3,3),
    # dilation=(2,1): causal pad in H, symmetric in W, downsample path active.
    N, Cin, Cout, H, W = 2, 4, 8, 16, 16
    kernel_size = (3, 3)
    dilation = (2, 1)

    key = jax.random.PRNGKey(0)
    k_x, k_p, k_p2 = jax.random.split(key, 3)
    x = jax.random.normal(k_x, (N, Cin, H, W), jnp.float32)
    params = init_params(k_p, Cin, Cout, kernel_size)

    # 1) f32 MXU-operand path: structural check vs the f32 reference.
    #    (in-kernel f32 matmuls use the MXU's default f32 passes, so compare at
    #     a few-1e-3 tolerance rather than bit-exact.)
    out_f32 = jax.block_until_ready(
        residual_block_forward(x, params, kernel_size, dilation,
                               compute_dtype=jnp.float32))
    ref_f32 = jax.block_until_ready(
        residual_block_reference(x, params, kernel_size, dilation,
                                 compute_dtype=jnp.float32))
    assert out_f32.shape == (N, Cout, H, W), out_f32.shape
    assert jnp.allclose(out_f32, ref_f32, atol=5e-3, rtol=5e-3), (
        float(jnp.max(jnp.abs(out_f32 - ref_f32))))

    # 2) production bf16-operand path vs a matched-precision reference.
    out_bf16 = jax.block_until_ready(
        residual_block_forward(x, params, kernel_size, dilation))
    ref_bf16 = jax.block_until_ready(
        residual_block_reference(x, params, kernel_size, dilation,
                                 compute_dtype=jnp.bfloat16))
    assert out_bf16.shape == (N, Cout, H, W), out_bf16.shape
    assert jnp.allclose(out_bf16, ref_bf16, atol=2e-2, rtol=2e-2), (
        float(jnp.max(jnp.abs(out_bf16 - ref_bf16))))

    # 3) identity-residual path (in_channels == out_channels, no downsample).
    x_id = jax.random.normal(k_x, (N, Cout, H, W), jnp.float32)
    params_id = init_params(k_p2, Cout, Cout, kernel_size)
    out_id = jax.block_until_ready(
        residual_block_forward(x_id, params_id, kernel_size, dilation))
    ref_id = jax.block_until_ready(
        residual_block_reference(x_id, params_id, kernel_size, dilation,
                                 compute_dtype=jnp.bfloat16))
    assert out_id.shape == (N, Cout, H, W), out_id.shape
    assert jnp.allclose(out_id, ref_id, atol=2e-2, rtol=2e-2), (
        float(jnp.max(jnp.abs(out_id - ref_id))))

    print("KERNEL_OK")
</pallas_src>

<mosaic_0001>
module attributes {stable_mosaic.version = 11 : i64} {
  func.func @_fused_block_kernel(%arg0: i32, %arg1: memref<1x4x362xf32, #tpu.memory_space<vmem>>, %arg2: memref<1x288xf32, #tpu.memory_space<vmem>>, %arg3: memref<9x8x4xf32, #tpu.memory_space<vmem>>, %arg4: memref<8x1xf32, #tpu.memory_space<vmem>>, %arg5: memref<9x8x8xf32, #tpu.memory_space<vmem>>, %arg6: memref<8x1xf32, #tpu.memory_space<vmem>>, %arg7: memref<8x4xf32, #tpu.memory_space<vmem>>, %arg8: memref<8x1xf32, #tpu.memory_space<vmem>>, %arg9: memref<1x8x288xf32, #tpu.memory_space<vmem>>, %arg10: memref<8x512xf32, #tpu.memory_space<vmem>>) attributes {dimension_semantics = [#tpu.dimension_semantics<parallel>], iteration_bounds = array<i64: 2>, scalar_prefetch = 0 : i64, scratch_operands = 1 : i64, tpu.core_type = #tpu.core_type<tc>, window_params = [{transform_indices = @transform_0, window_bounds = array<i64: 1, 4, 362>}, {pipeline_mode = #tpu.pipeline_mode<synchronous>, transform_indices = @transform_1, window_bounds = array<i64: 1, 288>}, {pipeline_mode = #tpu.pipeline_mode<synchronous>, transform_indices = @transform_2, window_bounds = array<i64: 9, 8, 4>}, {pipeline_mode = #tpu.pipeline_mode<synchronous>, transform_indices = @transform_3, window_bounds = array<i64: 8, 1>}, {pipeline_mode = #tpu.pipeline_mode<synchronous>, transform_indices = @transform_4, window_bounds = array<i64: 9, 8, 8>}, {pipeline_mode = #tpu.pipeline_mode<synchronous>, transform_indices = @transform_5, window_bounds = array<i64: 8, 1>}, {pipeline_mode = #tpu.pipeline_mode<synchronous>, transform_indices = @transform_6, window_bounds = array<i64: 8, 4>}, {pipeline_mode = #tpu.pipeline_mode<synchronous>, transform_indices = @transform_7, window_bounds = array<i64: 8, 1>}, {transform_indices = @transform_8, window_bounds = array<i64: 1, 8, 288>}]} {
    %c0 = arith.constant 0 : index
    %c0_0 = arith.constant 0 : index
    %c0_1 = arith.constant 0 : index
    %0 = vector.load %arg1[%c0, %c0_0, %c0_1] : memref<1x4x362xf32, #tpu.memory_space<vmem>>, vector<1x4x288xf32>
    %1 = vector.shape_cast %0 : vector<1x4x288xf32> to vector<4x288xf32>
    %c0_2 = arith.constant 0 : index
    %c0_3 = arith.constant 0 : index
    %c0_4 = arith.constant 0 : index
    %2 = vector.load %arg3[%c0_2, %c0_3, %c0_4] : memref<9x8x4xf32, #tpu.memory_space<vmem>>, vector<1x8x4xf32>
    %3 = vector.shape_cast %2 : vector<1x8x4xf32> to vector<8x4xf32>
    %cst = arith.constant dense<0.000000e+00> : vector<8x288xf32>
    %4 = tpu.matmul %3, %1, %cst {dimension_numbers = #tpu.dot_dimension_numbers<[1], [0], [0], [1], [0, 0, 1, 1], [], []>} : vector<8x4xf32>, vector<4x288xf32>, vector<8x288xf32> -> vector<8x288xf32>
    %c0_5 = arith.constant 0 : index
    %c0_6 = arith.constant 0 : index
    %c1 = arith.constant 1 : index
    %5 = vector.load %arg1[%c0_5, %c0_6, %c1] : memref<1x4x362xf32, #tpu.memory_space<vmem>>, vector<1x4x288xf32>
    %6 = vector.shape_cast %5 : vector<1x4x288xf32> to vector<4x288xf32>
    %c1_7 = arith.constant 1 : index
    %c0_8 = arith.constant 0 : index
    %c0_9 = arith.constant 0 : index
    %7 = vector.load %arg3[%c1_7, %c0_8, %c0_9] : memref<9x8x4xf32, #tpu.memory_space<vmem>>, vector<1x8x4xf32>
    %8 = vector.shape_cast %7 : vector<1x8x4xf32> to vector<8x4xf32>
    %cst_10 = arith.constant dense<0.000000e+00> : vector<8x288xf32>
    %9 = tpu.matmul %8, %6, %cst_10 {dimension_numbers = #tpu.dot_dimension_numbers<[1], [0], [0], [1], [0, 0, 1, 1], [], []>} : vector<8x4xf32>, vector<4x288xf32>, vector<8x288xf32> -> vector<8x288xf32>
    %10 = arith.addf %4, %9 : vector<8x288xf32>
    %c0_11 = arith.constant 0 : index
    %c0_12 = arith.constant 0 : index
    %c2 = arith.constant 2 : index
    %11 = vector.load %arg1[%c0_11, %c0_12, %c2] : memref<1x4x362xf32, #tpu.memory_space<vmem>>, vector<1x4x288xf32>
    %12 = vector.shape_cast %11 : vector<1x4x288xf32> to vector<4x288xf32>
    %c2_13 = arith.constant 2 : index
    %c0_14 = arith.constant 0 : index
    %c0_15 = arith.constant 0 : index
    %13 = vector.load %arg3[%c2_13, %c0_14, %c0_15] : memref<9x8x4xf32, #tpu.memory_space<vmem>>, vector<1x8x4xf32>
    %14 = vector.shape_cast %13 : vector<1x8x4xf32> to vector<8x4xf32>
    %cst_16 = arith.constant dense<0.000000e+00> : vector<8x288xf32>
    %15 = tpu.matmul %14, %12, %cst_16 {dimension_numbers = #tpu.dot_dimension_numbers<[1], [0], [0], [1], [0, 0, 1, 1], [], []>} : vector<8x4xf32>, vector<4x288xf32>, vector<8x288xf32> -> vector<8x288xf32>
    %16 = arith.addf %10, %15 : vector<8x288xf32>
    %c0_17 = arith.constant 0 : index
    %c0_18 = arith.constant 0 : index
    %c36 = arith.constant 36 : index
    %17 = vector.load %arg1[%c0_17, %c0_18, %c36] : memref<1x4x362xf32, #tpu.memory_space<vmem>>, vector<1x4x288xf32>
    %18 = vector.shape_cast %17 : vector<1x4x288xf32> to vector<4x288xf32>
    %c3 = arith.constant 3 : index
    %c0_19 = arith.constant 0 : index
    %c0_20 = arith.constant 0 : index
    %19 = vector.load %arg3[%c3, %c0_19, %c0_20] : memref<9x8x4xf32, #tpu.memory_space<vmem>>, vector<1x8x4xf32>
    %20 = vector.shape_cast %19 : vector<1x8x4xf32> to vector<8x4xf32>
    %cst_21 = arith.constant dense<0.000000e+00> : vector<8x288xf32>
    %21 = tpu.matmul %20, %18, %cst_21 {dimension_numbers = #tpu.dot_dimension_numbers<[1], [0], [0], [1], [0, 0, 1, 1], [], []>} : vector<8x4xf32>, vector<4x288xf32>, vector<8x288xf32> -> vector<8x288xf32>
    %22 = arith.addf %16, %21 : vector<8x288xf32>
    %c0_22 = arith.constant 0 : index
    %c0_23 = arith.constant 0 : index
    %c37 = arith.constant 37 : index
    %23 = vector.load %arg1[%c0_22, %c0_23, %c37] : memref<1x4x362xf32, #tpu.memory_space<vmem>>, vector<1x4x288xf32>
    %24 = vector.shape_cast %23 : vector<1x4x288xf32> to vector<4x288xf32>
    %c4 = arith.constant 4 : index
    %c0_24 = arith.constant 0 : index
    %c0_25 = arith.constant 0 : index
    %25 = vector.load %arg3[%c4, %c0_24, %c0_25] : memref<9x8x4xf32, #tpu.memory_space<vmem>>, vector<1x8x4xf32>
    %26 = vector.shape_cast %25 : vector<1x8x4xf32> to vector<8x4xf32>
    %cst_26 = arith.constant dense<0.000000e+00> : vector<8x288xf32>
    %27 = tpu.matmul %26, %24, %cst_26 {dimension_numbers = #tpu.dot_dimension_numbers<[1], [0], [0], [1], [0, 0, 1, 1], [], []>} : vector<8x4xf32>, vector<4x288xf32>, vector<8x288xf32> -> vector<8x288xf32>
    %28 = arith.addf %22, %27 : vector<8x288xf32>
    %c0_27 = arith.constant 0 : index
    %c0_28 = arith.constant 0 : index
    %c38 = arith.constant 38 : index
    %29 = vector.load %arg1[%c0_27, %c0_28, %c38] : memref<1x4x362xf32, #tpu.memory_space<vmem>>, vector<1x4x288xf32>
    %30 = vector.shape_cast %29 : vector<1x4x288xf32> to vector<4x288xf32>
    %c5 = arith.constant 5 : index
    %c0_29 = arith.constant 0 : index
    %c0_30 = arith.constant 0 : index
    %31 = vector.load %arg3[%c5, %c0_29, %c0_30] : memref<9x8x4xf32, #tpu.memory_space<vmem>>, vector<1x8x4xf32>
    %32 = vector.shape_cast %31 : vector<1x8x4xf32> to vector<8x4xf32>
    %cst_31 = arith.constant dense<0.000000e+00> : vector<8x288xf32>
    %33 = tpu.matmul %32, %30, %cst_31 {dimension_numbers = #tpu.dot_dimension_numbers<[1], [0], [0], [1], [0, 0, 1, 1], [], []>} : vector<8x4xf32>, vector<4x288xf32>, vector<8x288xf32> -> vector<8x288xf32>
    %34 = arith.addf %28, %33 : vector<8x288xf32>
    %c0_32 = arith.constant 0 : index
    %c0_33 = arith.constant 0 : index
    %c72 = arith.constant 72 : index
    %35 = vector.load %arg1[%c0_32, %c0_33, %c72] : memref<1x4x362xf32, #tpu.memory_space<vmem>>, vector<1x4x288xf32>
    %36 = vector.shape_cast %35 : vector<1x4x288xf32> to vector<4x288xf32>
    %c6 = arith.constant 6 : index
    %c0_34 = arith.constant 0 : index
    %c0_35 = arith.constant 0 : index
    %37 = vector.load %arg3[%c6, %c0_34, %c0_35] : memref<9x8x4xf32, #tpu.memory_space<vmem>>, vector<1x8x4xf32>
    %38 = vector.shape_cast %37 : vector<1x8x4xf32> to vector<8x4xf32>
    %cst_36 = arith.constant dense<0.000000e+00> : vector<8x288xf32>
    %39 = tpu.matmul %38, %36, %cst_36 {dimension_numbers = #tpu.dot_dimension_numbers<[1], [0], [0], [1], [0, 0, 1, 1], [], []>} : vector<8x4xf32>, vector<4x288xf32>, vector<8x288xf32> -> vector<8x288xf32>
    %40 = arith.addf %34, %39 : vector<8x288xf32>
    %c0_37 = arith.constant 0 : index
    %c0_38 = arith.constant 0 : index
    %c73 = arith.constant 73 : index
    %41 = vector.load %arg1[%c0_37, %c0_38, %c73] : memref<1x4x362xf32, #tpu.memory_space<vmem>>, vector<1x4x288xf32>
    %42 = vector.shape_cast %41 : vector<1x4x288xf32> to vector<4x288xf32>
    %c7 = arith.constant 7 : index
    %c0_39 = arith.constant 0 : index
    %c0_40 = arith.constant 0 : index
    %43 = vector.load %arg3[%c7, %c0_39, %c0_40] : memref<9x8x4xf32, #tpu.memory_space<vmem>>, vector<1x8x4xf32>
    %44 = vector.shape_cast %43 : vector<1x8x4xf32> to vector<8x4xf32>
    %cst_41 = arith.constant dense<0.000000e+00> : vector<8x288xf32>
    %45 = tpu.matmul %44, %42, %cst_41 {dimension_numbers = #tpu.dot_dimension_numbers<[1], [0], [0], [1], [0, 0, 1, 1], [], []>} : vector<8x4xf32>, vector<4x288xf32>, vector<8x288xf32> -> vector<8x288xf32>
    %46 = arith.addf %40, %45 : vector<8x288xf32>
    %c0_42 = arith.constant 0 : index
    %c0_43 = arith.constant 0 : index
    %c74 = arith.constant 74 : index
    %47 = vector.load %arg1[%c0_42, %c0_43, %c74] : memref<1x4x362xf32, #tpu.memory_space<vmem>>, vector<1x4x288xf32>
    %48 = vector.shape_cast %47 : vector<1x4x288xf32> to vector<4x288xf32>
    %c8 = arith.constant 8 : index
    %c0_44 = arith.constant 0 : index
    %c0_45 = arith.constant 0 : index
    %49 = vector.load %arg3[%c8, %c0_44, %c0_45] : memref<9x8x4xf32, #tpu.memory_space<vmem>>, vector<1x8x4xf32>
    %50 = vector.shape_cast %49 : vector<1x8x4xf32> to vector<8x4xf32>
    %cst_46 = arith.constant dense<0.000000e+00> : vector<8x288xf32>
    %51 = tpu.matmul %50, %48, %cst_46 {dimension_numbers = #tpu.dot_dimension_numbers<[1], [0], [0], [1], [0, 0, 1, 1], [], []>} : vector<8x4xf32>, vector<4x288xf32>, vector<8x288xf32> -> vector<8x288xf32>
    %52 = arith.addf %46, %51 : vector<8x288xf32>
    %c0_47 = arith.constant 0 : index
    %c0_48 = arith.constant 0 : index
    %53 = vector.load %arg4[%c0_47, %c0_48] : memref<8x1xf32, #tpu.memory_space<vmem>>, vector<8x1xf32>
    %54 = vector.broadcast %53 : vector<8x1xf32> to vector<8x288xf32>
    %55 = arith.addf %52, %54 : vector<8x288xf32>
    %cst_49 = arith.constant 0.000000e+00 : f32
    %56 = vector.broadcast %cst_49 : f32 to vector<8x288xf32>
    %57 = arith.maximumf %55, %56 : vector<8x288xf32>
    %c0_50 = arith.constant 0 : index
    %c0_51 = arith.constant 0 : index
    %58 = vector.load %arg2[%c0_50, %c0_51] : memref<1x288xf32, #tpu.memory_space<vmem>>, vector<1x288xf32>
    %59 = vector.broadcast %58 : vector<1x288xf32> to vector<8x288xf32>
    %60 = arith.mulf %57, %59 : vector<8x288xf32>
    %cst_52 = arith.constant 0.000000e+00 : f32
    %61 = vector.broadcast %cst_52 : f32 to vector<8x512xf32>
    %c0_53 = arith.constant 0 : index
    %c0_54 = arith.constant 0 : index
    %62 = vector.load %arg10[%c0_53, %c0_54] : memref<8x512xf32, #tpu.memory_space<vmem>>, vector<8x512xf32>
    tpu.vector_store %arg10[%c0_53, %c0_54], %61 {strides = array<i32>} : memref<8x512xf32, #tpu.memory_space<vmem>>, vector<8x512xf32>,
    %c0_55 = arith.constant 0 : index
    %c128 = arith.constant 128 : index
    %63 = vector.load %arg10[%c0_55, %c128] : memref<8x512xf32, #tpu.memory_space<vmem>>, vector<8x288xf32>
    tpu.vector_store %arg10[%c0_55, %c128], %60 {strides = array<i32>} : memref<8x512xf32, #tpu.memory_space<vmem>>, vector<8x288xf32>,
    %c0_56 = arith.constant 0 : index
    %c55 = arith.constant 55 : index
    %64 = vector.load %arg10[%c0_56, %c55] : memref<8x512xf32, #tpu.memory_space<vmem>>, vector<8x288xf32>
    %c0_57 = arith.constant 0 : index
    %c0_58 = arith.constant 0 : index
    %c0_59 = arith.constant 0 : index
    %65 = vector.load %arg5[%c0_57, %c0_58, %c0_59] : memref<9x8x8xf32, #tpu.memory_space<vmem>>, vector<1x8x8xf32>
    %66 = vector.shape_cast %65 : vector<1x8x8xf32> to vector<8x8xf32>
    %cst_60 = arith.constant dense<0.000000e+00> : vector<8x288xf32>
    %67 = tpu.matmul %66, %64, %cst_60 {dimension_numbers = #tpu.dot_dimension_numbers<[1], [0], [0], [1], [0, 0, 1, 1], [], []>} : vector<8x8xf32>, vector<8x288xf32>, vector<8x288xf32> -> vector<8x288xf32>
    %c0_61 = arith.constant 0 : index
    %c56 = arith.constant 56 : index
    %68 = vector.load %arg10[%c0_61, %c56] : memref<8x512xf32, #tpu.memory_space<vmem>>, vector<8x288xf32>
    %c1_62 = arith.constant 1 : index
    %c0_63 = arith.constant 0 : index
    %c0_64 = arith.constant 0 : index
    %69 = vector.load %arg5[%c1_62, %c0_63, %c0_64] : memref<9x8x8xf32, #tpu.memory_space<vmem>>, vector<1x8x8xf32>
    %70 = vector.shape_cast %69 : vector<1x8x8xf32> to vector<8x8xf32>
    %cst_65 = arith.constant dense<0.000000e+00> : vector<8x288xf32>
    %71 = tpu.matmul %70, %68, %cst_65 {dimension_numbers = #tpu.dot_dimension_numbers<[1], [0], [0], [1], [0, 0, 1, 1], [], []>} : vector<8x8xf32>, vector<8x288xf32>, vector<8x288xf32> -> vector<8x288xf32>
    %72 = arith.addf %67, %71 : vector<8x288xf32>
    %c0_66 = arith.constant 0 : index
    %c57 = arith.constant 57 : index
    %73 = vector.load %arg10[%c0_66, %c57] : memref<8x512xf32, #tpu.memory_space<vmem>>, vector<8x288xf32>
    %c2_67 = arith.constant 2 : index
    %c0_68 = arith.constant 0 : index
    %c0_69 = arith.constant 0 : index
    %74 = vector.load %arg5[%c2_67, %c0_68, %c0_69] : memref<9x8x8xf32, #tpu.memory_space<vmem>>, vector<1x8x8xf32>
    %75 = vector.shape_cast %74 : vector<1x8x8xf32> to vector<8x8xf32>
    %cst_70 = arith.constant dense<0.000000e+00> : vector<8x288xf32>
    %76 = tpu.matmul %75, %73, %cst_70 {dimension_numbers = #tpu.dot_dimension_numbers<[1], [0], [0], [1], [0, 0, 1, 1], [], []>} : vector<8x8xf32>, vector<8x288xf32>, vector<8x288xf32> -> vector<8x288xf32>
    %77 = arith.addf %72, %76 : vector<8x288xf32>
    %c0_71 = arith.constant 0 : index
    %c91 = arith.constant 91 : index
    %78 = vector.load %arg10[%c0_71, %c91] : memref<8x512xf32, #tpu.memory_space<vmem>>, vector<8x288xf32>
    %c3_72 = arith.constant 3 : index
    %c0_73 = arith.constant 0 : index
    %c0_74 = arith.constant 0 : index
    %79 = vector.load %arg5[%c3_72, %c0_73, %c0_74] : memref<9x8x8xf32, #tpu.memory_space<vmem>>, vector<1x8x8xf32>
    %80 = vector.shape_cast %79 : vector<1x8x8xf32> to vector<8x8xf32>
    %cst_75 = arith.constant dense<0.000000e+00> : vector<8x288xf32>
    %81 = tpu.matmul %80, %78, %cst_75 {dimension_numbers = #tpu.dot_dimension_numbers<[1], [0], [0], [1], [0, 0, 1, 1], [], []>} : vector<8x8xf32>, vector<8x288xf32>, vector<8x288xf32> -> vector<8x288xf32>
    %82 = arith.addf %77, %81 : vector<8x288xf32>
    %c0_76 = arith.constant 0 : index
    %c92 = arith.constant 92 : index
    %83 = vector.load %arg10[%c0_76, %c92] : memref<8x512xf32, #tpu.memory_space<vmem>>, vector<8x288xf32>
    %c4_77 = arith.constant 4 : index
    %c0_78 = arith.constant 0 : index
    %c0_79 = arith.constant 0 : index
    %84 = vector.load %arg5[%c4_77, %c0_78, %c0_79] : memref<9x8x8xf32, #tpu.memory_space<vmem>>, vector<1x8x8xf32>
    %85 = vector.shape_cast %84 : vector<1x8x8xf32> to vector<8x8xf32>
    %cst_80 = arith.constant dense<0.000000e+00> : vector<8x288xf32>
    %86 = tpu.matmul %85, %83, %cst_80 {dimension_numbers = #tpu.dot_dimension_numbers<[1], [0], [0], [1], [0, 0, 1, 1], [], []>} : vector<8x8xf32>, vector<8x288xf32>, vector<8x288xf32> -> vector<8x288xf32>
    %87 = arith.addf %82, %86 : vector<8x288xf32>
    %c0_81 = arith.constant 0 : index
    %c93 = arith.constant 93 : index
    %88 = vector.load %arg10[%c0_81, %c93] : memref<8x512xf32, #tpu.memory_space<vmem>>, vector<8x288xf32>
    %c5_82 = arith.constant 5 : index
    %c0_83 = arith.constant 0 : index
    %c0_84 = arith.constant 0 : index
    %89 = vector.load %arg5[%c5_82, %c0_83, %c0_84] : memref<9x8x8xf32, #tpu.memory_space<vmem>>, vector<1x8x8xf32>
    %90 = vector.shape_cast %89 : vector<1x8x8xf32> to vector<8x8xf32>
    %cst_85 = arith.constant dense<0.000000e+00> : vector<8x288xf32>
    %91 = tpu.matmul %90, %88, %cst_85 {dimension_numbers = #tpu.dot_dimension_numbers<[1], [0], [0], [1], [0, 0, 1, 1], [], []>} : vector<8x8xf32>, vector<8x288xf32>, vector<8x288xf32> -> vector<8x288xf32>
    %92 = arith.addf %87, %91 : vector<8x288xf32>
    %c0_86 = arith.constant 0 : index
    %c127 = arith.constant 127 : index
    %93 = vector.load %arg10[%c0_86, %c127] : memref<8x512xf32, #tpu.memory_space<vmem>>, vector<8x288xf32>
    %c6_87 = arith.constant 6 : index
    %c0_88 = arith.constant 0 : index
    %c0_89 = arith.constant 0 : index
    %94 = vector.load %arg5[%c6_87, %c0_88, %c0_89] : memref<9x8x8xf32, #tpu.memory_space<vmem>>, vector<1x8x8xf32>
    %95 = vector.shape_cast %94 : vector<1x8x8xf32> to vector<8x8xf32>
    %cst_90 = arith.constant dense<0.000000e+00> : vector<8x288xf32>
    %96 = tpu.matmul %95, %93, %cst_90 {dimension_numbers = #tpu.dot_dimension_numbers<[1], [0], [0], [1], [0, 0, 1, 1], [], []>} : vector<8x8xf32>, vector<8x288xf32>, vector<8x288xf32> -> vector<8x288xf32>
    %97 = arith.addf %92, %96 : vector<8x288xf32>
    %c0_91 = arith.constant 0 : index
    %c128_92 = arith.constant 128 : index
    %98 = vector.load %arg10[%c0_91, %c128_92] : memref<8x512xf32, #tpu.memory_space<vmem>>, vector<8x288xf32>
    %c7_93 = arith.constant 7 : index
    %c0_94 = arith.constant 0 : index
    %c0_95 = arith.constant 0 : index
    %99 = vector.load %arg5[%c7_93, %c0_94, %c0_95] : memref<9x8x8xf32, #tpu.memory_space<vmem>>, vector<1x8x8xf32>
    %100 = vector.shape_cast %99 : vector<1x8x8xf32> to vector<8x8xf32>
    %cst_96 = arith.constant dense<0.000000e+00> : vector<8x288xf32>
    %101 = tpu.matmul %100, %98, %cst_96 {dimension_numbers = #tpu.dot_dimension_numbers<[1], [0], [0], [1], [0, 0, 1, 1], [], []>} : vector<8x8xf32>, vector<8x288xf32>, vector<8x288xf32> -> vector<8x288xf32>
    %102 = arith.addf %97, %101 : vector<8x288xf32>
    %c0_97 = arith.constant 0 : index
    %c129 = arith.constant 129 : index
    %103 = vector.load %arg10[%c0_97, %c129] : memref<8x512xf32, #tpu.memory_space<vmem>>, vector<8x288xf32>
    %c8_98 = arith.constant 8 : index
    %c0_99 = arith.constant 0 : index
    %c0_100 = arith.constant 0 : index
    %104 = vector.load %arg5[%c8_98, %c0_99, %c0_100] : memref<9x8x8xf32, #tpu.memory_space<vmem>>, vector<1x8x8xf32>
    %105 = vector.shape_cast %104 : vector<1x8x8xf32> to vector<8x8xf32>
    %cst_101 = arith.constant dense<0.000000e+00> : vector<8x288xf32>
    %106 = tpu.matmul %105, %103, %cst_101 {dimension_numbers = #tpu.dot_dimension_numbers<[1], [0], [0], [1], [0, 0, 1, 1], [], []>} : vector<8x8xf32>, vector<8x288xf32>, vector<8x288xf32> -> vector<8x288xf32>
    %107 = arith.addf %102, %106 : vector<8x288xf32>
    %c0_102 = arith.constant 0 : index
    %c0_103 = arith.constant 0 : index
    %108 = vector.load %arg6[%c0_102, %c0_103] : memref<8x1xf32, #tpu.memory_space<vmem>>, vector<8x1xf32>
    %109 = vector.broadcast %108 : vector<8x1xf32> to vector<8x288xf32>
    %110 = arith.addf %107, %109 : vector<8x288xf32>
    %c0_104 = arith.constant 0 : index
    %c0_105 = arith.constant 0 : index
    %c73_106 = arith.constant 73 : index
    %111 = vector.load %arg1[%c0_104, %c0_105, %c73_106] : memref<1x4x362xf32, #tpu.memory_space<vmem>>, vector<1x4x288xf32>
    %112 = vector.shape_cast %111 : vector<1x4x288xf32> to vector<4x288xf32>
    %c0_107 = arith.constant 0 : index
    %c0_108 = arith.constant 0 : index
    %113 = vector.load %arg7[%c0_107, %c0_108] : memref<8x4xf32, #tpu.memory_space<vmem>>, vector<8x4xf32>
    %cst_109 = arith.constant dense<0.000000e+00> : vector<8x288xf32>
    %114 = tpu.matmul %113, %112, %cst_109 {dimension_numbers = #tpu.dot_dimension_numbers<[1], [0], [0], [1], [0, 0, 1, 1], [], []>} : vector<8x4xf32>, vector<4x288xf32>, vector<8x288xf32> -> vector<8x288xf32>
    %115 = arith.addf %110, %114 : vector<8x288xf32>
    %c0_110 = arith.constant 0 : index
    %c0_111 = arith.constant 0 : index
    %116 = vector.load %arg8[%c0_110, %c0_111] : memref<8x1xf32, #tpu.memory_space<vmem>>, vector<8x1xf32>
    %117 = vector.broadcast %116 : vector<8x1xf32> to vector<8x288xf32>
    %118 = arith.addf %115, %117 : vector<8x288xf32>
    %cst_112 = arith.constant 0.000000e+00 : f32
    %119 = vector.broadcast %cst_112 : f32 to vector<8x288xf32>
    %120 = arith.maximumf %118, %119 : vector<8x288xf32>
    %c0_113 = arith.constant 0 : index
    %c0_114 = arith.constant 0 : index
    %c0_115 = arith.constant 0 : index
    %121 = vector.load %arg9[%c0_113, %c0_114, %c0_115] : memref<1x8x288xf32, #tpu.memory_space<vmem>>, vector<1x8x288xf32>
    %122 = vector.shape_cast %121 : vector<1x8x288xf32> to vector<8x288xf32>
    %123 = vector.shape_cast %120 : vector<8x288xf32> to vector<1x8x288xf32>
    tpu.vector_store %arg9[%c0_113, %c0_114, %c0_115], %123 {strides = array<i32>} : memref<1x8x288xf32, #tpu.memory_space<vmem>>, vector<1x8x288xf32>,
    return
  }
  func.func @transform_0(%arg0: i32) -> (i32, i32, i32) {
    %c0_i32 = arith.constant 0 : i32
    %c0_i32_0 = arith.constant 0 : i32
    %c0_i32_1 = arith.constant 0 : i32
    return %arg0, %c0_i32, %c0_i32_0 : i32, i32, i32
  }
  func.func @transform_1(%arg0: i32) -> (i32, i32) {
    %c0_i32 = arith.constant 0 : i32
    %c0_i32_0 = arith.constant 0 : i32
    %c0_i32_1 = arith.constant 0 : i32
    return %c0_i32, %c0_i32_0 : i32, i32
  }
  func.func @transform_2(%arg0: i32) -> (i32, i32, i32) {
    %c0_i32 = arith.constant 0 : i32
    %c0_i32_0 = arith.constant 0 : i32
    %c0_i32_1 = arith.constant 0 : i32
    %c0_i32_2 = arith.constant 0 : i32
    return %c0_i32, %c0_i32_0, %c0_i32_1 : i32, i32, i32
  }
  func.func @transform_3(%arg0: i32) -> (i32, i32) {
    %c0_i32 = arith.constant 0 : i32
    %c0_i32_0 = arith.constant 0 : i32
    %c0_i32_1 = arith.constant 0 : i32
    return %c0_i32, %c0_i32_0 : i32, i32
  }
  func.func @transform_4(%arg0: i32) -> (i32, i32, i32) {
    %c0_i32 = arith.constant 0 : i32
    %c0_i32_0 = arith.constant 0 : i32
    %c0_i32_1 = arith.constant 0 : i32
    %c0_i32_2 = arith.constant 0 : i32
    return %c0_i32, %c0_i32_0, %c0_i32_1 : i32, i32, i32
  }
  func.func @transform_5(%arg0: i32) -> (i32, i32) {
    %c0_i32 = arith.constant 0 : i32
    %c0_i32_0 = arith.constant 0 : i32
    %c0_i32_1 = arith.constant 0 : i32
    return %c0_i32, %c0_i32_0 : i32, i32
  }
  func.func @transform_6(%arg0: i32) -> (i32, i32) {
    %c0_i32 = arith.constant 0 : i32
    %c0_i32_0 = arith.constant 0 : i32
    %c0_i32_1 = arith.constant 0 : i32
    return %c0_i32, %c0_i32_0 : i32, i32
  }
  func.func @transform_7(%arg0: i32) -> (i32, i32) {
    %c0_i32 = arith.constant 0 : i32
    %c0_i32_0 = arith.constant 0 : i32
    %c0_i32_1 = arith.constant 0 : i32
    return %c0_i32, %c0_i32_0 : i32, i32
  }
  func.func @transform_8(%arg0: i32) -> (i32, i32, i32) {
    %c0_i32 = arith.constant 0 : i32
    %c0_i32_0 = arith.constant 0 : i32
    %c0_i32_1 = arith.constant 0 : i32
    return %arg0, %c0_i32, %c0_i32_0 : i32, i32, i32
  }
}

</mosaic_0001>

<llo_original>
// kernel: tpu_custom_call.1
$region0: #{tpu_custom_call.1}
  #allocation0 [shape = 'u32[]', space=smem, size = 0x4, offset = 0x4, fixed_abs, tag = 'smem constant byte address 0x4 - core index']
  #allocation1 [shape = 'u32[144,128]{1,0:T(1,128)}', space=vmem, size = 0x12000, scoped, tag = 'internal scratch']
  #allocation2 [shape = 'f32[8,512]{1,0:T(8,128)}', space=vmem, size = 0x4000, scoped, tag = 'scratch operand']
  %s0 = inlined_call_operand.vmem [shape: f32[2,4,362], index: 0, kind: input, shape index: {}]
  %s1 = inlined_call_operand.vmem [shape: f32[1,288], index: 1, kind: input, shape index: {}]
  %s2 = inlined_call_operand.vmem [shape: f32[9,8,4], index: 2, kind: input, shape index: {}]
  %s3 = inlined_call_operand.vmem [shape: f32[8,1], index: 3, kind: input, shape index: {}]
  %s4 = inlined_call_operand.vmem [shape: f32[9,8,8], index: 4, kind: input, shape index: {}]
  %s5 = inlined_call_operand.vmem [shape: f32[8,1], index: 5, kind: input, shape index: {}]
  %s6 = inlined_call_operand.vmem [shape: f32[8,4], index: 6, kind: input, shape index: {}]
  %s7 = inlined_call_operand.vmem [shape: f32[8,1], index: 7, kind: input, shape index: {}]
  %s8 = inlined_call_operand.hbm [shape: f32[2,8,288], index: 8, kind: output, shape index: {}]
  %s9 = sld [smem:[#allocation0]]
  $region65: #{tpu_custom_call.1} parent=0
    _
  %s11 = ssub.s32 1, %s9
  %s12 = scalar_select 0, %s11, %s9
  $region1: #{tpu_custom_call.1} parent=0
    #allocation3 [shape = 'u8[24576]{0}', space=vmem, size = 0x6000, scoped, tag = 'output window, operand 0']
    #allocation4 [shape = 's32[2]{0}', space=sflag, size = 0x8, scoped, tag = 'scoped memory for tpu_custom_call.1']
    %13 = vsyncpa [#allocation4], 0
    %s14 = scalar_lea.sflag [#allocation4], 1
    %15 = vsyncpa %s14, 0
    loop: start=0, step=1, limit=4
    $region2: #{tpu_custom_call.1} parent=1 // loop_pre_header
      _
    $region3: #{tpu_custom_call.1} parent=1 // loop_header
      %s17 = sphi 0, %s21
      %p18 = scmp.ge.s32.totalorder %s17, 4
      %s27 = sphi 0, %s29
      %s30 = sphi 0, %s27
      %s31 = sphi 0, %s30
      %s47 = sphi 0, %s31
      %s51 = sphi 0, %s51
      %s53 = sphi 0, %s51
      %s54 = sphi 0, %s53
      %s68 = sphi 0, %s54
      %s72 = sphi 0, %s72
      %s74 = sphi 0, %s72
      %s75 = sphi 0, %s74
      %s89 = sphi 0, %s75
      %s93 = sphi 0, %s93
      %s95 = sphi 0, %s93
      %s96 = sphi 0, %s95
      %s110 = sphi 0, %s96
      %s114 = sphi 0, %s114
      %s116 = sphi 0, %s114
      %s117 = sphi 0, %s116
      %s131 = sphi 0, %s117
      %s135 = sphi 0, %s135
      %s137 = sphi 0, %s135
      %s138 = sphi 0, %s137
      %s152 = sphi 0, %s138
      %s156 = sphi 0, %s156
      %s158 = sphi 0, %s156
      %s159 = sphi 0, %s158
      %s173 = sphi 0, %s159
      %s177 = sphi 0, %s177
      %s179 = sphi 0, %s177
      %s180 = sphi 0, %s179
      %s194 = sphi 0, %s180
      %s200 = sphi 0, %s202
      %s203 = sphi 0, %s200
      %s204 = sphi 0, %s203
      %s220 = sphi 0, %s204
    $region4: #{tpu_custom_call.1} parent=1 // loop_header_branch
      %20 = sbr.rel (%p18) target = $region8
    $region5: #{tpu_custom_call.1} parent=1 // loop_body
      %s22 = ssub.s32 %s17, 1
      %s23 = ssub.s32 %s17, 2
      %s24 = sadd.s32 %s17, 1
      %s25 = ssub.s32 %s17, %s24
      %p26 = scmp.eq.s32.totalorder %s25, 0
      %s28 = sadd.s32 %s27, 1
      %s29 = scalar_select %p26, %s27, %s28
      %p32 = pneg %p26
      %p33 = scmp.eq.s32.totalorder %s17, 1
      %p34 = por %p32, %p33
      %p35 = scmp.ne.s32.totalorder %s27, %s30
      %p36 = scmp.eq.s32.totalorder %s17, 0
      %p37 = por %p35, %p36
      %p38 = scmp.ne.s32.totalorder %s27, %s30
      %p39 = scmp.eq.s32.totalorder %s22, 1
      %p40 = por %p38, %p39
      %p41 = scmp.ne.s32.totalorder %s30, %s31
      %p42 = scmp.eq.s32.totalorder %s22, 0
      %p43 = por %p41, %p42
      %p44 = scmp.ne.s32.totalorder %s30, %s31
      %p45 = scmp.eq.s32.totalorder %s23, 1
      %p46 = por %p44, %p45
      %p48 = scmp.ne.s32.totalorder %s31, %s47
      %p49 = scmp.eq.s32.totalorder %s23, 0
      %p50 = por %p48, %p49
      %s52 = sadd.s32 %s51, 1
      %p55 = scmp.eq.s32.totalorder %s17, 1
      %p56 = scmp.ne.s32.totalorder %s51, %s53
      %p57 = scmp.eq.s32.totalorder %s17, 0
      %p58 = por %p56, %p57
      %p59 = scmp.ne.s32.totalorder %s51, %s53
      %p60 = scmp.eq.s32.totalorder %s22, 1
      %p61 = por %p59, %p60
      %p62 = scmp.ne.s32.totalorder %s53, %s54
      %p63 = scmp.eq.s32.totalorder %s22, 0
      %p64 = por %p62, %p63
      %p65 = scmp.ne.s32.totalorder %s53, %s54
      %p66 = scmp.eq.s32.totalorder %s23, 1
      %p67 = por %p65, %p66
      %p69 = scmp.ne.s32.totalorder %s54, %s68
      %p70 = scmp.eq.s32.totalorder %s23, 0
      %p71 = por %p69, %p70
      %s73 = sadd.s32 %s72, 1
      %p76 = scmp.eq.s32.totalorder %s17, 1
      %p77 = scmp.ne.s32.totalorder %s72, %s74
      %p78 = scmp.eq.s32.totalorder %s17, 0
      %p79 = por %p77, %p78
      %p80 = scmp.ne.s32.totalorder %s72, %s74
      %p81 = scmp.eq.s32.totalorder %s22, 1
      %p82 = por %p80, %p81
      %p83 = scmp.ne.s32.totalorder %s74, %s75
      %p84 = scmp.eq.s32.totalorder %s22, 0
      %p85 = por %p83, %p84
      %p86 = scmp.ne.s32.totalorder %s74, %s75
      %p87 = scmp.eq.s32.totalorder %s23, 1
      %p88 = por %p86, %p87
      %p90 = scmp.ne.s32.totalorder %s75, %s89
      %p91 = scmp.eq.s32.totalorder %s23, 0
      %p92 = por %p90, %p91
      %s94 = sadd.s32 %s93, 1
      %p97 = scmp.eq.s32.totalorder %s17, 1
      %p98 = scmp.ne.s32.totalorder %s93, %s95
      %p99 = scmp.eq.s32.totalorder %s17, 0
      %p100 = por %p98, %p99
      %p101 = scmp.ne.s32.totalorder %s93, %s95
      %p102 = scmp.eq.s32.totalorder %s22, 1
      %p103 = por %p101, %p102
      %p104 = scmp.ne.s32.totalorder %s95, %s96
      %p105 = scmp.eq.s32.totalorder %s22, 0
      %p106 = por %p104, %p105
      %p107 = scmp.ne.s32.totalorder %s95, %s96
      %p108 = scmp.eq.s32.totalorder %s23, 1
      %p109 = por %p107, %p108
      %p111 = scmp.ne.s32.totalorder %s96, %s110
      %p112 = scmp.eq.s32.totalorder %s23, 0
      %p113 = por %p111, %p112
      %s115 = sadd.s32 %s114, 1
      %p118 = scmp.eq.s32.totalorder %s17, 1
      %p119 = scmp.ne.s32.totalorder %s114, %s116
      %p120 = scmp.eq.s32.totalorder %s17, 0
      %p121 = por %p119, %p120
      %p122 = scmp.ne.s32.totalorder %s114, %s116
      %p123 = scmp.eq.s32.totalorder %s22, 1
      %p124 = por %p122, %p123
      %p125 = scmp.ne.s32.totalorder %s116, %s117
      %p126 = scmp.eq.s32.totalorder %s22, 0
      %p127 = por %p125, %p126
      %p128 = scmp.ne.s32.totalorder %s116, %s117
      %p129 = scmp.eq.s32.totalorder %s23, 1
      %p130 = por %p128, %p129
      %p132 = scmp.ne.s32.totalorder %s117, %s131
      %p133 = scmp.eq.s32.totalorder %s23, 0
      %p134 = por %p132, %p133
      %s136 = sadd.s32 %s135, 1
      %p139 = scmp.eq.s32.totalorder %s17, 1
      %p140 = scmp.ne.s32.totalorder %s135, %s137
      %p141 = scmp.eq.s32.totalorder %s17, 0
      %p142 = por %p140, %p141
      %p143 = scmp.ne.s32.totalorder %s135, %s137
      %p144 = scmp.eq.s32.totalorder %s22, 1
      %p145 = por %p143, %p144
      %p146 = scmp.ne.s32.totalorder %s137, %s138
      %p147 = scmp.eq.s32.totalorder %s22, 0
      %p148 = por %p146, %p147
      %p149 = scmp.ne.s32.totalorder %s137, %s138
      %p150 = scmp.eq.s32.totalorder %s23, 1
      %p151 = por %p149, %p150
      %p153 = scmp.ne.s32.totalorder %s138, %s152
      %p154 = scmp.eq.s32.totalorder %s23, 0
      %p155 = por %p153, %p154
      %s157 = sadd.s32 %s156, 1
      %p160 = scmp.eq.s32.totalorder %s17, 1
      %p161 = scmp.ne.s32.totalorder %s156, %s158
      %p162 = scmp.eq.s32.totalorder %s17, 0
      %p163 = por %p161, %p162
      %p164 = scmp.ne.s32.totalorder %s156, %s158
      %p165 = scmp.eq.s32.totalorder %s22, 1
      %p166 = por %p164, %p165
      %p167 = scmp.ne.s32.totalorder %s158, %s159
      %p168 = scmp.eq.s32.totalorder %s22, 0
      %p169 = por %p167, %p168
      %p170 = scmp.ne.s32.totalorder %s158, %s159
      %p171 = scmp.eq.s32.totalorder %s23, 1
      %p172 = por %p170, %p171
      %p174 = scmp.ne.s32.totalorder %s159, %s173
      %p175 = scmp.eq.s32.totalorder %s23, 0
      %p176 = por %p174, %p175
      %s178 = sadd.s32 %s177, 1
      %p181 = scmp.eq.s32.totalorder %s17, 1
      %p182 = scmp.ne.s32.totalorder %s177, %s179
      %p183 = scmp.eq.s32.totalorder %s17, 0
      %p184 = por %p182, %p183
      %p185 = scmp.ne.s32.totalorder %s177, %s179
      %p186 = scmp.eq.s32.totalorder %s22, 1
      %p187 = por %p185, %p186
      %p188 = scmp.ne.s32.totalorder %s179, %s180
      %p189 = scmp.eq.s32.totalorder %s22, 0
      %p190 = por %p188, %p189
      %p191 = scmp.ne.s32.totalorder %s179, %s180
      %p192 = scmp.eq.s32.totalorder %s23, 1
      %p193 = por %p191, %p192
      %p195 = scmp.ne.s32.totalorder %s180, %s194
      %p196 = scmp.eq.s32.totalorder %s23, 0
      %p197 = por %p195, %p196
      %s198 = ssub.s32 %s17, %s24
      %p199 = scmp.eq.s32.totalorder %s198, 0
      %s201 = sadd.s32 %s200, 1
      %s202 = scalar_select %p199, %s200, %s201
      %p205 = pneg %p199
      %p206 = scmp.eq.s32.totalorder %s17, 1
      %p207 = por %p205, %p206
      %p208 = scmp.ne.s32.totalorder %s200, %s203
      %p209 = scmp.eq.s32.totalorder %s17, 0
      %p210 = por %p208, %p209
      %p211 = scmp.ne.s32.totalorder %s200, %s203
      %p212 = scmp.eq.s32.totalorder %s22, 1
      %p213 = por %p211, %p212
      %p214 = scmp.ne.s32.totalorder %s203, %s204
      %p215 = scmp.eq.s32.totalorder %s22, 0
      %p216 = por %p214, %p215
      %p217 = scmp.ne.s32.totalorder %s203, %s204
      %p218 = scmp.eq.s32.totalorder %s23, 1
      %p219 = por %p217, %p218
      %p221 = scmp.ne.s32.totalorder %s204, %s220
      %p222 = scmp.eq.s32.totalorder %s23, 0
      %p223 = por %p221, %p222
      %p224 = scmp.le.s32.totalorder 1, %s17
      %p225 = scmp.lt.s32.totalorder %s17, 3
      %p226 = pnand %p224, %p225
      %p227 = pneg %p226
      // Predicated region
      $region9: #{tpu_custom_call.1} parent=5 // pred_check
        _
      $region10: #{tpu_custom_call.1} parent=5 // pred_check_branch
        %229 = sbr.rel (%p226) target = $region12
      $region11: #{tpu_custom_call.1} parent=5 // pred_region
        %s230 = ssub.s32 %s17, 1
        // Predicated region
        $region13: #{tpu_custom_call.1} parent=11 // pred_check
          %p231 = pneg %p64
        $region14: #{tpu_custom_call.1} parent=11 // pred_check_branch
          %233 = sbr.rel (%p231) target = $region16
        $region15: #{tpu_custom_call.1} parent=11 // pred_region
          _
        $region16: #{tpu_custom_call.1} parent=11 // pred_fallthru
          _
        // Predicated region
        $region17: #{tpu_custom_call.1} parent=11 // pred_check
          %p234 = pneg %p85
        $region18: #{tpu_custom_call.1} parent=11 // pred_check_branch
          %236 = sbr.rel (%p234) target = $region20
        $region19: #{tpu_custom_call.1} parent=11 // pred_region
          _
        $region20: #{tpu_custom_call.1} parent=11 // pred_fallthru
          _
        // Predicated region
        $region21: #{tpu_custom_call.1} parent=11 // pred_check
          %p237 = pneg %p106
        $region22: #{tpu_custom_call.1} parent=11 // pred_check_branch
          %239 = sbr.rel (%p237) target = $region24
        $region23: #{tpu_custom_call.1} parent=11 // pred_region
          _
        $region24: #{tpu_custom_call.1} parent=11 // pred_fallthru
          _
        // Predicated region
        $region25: #{tpu_custom_call.1} parent=11 // pred_check
          %p240 = pneg %p127
        $region26: #{tpu_custom_call.1} parent=11 // pred_check_branch
          %242 = sbr.rel (%p240) target = $region28
        $region27: #{tpu_custom_call.1} parent=11 // pred_region
          _
        $region28: #{tpu_custom_call.1} parent=11 // pred_fallthru
          _
        // Predicated region
        $region29: #{tpu_custom_call.1} parent=11 // pred_check
          %p243 = pneg %p148
        $region30: #{tpu_custom_call.1} parent=11 // pred_check_branch
          %245 = sbr.rel (%p243) target = $region32
        $region31: #{tpu_custom_call.1} parent=11 // pred_region
          _
        $region32: #{tpu_custom_call.1} parent=11 // pred_fallthru
          _
        // Predicated region
        $region33: #{tpu_custom_call.1} parent=11 // pred_check
          %p246 = pneg %p169
        $region34: #{tpu_custom_call.1} parent=11 // pred_check_branch
          %248 = sbr.rel (%p246) target = $region36
        $region35: #{tpu_custom_call.1} parent=11 // pred_region
          _
        $region36: #{tpu_custom_call.1} parent=11 // pred_fallthru
          _
        // Predicated region
        $region37: #{tpu_custom_call.1} parent=11 // pred_check
          %p249 = pneg %p190
        $region38: #{tpu_custom_call.1} parent=11 // pred_check_branch
          %251 = sbr.rel (%p249) target = $region40
        $region39: #{tpu_custom_call.1} parent=11 // pred_region
          _
        $region40: #{tpu_custom_call.1} parent=11 // pred_fallthru
          _
      $region12: #{tpu_custom_call.1} parent=5 // pred_fallthru
        _
      %p252 = scmp.lt.s32.totalorder %s17, 2
      // Predicated region
      $region41: #{tpu_custom_call.1} parent=5 // pred_check
        %p253 = pneg %p252
      $region42: #{tpu_custom_call.1} parent=5 // pred_check_branch
        %255 = sbr.rel (%p253) target = $region44
      $region43: #{tpu_custom_call.1} parent=5 // pred_region
        // Predicated region
        $region45: #{tpu_custom_call.1} parent=43 // pred_check
          %p256 = pneg %p37
        $region46: #{tpu_custom_call.1} parent=43 // pred_check_branch
          %258 = sbr.rel (%p256) target = $region48
        $region47: #{tpu_custom_call.1} parent=43 // pred_region
          %p259 = scmp.lt.s32.totalorder %s17, 1
          %s260 = scalar_select %p259, %s17, 1
          %s261 = smul.addr %s260, 3
          %s262 = smul.addr %s261, 4
          %s263 = scalar_lea.vmem %s0, %s262
        $region48: #{tpu_custom_call.1} parent=43 // pred_fallthru
          _
      $region44: #{tpu_custom_call.1} parent=5 // pred_fallthru
        _
      %p264 = scmp.le.s32.totalorder 1, %s17
      %p265 = scmp.lt.s32.totalorder %s17, 3
      %p266 = pnand %p264, %p265
      %p267 = pneg %p266
      // Predicated region
      $region49: #{tpu_custom_call.1} parent=5 // pred_check
        _
      $region50: #{tpu_custom_call.1} parent=5 // pred_check_branch
        %269 = sbr.rel (%p266) target = $region52
      $region51: #{tpu_custom_call.1} parent=5 // pred_region
        %s270 = ssub.s32 %s17, 1
        %p271 = scmp.lt.s32.totalorder %s22, 1
        %s272 = scalar_select %p271, %s22, 1
        %s273 = smul.addr %s272, 3
        %s274 = smul.addr %s273, 4
        %s275 = scalar_lea.vmem %s0, %s274
        %p276 = pneg %p43
        %p277 = pneg %p40
        %p278 = pneg %p64
        %p279 = pneg %p61
        %p280 = pneg %p85
        %p281 = pneg %p82
        %p282 = pneg %p106
        %p283 = pneg %p103
        %p284 = pneg %p127
        %p285 = pneg %p124
        %p286 = pneg %p148
        %p287 = pneg %p145
        %p288 = pneg %p169
        %p289 = pneg %p166
        %p290 = pneg %p190
        %p291 = pneg %p187
        %p292 = pneg %p216
        %p293 = pneg %p213
        %s294 = sand.u32 %s203, 1
        %s295 = scalar_lea.sflag [#allocation4], %s294
        %s296 = sand.u32 %s203, 1
        %s297 = smul.addr %s296, 24
        %s298 = scalar_lea.vmem [#allocation3], %s297
        %p299 = scmp.lt.s32.totalorder %s22, 1
        %s300 = scalar_select %p299, %s22, 1
        %s301 = smul.addr %s300, 3
        %s302 = smul.addr %s301, 4
        %s303 = scalar_lea.vmem %s0, %s302
        %v304 = vld [vmem:[%s303] sm:$0xff]
        %v305 = vld [vmem:[%s303 + $0x8] sm:$0xf]
        %v306 = vld [vmem:[%s2] sm:$0xff]
        %s307 = scalar_lea.vmem %s2, 8
        %v308 = vld [vmem:[%s307] sm:$0xff]
        %v311 = vcombine.high %v304, %v304
        %312 = vrot.lane.b32.xlu0 %v304, 127
        %v313 = vpop.permute.xlu0 %312
        %314 = vrot.lane.b32.xlu0 %v311, 127
        %v315 = vpop.permute.xlu0 %314
        %316 = vrot.lane.b32.xlu0 %v305, 127
        %v317 = vpop.permute.xlu0 %316
        %vm318 = vcmask 1039360
        %v319 = vsel %vm318, %v313, %v315
        %v320 = vsel %vm318, %v315, %v317
        %vm321 = vcmask 31744
        %v323 = vsel %vm321, %v308, 0
        %vm325 = vcmask 1043456
        %v326 = vsel %vm325, %v319, 0
        %v328 = vsel %vm325, %v320, 0
        %v330 = vsel %vm325, %v317, 0
        %332 = vmatprep.subr.mxu0 0.0
        %333 = vmatpush1.msra.mxu0 0.0
        %334 = vmatprep.subr.mxu0 0.0
        %335 = vmatpush1.msra.mxu0 0.0
        %336 = vmatprep.subr.mxu0 0.0
        %337 = vmatpush1.msra.mxu0 0.0
        %338 = vmatprep.subr.mxu0 0.0
        %339 = vmatpush1.msra.mxu0 0.0
        %340 = vmatprep.subr.mxu0 0.0
        %341 = vmatpush1.msra.mxu0 0.0
        %342 = vmatprep.subr.mxu0 0.0
        %343 = vmatpush1.msra.mxu0 0.0
        %344 = vmatprep.subr.mxu0 0.0
        %345 = vmatpush1.msra.mxu0 0.0
        %346 = vmatprep.subr.mxu0 0.0
        %347 = vmatpush1.msra.mxu0 0.0
        %348 = vmatprep.subr.mxu0 0.0
        %349 = vmatpush1.msra.mxu0 0.0
        %350 = vmatprep.subr.mxu0 0.0
        %351 = vmatpush1.msra.mxu0 0.0
        %352 = vmatprep.subr.mxu0 0.0
        %353 = vmatpush1.msra.mxu0 0.0
        %354 = vmatprep.subr.mxu0 0.0
        %355 = vmatpush1.msra.mxu0 0.0
        %356 = vmatprep.subr.mxu0 0.0
        %357 = vmatpush1.msra.mxu0 0.0
        %358 = vmatprep.subr.mxu0 0.0
        %359 = vmatpush1.msra.mxu0 0.0
        %360 = vmatprep.subr.mxu0 0.0
        %361 = vmatpush1.msra.mxu0 0.0
        %362 = vmatprep.subr.mxu0 %v328
        %363 = vmatpush1.msra.mxu0 %v326
        %364 = vmatprep.subr.mxu0 0.0
        %365 = vmatpush2.msra.mxu0 0.0
        %366 = vmatprep.subr.mxu0 0.0
        %367 = vmatpush2.msra.mxu0 0.0
        %368 = vmatprep.subr.mxu0 0.0
        %369 = vmatpush2.msra.mxu0 0.0
        %370 = vmatprep.subr.mxu0 0.0
        %371 = vmatpush2.msra.mxu0 0.0
        %372 = vmatprep.subr.mxu0 0.0
        %373 = vmatpush2.msra.mxu0 0.0
        %374 = vmatprep.subr.mxu0 0.0
        %375 = vmatpush2.msra.mxu0 0.0
        %376 = vmatprep.subr.mxu0 0.0
        %377 = vmatpush2.msra.mxu0 0.0
        %378 = vmatprep.subr.mxu0 0.0
        %379 = vmatpush2.msra.mxu0 0.0
        %380 = vmatprep.subr.mxu0 0.0
        %381 = vmatpush2.msra.mxu0 0.0
        %382 = vmatprep.subr.mxu0 0.0
        %383 = vmatpush2.msra.mxu0 0.0
        %384 = vmatprep.subr.mxu0 0.0
        %385 = vmatpush2.msra.mxu0 0.0
        %386 = vmatprep.subr.mxu0 0.0
        %387 = vmatpush2.msra.mxu0 0.0
        %388 = vmatprep.subr.mxu0 0.0
        %389 = vmatpush2.msra.mxu0 0.0
        %390 = vmatprep.subr.mxu0 0.0
        %391 = vmatpush2.msra.mxu0 0.0
        %392 = vmatprep.subr.mxu0 0.0
        %393 = vmatpush2.msra.mxu0 0.0
        %394 = vmatprep.subr.mxu0 0.0
        %395 = vmatpush2.msra.mxu0 0.0
        %396 = vmatprep.mubr.f32.mxu0 0.0
        %397 = vmatmul.mubr.f32.gmra.mxu0 %v323
        %v398 = vpop.f32.mrf.mxu0
        %v399 = vadd.f32 0.0, %v398
        %v400 = vpop.f32.mrf.mxu0
        %v401 = vadd.f32 0.0, %v400
        %402 = vdwg.mxu0
        %403 = vmatprep.subr.mxu0 0.0
        %404 = vmatpush1.msra.mxu0 0.0
        %405 = vmatprep.subr.mxu0 0.0
        %406 = vmatpush1.msra.mxu0 0.0
        %407 = vmatprep.subr.mxu0 0.0
        %408 = vmatpush1.msra.mxu0 0.0
        %409 = vmatprep.subr.mxu0 0.0
        %410 = vmatpush1.msra.mxu0 0.0
        %411 = vmatprep.subr.mxu0 0.0
        %412 = vmatpush1.msra.mxu0 0.0
        %413 = vmatprep.subr.mxu0 0.0
        %414 = vmatpush1.msra.mxu0 0.0
        %415 = vmatprep.subr.mxu0 0.0
        %416 = vmatpush1.msra.mxu0 0.0
        %417 = vmatprep.subr.mxu0 0.0
        %418 = vmatpush1.msra.mxu0 0.0
        %419 = vmatprep.subr.mxu0 0.0
        %420 = vmatpush1.msra.mxu0 0.0
        %421 = vmatprep.subr.mxu0 0.0
        %422 = vmatpush1.msra.mxu0 0.0
        %423 = vmatprep.subr.mxu0 0.0
        %424 = vmatpush1.msra.mxu0 0.0
        %425 = vmatprep.subr.mxu0 0.0
        %426 = vmatpush1.msra.mxu0 0.0
        %427 = vmatprep.subr.mxu0 0.0
        %428 = vmatpush1.msra.mxu0 0.0
        %429 = vmatprep.subr.mxu0 0.0
        %430 = vmatpush1.msra.mxu0 0.0
        %431 = vmatprep.subr.mxu0 0.0
        %432 = vmatpush1.msra.mxu0 0.0
        %433 = vmatprep.subr.mxu0 0.0
        %434 = vmatpush1.msra.mxu0 %v330
        %435 = vmatprep.subr.mxu0 0.0
        %436 = vmatpush2.msra.mxu0 0.0
        %437 = vmatprep.subr.mxu0 0.0
        %438 = vmatpush2.msra.mxu0 0.0
        %439 = vmatprep.subr.mxu0 0.0
        %440 = vmatpush2.msra.mxu0 0.0
        %441 = vmatprep.subr.mxu0 0.0
        %442 = vmatpush2.msra.mxu0 0.0
        %443 = vmatprep.subr.mxu0 0.0
        %444 = vmatpush2.msra.mxu0 0.0
        %445 = vmatprep.subr.mxu0 0.0
        %446 = vmatpush2.msra.mxu0 0.0
        %447 = vmatprep.subr.mxu0 0.0
        %448 = vmatpush2.msra.mxu0 0.0
        %449 = vmatprep.subr.mxu0 0.0
        %450 = vmatpush2.msra.mxu0 0.0
        %451 = vmatprep.subr.mxu0 0.0
        %452 = vmatpush2.msra.mxu0 0.0
        %453 = vmatprep.subr.mxu0 0.0
        %454 = vmatpush2.msra.mxu0 0.0
        %455 = vmatprep.subr.mxu0 0.0
        %456 = vmatpush2.msra.mxu0 0.0
        %457 = vmatprep.subr.mxu0 0.0
        %458 = vmatpush2.msra.mxu0 0.0
        %459 = vmatprep.subr.mxu0 0.0
        %460 = vmatpush2.msra.mxu0 0.0
        %461 = vmatprep.subr.mxu0 0.0
        %462 = vmatpush2.msra.mxu0 0.0
        %463 = vmatprep.subr.mxu0 0.0
        %464 = vmatpush2.msra.mxu0 0.0
        %465 = vmatprep.subr.mxu0 0.0
        %466 = vmatpush2.msra.mxu0 0.0
        %467 = vmatprep.mubr.f32.mxu0 0.0
        %468 = vmatmul.mubr.f32.gmra.mxu0 %v323
        %v469 = vpop.f32.mrf.mxu0
        %v470 = vadd.f32 0.0, %v469
        %v471 = vpop.f32.mrf.mxu0
        %472 = vdwg.mxu0
        %v474 = vsel %vm321, %v306, 0
        %v476 = vsel %vm325, %v304, 0
        %v478 = vsel %vm325, %v311, 0
        %v480 = vsel %vm325, %v305, 0
        %482 = vmatprep.subr.mxu0 0.0
        %483 = vmatpush1.msra.mxu0 0.0
        %484 = vmatprep.subr.mxu0 0.0
        %485 = vmatpush1.msra.mxu0 0.0
        %486 = vmatprep.subr.mxu0 0.0
        %487 = vmatpush1.msra.mxu0 0.0
        %488 = vmatprep.subr.mxu0 0.0
        %489 = vmatpush1.msra.mxu0 0.0
        %490 = vmatprep.subr.mxu0 0.0
        %491 = vmatpush1.msra.mxu0 0.0
        %492 = vmatprep.subr.mxu0 0.0
        %493 = vmatpush1.msra.mxu0 0.0
        %494 = vmatprep.subr.mxu0 0.0
        %495 = vmatpush1.msra.mxu0 0.0
        %496 = vmatprep.subr.mxu0 0.0
        %497 = vmatpush1.msra.mxu0 0.0
        %498 = vmatprep.subr.mxu0 0.0
        %499 = vmatpush1.msra.mxu0 0.0
        %500 = vmatprep.subr.mxu0 0.0
        %501 = vmatpush1.msra.mxu0 0.0
        %502 = vmatprep.subr.mxu0 0.0
        %503 = vmatpush1.msra.mxu0 0.0
        %504 = vmatprep.subr.mxu0 0.0
        %505 = vmatpush1.msra.mxu0 0.0
        %506 = vmatprep.subr.mxu0 0.0
        %507 = vmatpush1.msra.mxu0 0.0
        %508 = vmatprep.subr.mxu0 0.0
        %509 = vmatpush1.msra.mxu0 0.0
        %510 = vmatprep.subr.mxu0 0.0
        %511 = vmatpush1.msra.mxu0 0.0
        %512 = vmatprep.subr.mxu0 %v478
        %513 = vmatpush1.msra.mxu0 %v476
        %514 = vmatprep.subr.mxu0 0.0
        %515 = vmatpush2.msra.mxu0 0.0
        %516 = vmatprep.subr.mxu0 0.0
        %517 = vmatpush2.msra.mxu0 0.0
        %518 = vmatprep.subr.mxu0 0.0
        %519 = vmatpush2.msra.mxu0 0.0
        %520 = vmatprep.subr.mxu0 0.0
        %521 = vmatpush2.msra.mxu0 0.0
        %522 = vmatprep.subr.mxu0 0.0
        %523 = vmatpush2.msra.mxu0 0.0
        %524 = vmatprep.subr.mxu0 0.0
        %525 = vmatpush2.msra.mxu0 0.0
        %526 = vmatprep.subr.mxu0 0.0
        %527 = vmatpush2.msra.mxu0 0.0
        %528 = vmatprep.subr.mxu0 0.0
        %529 = vmatpush2.msra.mxu0 0.0
        %530 = vmatprep.subr.mxu0 0.0
        %531 = vmatpush2.msra.mxu0 0.0
        %532 = vmatprep.subr.mxu0 0.0
        %533 = vmatpush2.msra.mxu0 0.0
        %534 = vmatprep.subr.mxu0 0.0
        %535 = vmatpush2.msra.mxu0 0.0
        %536 = vmatprep.subr.mxu0 0.0
        %537 = vmatpush2.msra.mxu0 0.0
        %538 = vmatprep.subr.mxu0 0.0
        %539 = vmatpush2.msra.mxu0 0.0
        %540 = vmatprep.subr.mxu0 0.0
        %541 = vmatpush2.msra.mxu0 0.0
        %542 = vmatprep.subr.mxu0 0.0
        %543 = vmatpush2.msra.mxu0 0.0
        %544 = vmatprep.subr.mxu0 0.0
        %545 = vmatpush2.msra.mxu0 0.0
        %546 = vmatprep.mubr.f32.mxu0 0.0
        %547 = vmatmul.mubr.f32.gmra.mxu0 %v474
        %v548 = vpop.f32.mrf.mxu0
        %v549 = vadd.f32 %v399, %v548
        %v550 = vpop.f32.mrf.mxu0
        %v551 = vadd.f32 %v401, %v550
        %552 = vdwg.mxu0
        %553 = vmatprep.subr.mxu0 0.0
        %554 = vmatpush1.msra.mxu0 0.0
        %555 = vmatprep.subr.mxu0 0.0
        %556 = vmatpush1.msra.mxu0 0.0
        %557 = vmatprep.subr.mxu0 0.0
        %558 = vmatpush1.msra.mxu0 0.0
        %559 = vmatprep.subr.mxu0 0.0
        %560 = vmatpush1.msra.mxu0 0.0
        %561 = vmatprep.subr.mxu0 0.0
        %562 = vmatpush1.msra.mxu0 0.0
        %563 = vmatprep.subr.mxu0 0.0
        %564 = vmatpush1.msra.mxu0 0.0
        %565 = vmatprep.subr.mxu0 0.0
        %566 = vmatpush1.msra.mxu0 0.0
        %567 = vmatprep.subr.mxu0 0.0
        %568 = vmatpush1.msra.mxu0 0.0
        %569 = vmatprep.subr.mxu0 0.0
        %570 = vmatpush1.msra.mxu0 0.0
        %571 = vmatprep.subr.mxu0 0.0
        %572 = vmatpush1.msra.mxu0 0.0
        %573 = vmatprep.subr.mxu0 0.0
        %574 = vmatpush1.msra.mxu0 0.0
        %575 = vmatprep.subr.mxu0 0.0
        %576 = vmatpush1.msra.mxu0 0.0
        %577 = vmatprep.subr.mxu0 0.0
        %578 = vmatpush1.msra.mxu0 0.0
        %579 = vmatprep.subr.mxu0 0.0
        %580 = vmatpush1.msra.mxu0 0.0
        %581 = vmatprep.subr.mxu0 0.0
        %582 = vmatpush1.msra.mxu0 0.0
        %583 = vmatprep.subr.mxu0 0.0
        %584 = vmatpush1.msra.mxu0 %v480
        %585 = vmatprep.subr.mxu0 0.0
        %586 = vmatpush2.msra.mxu0 0.0
        %587 = vmatprep.subr.mxu0 0.0
        %588 = vmatpush2.msra.mxu0 0.0
        %589 = vmatprep.subr.mxu0 0.0
        %590 = vmatpush2.msra.mxu0 0.0
        %591 = vmatprep.subr.mxu0 0.0
        %592 = vmatpush2.msra.mxu0 0.0
        %593 = vmatprep.subr.mxu0 0.0
        %594 = vmatpush2.msra.mxu0 0.0
        %595 = vmatprep.subr.mxu0 0.0
        %596 = vmatpush2.msra.mxu0 0.0
        %597 = vmatprep.subr.mxu0 0.0
        %598 = vmatpush2.msra.mxu0 0.0
        %599 = vmatprep.subr.mxu0 0.0
        %600 = vmatpush2.msra.mxu0 0.0
        %601 = vmatprep.subr.mxu0 0.0
        %602 = vmatpush2.msra.mxu0 0.0
        %603 = vmatprep.subr.mxu0 0.0
        %604 = vmatpush2.msra.mxu0 0.0
        %605 = vmatprep.subr.mxu0 0.0
        %606 = vmatpush2.msra.mxu0 0.0
        %607 = vmatprep.subr.mxu0 0.0
        %608 = vmatpush2.msra.mxu0 0.0
        %609 = vmatprep.subr.mxu0 0.0
        %610 = vmatpush2.msra.mxu0 0.0
        %611 = vmatprep.subr.mxu0 0.0
        %612 = vmatpush2.msra.mxu0 0.0
        %613 = vmatprep.subr.mxu0 0.0
        %614 = vmatpush2.msra.mxu0 0.0
        %615 = vmatprep.subr.mxu0 0.0
        %616 = vmatpush2.msra.mxu0 0.0
        %617 = vmatprep.mubr.f32.mxu0 0.0
        %618 = vmatmul.mubr.f32.gmra.mxu0 %v474
        %v619 = vpop.f32.mrf.mxu0
        %v620 = vadd.f32 %v470, %v619
        %v621 = vpop.f32.mrf.mxu0
        %622 = vdwg.mxu0
        %v623 = vld [vmem:[%s303] sm:$0xff]
        %v624 = vld [vmem:[%s303 + $0x8] sm:$0xf]
        %s625 = scalar_lea.vmem %s2, 16
        %v626 = vld [vmem:[%s625] sm:$0xff]
        %v629 = vcombine.high %v623, %v623
        %630 = vrot.lane.b32.xlu0 %v623, 126
        %v631 = vpop.permute.xlu0 %630
        %632 = vrot.lane.b32.xlu0 %v629, 126
        %v633 = vpop.permute.xlu0 %632
        %634 = vrot.lane.b32.xlu0 %v624, 126
        %v635 = vpop.permute.xlu0 %634
        %vm636 = vcmask 1031168
        %v637 = vsel %vm636, %v631, %v633
        %v638 = vsel %vm636, %v633, %v635
        %v640 = vsel %vm321, %v626, 0
        %v642 = vsel %vm325, %v637, 0
        %v644 = vsel %vm325, %v638, 0
        %v646 = vsel %vm325, %v635, 0
        %648 = vmatprep.subr.mxu0 0.0
        %649 = vmatpush1.msra.mxu0 0.0
        %650 = vmatprep.subr.mxu0 0.0
        %651 = vmatpush1.msra.mxu0 0.0
        %652 = vmatprep.subr.mxu0 0.0
        %653 = vmatpush1.msra.mxu0 0.0
        %654 = vmatprep.subr.mxu0 0.0
        %655 = vmatpush1.msra.mxu0 0.0
        %656 = vmatprep.subr.mxu0 0.0
        %657 = vmatpush1.msra.mxu0 0.0
        %658 = vmatprep.subr.mxu0 0.0
        %659 = vmatpush1.msra.mxu0 0.0
        %660 = vmatprep.subr.mxu0 0.0
        %661 = vmatpush1.msra.mxu0 0.0
        %662 = vmatprep.subr.mxu0 0.0
        %663 = vmatpush1.msra.mxu0 0.0
        %664 = vmatprep.subr.mxu0 0.0
        %665 = vmatpush1.msra.mxu0 0.0
        %666 = vmatprep.subr.mxu0 0.0
        %667 = vmatpush1.msra.mxu0 0.0
        %668 = vmatprep.subr.mxu0 0.0
        %669 = vmatpush1.msra.mxu0 0.0
        %670 = vmatprep.subr.mxu0 0.0
        %671 = vmatpush1.msra.mxu0 0.0
        %672 = vmatprep.subr.mxu0 0.0
        %673 = vmatpush1.msra.mxu0 0.0
        %674 = vmatprep.subr.mxu0 0.0
        %675 = vmatpush1.msra.mxu0 0.0
        %676 = vmatprep.subr.mxu0 0.0
        %677 = vmatpush1.msra.mxu0 0.0
        %678 = vmatprep.subr.mxu0 %v644
        %679 = vmatpush1.msra.mxu0 %v642
        %680 = vmatprep.subr.mxu0 0.0
        %681 = vmatpush2.msra.mxu0 0.0
        %682 = vmatprep.subr.mxu0 0.0
        %683 = vmatpush2.msra.mxu0 0.0
        %684 = vmatprep.subr.mxu0 0.0
        %685 = vmatpush2.msra.mxu0 0.0
        %686 = vmatprep.subr.mxu0 0.0
        %687 = vmatpush2.msra.mxu0 0.0
        %688 = vmatprep.subr.mxu0 0.0
        %689 = vmatpush2.msra.mxu0 0.0
        %690 = vmatprep.subr.mxu0 0.0
        %691 = vmatpush2.msra.mxu0 0.0
        %692 = vmatprep.subr.mxu0 0.0
        %693 = vmatpush2.msra.mxu0 0.0
        %694 = vmatprep.subr.mxu0 0.0
        %695 = vmatpush2.msra.mxu0 0.0
        %696 = vmatprep.subr.mxu0 0.0
        %697 = vmatpush2.msra.mxu0 0.0
        %698 = vmatprep.subr.mxu0 0.0
        %699 = vmatpush2.msra.mxu0 0.0
        %700 = vmatprep.subr.mxu0 0.0
        %701 = vmatpush2.msra.mxu0 0.0
        %702 = vmatprep.subr.mxu0 0.0
        %703 = vmatpush2.msra.mxu0 0.0
        %704 = vmatprep.subr.mxu0 0.0
        %705 = vmatpush2.msra.mxu0 0.0
        %706 = vmatprep.subr.mxu0 0.0
        %707 = vmatpush2.msra.mxu0 0.0
        %708 = vmatprep.subr.mxu0 0.0
        %709 = vmatpush2.msra.mxu0 0.0
        %710 = vmatprep.subr.mxu0 0.0
        %711 = vmatpush2.msra.mxu0 0.0
        %712 = vmatprep.mubr.f32.mxu0 0.0
        %713 = vmatmul.mubr.f32.gmra.mxu0 %v640
        %v714 = vpop.f32.mrf.mxu0
        %v715 = vadd.f32 0.0, %v714
        %v716 = vpop.f32.mrf.mxu0
        %v717 = vadd.f32 0.0, %v716
        %718 = vdwg.mxu0
        %719 = vmatprep.subr.mxu0 0.0
        %720 = vmatpush1.msra.mxu0 0.0
        %721 = vmatprep.subr.mxu0 0.0
        %722 = vmatpush1.msra.mxu0 0.0
        %723 = vmatprep.subr.mxu0 0.0
        %724 = vmatpush1.msra.mxu0 0.0
        %725 = vmatprep.subr.mxu0 0.0
        %726 = vmatpush1.msra.mxu0 0.0
        %727 = vmatprep.subr.mxu0 0.0
        %728 = vmatpush1.msra.mxu0 0.0
        %729 = vmatprep.subr.mxu0 0.0
        %730 = vmatpush1.msra.mxu0 0.0
        %731 = vmatprep.subr.mxu0 0.0
        %732 = vmatpush1.msra.mxu0 0.0
        %733 = vmatprep.subr.mxu0 0.0
        %734 = vmatpush1.msra.mxu0 0.0
        %735 = vmatprep.subr.mxu0 0.0
        %736 = vmatpush1.msra.mxu0 0.0
        %737 = vmatprep.subr.mxu0 0.0
        %738 = vmatpush1.msra.mxu0 0.0
        %739 = vmatprep.subr.mxu0 0.0
        %740 = vmatpush1.msra.mxu0 0.0
        %741 = vmatprep.subr.mxu0 0.0
        %742 = vmatpush1.msra.mxu0 0.0
        %743 = vmatprep.subr.mxu0 0.0
        %744 = vmatpush1.msra.mxu0 0.0
        %745 = vmatprep.subr.mxu0 0.0
        %746 = vmatpush1.msra.mxu0 0.0
        %747 = vmatprep.subr.mxu0 0.0
        %748 = vmatpush1.msra.mxu0 0.0
        %749 = vmatprep.subr.mxu0 0.0
        %750 = vmatpush1.msra.mxu0 %v646
        %751 = vmatprep.subr.mxu0 0.0
        %752 = vmatpush2.msra.mxu0 0.0
        %753 = vmatprep.subr.mxu0 0.0
        %754 = vmatpush2.msra.mxu0 0.0
        %755 = vmatprep.subr.mxu0 0.0
        %756 = vmatpush2.msra.mxu0 0.0
        %757 = vmatprep.subr.mxu0 0.0
        %758 = vmatpush2.msra.mxu0 0.0
        %759 = vmatprep.subr.mxu0 0.0
        %760 = vmatpush2.msra.mxu0 0.0
        %761 = vmatprep.subr.mxu0 0.0
        %762 = vmatpush2.msra.mxu0 0.0
        %763 = vmatprep.subr.mxu0 0.0
        %764 = vmatpush2.msra.mxu0 0.0
        %765 = vmatprep.subr.mxu0 0.0
        %766 = vmatpush2.msra.mxu0 0.0
        %767 = vmatprep.subr.mxu0 0.0
        %768 = vmatpush2.msra.mxu0 0.0
        %769 = vmatprep.subr.mxu0 0.0
        %770 = vmatpush2.msra.mxu0 0.0
        %771 = vmatprep.subr.mxu0 0.0
        %772 = vmatpush2.msra.mxu0 0.0
        %773 = vmatprep.subr.mxu0 0.0
        %774 = vmatpush2.msra.mxu0 0.0
        %775 = vmatprep.subr.mxu0 0.0
        %776 = vmatpush2.msra.mxu0 0.0
        %777 = vmatprep.subr.mxu0 0.0
        %778 = vmatpush2.msra.mxu0 0.0
        %779 = vmatprep.subr.mxu0 0.0
        %780 = vmatpush2.msra.mxu0 0.0
        %781 = vmatprep.subr.mxu0 0.0
        %782 = vmatpush2.msra.mxu0 0.0
        %783 = vmatprep.mubr.f32.mxu0 0.0
        %784 = vmatmul.mubr.f32.gmra.mxu0 %v640
        %v785 = vpop.f32.mrf.mxu0
        %v786 = vadd.f32 0.0, %v785
        %v787 = vpop.f32.mrf.mxu0
        %788 = vdwg.mxu0
        %v789 = vadd.f32 %v549, %v715
        %v790 = vadd.f32 %v551, %v717
        %v791 = vadd.f32 %v620, %v786
        %v792 = vld [vmem:[%s303] sm:$0xff]
        %v793 = vld [vmem:[%s303 + $0x8] sm:$0xf]
        %s794 = scalar_lea.vmem %s2, 24
        %v795 = vld [vmem:[%s794] sm:$0xff]
        %v798 = vcombine.high %v792, %v792
        %799 = vrot.lane.b32.xlu0 %v792, 92
        %v800 = vpop.permute.xlu0 %799
        %801 = vrot.lane.b32.xlu0 %v798, 92
        %v802 = vpop.permute.xlu0 %801
        %803 = vrot.lane.b32.xlu0 %v793, 92
        %v804 = vpop.permute.xlu0 %803
        %vm805 = vcmask 752640
        %v806 = vsel %vm805, %v800, %v802
        %v807 = vsel %vm805, %v802, %v804
        %v809 = vsel %vm321, %v795, 0
        %v811 = vsel %vm325, %v806, 0
        %v813 = vsel %vm325, %v807, 0
        %v815 = vsel %vm325, %v804, 0
        %817 = vmatprep.subr.mxu0 0.0
        %818 = vmatpush1.msra.mxu0 0.0
        %819 = vmatprep.subr.mxu0 0.0
        %820 = vmatpush1.msra.mxu0 0.0
        %821 = vmatprep.subr.mxu0 0.0
        %822 = vmatpush1.msra.mxu0 0.0
        %823 = vmatprep.subr.mxu0 0.0
        %824 = vmatpush1.msra.mxu0 0.0
        %825 = vmatprep.subr.mxu0 0.0
        %826 = vmatpush1.msra.mxu0 0.0
        %827 = vmatprep.subr.mxu0 0.0
        %828 = vmatpush1.msra.mxu0 0.0
        %829 = vmatprep.subr.mxu0 0.0
        %830 = vmatpush1.msra.mxu0 0.0
        %831 = vmatprep.subr.mxu0 0.0
        %832 = vmatpush1.msra.mxu0 0.0
        %833 = vmatprep.subr.mxu0 0.0
        %834 = vmatpush1.msra.mxu0 0.0
        %835 = vmatprep.subr.mxu0 0.0
        %836 = vmatpush1.msra.mxu0 0.0
        %837 = vmatprep.subr.mxu0 0.0
        %838 = vmatpush1.msra.mxu0 0.0
        %839 = vmatprep.subr.mxu0 0.0
        %840 = vmatpush1.msra.mxu0 0.0
        %841 = vmatprep.subr.mxu0 0.0
        %842 = vmatpush1.msra.mxu0 0.0
        %843 = vmatprep.subr.mxu0 0.0
        %844 = vmatpush1.msra.mxu0 0.0
        %845 = vmatprep.subr.mxu0 0.0
        %846 = vmatpush1.msra.mxu0 0.0
        %847 = vmatprep.subr.mxu0 %v813
        %848 = vmatpush1.msra.mxu0 %v811
        %849 = vmatprep.subr.mxu0 0.0
        %850 = vmatpush2.msra.mxu0 0.0
        %851 = vmatprep.subr.mxu0 0.0
        %852 = vmatpush2.msra.mxu0 0.0
        %853 = vmatprep.subr.mxu0 0.0
        %854 = vmatpush2.msra.mxu0 0.0
        %855 = vmatprep.subr.mxu0 0.0
        %856 = vmatpush2.msra.mxu0 0.0
        %857 = vmatprep.subr.mxu0 0.0
        %858 = vmatpush2.msra.mxu0 0.0
        %859 = vmatprep.subr.mxu0 0.0
        %860 = vmatpush2.msra.mxu0 0.0
        %861 = vmatprep.subr.mxu0 0.0
        %862 = vmatpush2.msra.mxu0 0.0
        %863 = vmatprep.subr.mxu0 0.0
        %864 = vmatpush2.msra.mxu0 0.0
        %865 = vmatprep.subr.mxu0 0.0
        %866 = vmatpush2.msra.mxu0 0.0
        %867 = vmatprep.subr.mxu0 0.0
        %868 = vmatpush2.msra.mxu0 0.0
        %869 = vmatprep.subr.mxu0 0.0
        %870 = vmatpush2.msra.mxu0 0.0
        %871 = vmatprep.subr.mxu0 0.0
        %872 = vmatpush2.msra.mxu0 0.0
        %873 = vmatprep.subr.mxu0 0.0
        %874 = vmatpush2.msra.mxu0 0.0
        %875 = vmatprep.subr.mxu0 0.0
        %876 = vmatpush2.msra.mxu0 0.0
        %877 = vmatprep.subr.mxu0 0.0
        %878 = vmatpush2.msra.mxu0 0.0
        %879 = vmatprep.subr.mxu0 0.0
        %880 = vmatpush2.msra.mxu0 0.0
        %881 = vmatprep.mubr.f32.mxu0 0.0
        %882 = vmatmul.mubr.f32.gmra.mxu0 %v809
        %v883 = vpop.f32.mrf.mxu0
        %v884 = vadd.f32 0.0, %v883
        %v885 = vpop.f32.mrf.mxu0
        %v886 = vadd.f32 0.0, %v885
        %887 = vdwg.mxu0
        %888 = vmatprep.subr.mxu0 0.0
        %889 = vmatpush1.msra.mxu0 0.0
        %890 = vmatprep.subr.mxu0 0.0
        %891 = vmatpush1.msra.mxu0 0.0
        %892 = vmatprep.subr.mxu0 0.0
        %893 = vmatpush1.msra.mxu0 0.0
        %894 = vmatprep.subr.mxu0 0.0
        %895 = vmatpush1.msra.mxu0 0.0
        %896 = vmatprep.subr.mxu0 0.0
        %897 = vmatpush1.msra.mxu0 0.0
        %898 = vmatprep.subr.mxu0 0.0
        %899 = vmatpush1.msra.mxu0 0.0
        %900 = vmatprep.subr.mxu0 0.0
        %901 = vmatpush1.msra.mxu0 0.0
        %902 = vmatprep.subr.mxu0 0.0
        %903 = vmatpush1.msra.mxu0 0.0
        %904 = vmatprep.subr.mxu0 0.0
        %905 = vmatpush1.msra.mxu0 0.0
        %906 = vmatprep.subr.mxu0 0.0
        %907 = vmatpush1.msra.mxu0 0.0
        %908 = vmatprep.subr.mxu0 0.0
        %909 = vmatpush1.msra.mxu0 0.0
        %910 = vmatprep.subr.mxu0 0.0
        %911 = vmatpush1.msra.mxu0 0.0
        %912 = vmatprep.subr.mxu0 0.0
        %913 = vmatpush1.msra.mxu0 0.0
        %914 = vmatprep.subr.mxu0 0.0
        %915 = vmatpush1.msra.mxu0 0.0
        %916 = vmatprep.subr.mxu0 0.0
        %917 = vmatpush1.msra.mxu0 0.0
        %918 = vmatprep.subr.mxu0 0.0
        %919 = vmatpush1.msra.mxu0 %v815
        %920 = vmatprep.subr.mxu0 0.0
        %921 = vmatpush2.msra.mxu0 0.0
        %922 = vmatprep.subr.mxu0 0.0
        %923 = vmatpush2.msra.mxu0 0.0
        %924 = vmatprep.subr.mxu0 0.0
        %925 = vmatpush2.msra.mxu0 0.0
        %926 = vmatprep.subr.mxu0 0.0
        %927 = vmatpush2.msra.mxu0 0.0
        %928 = vmatprep.subr.mxu0 0.0
        %929 = vmatpush2.msra.mxu0 0.0
        %930 = vmatprep.subr.mxu0 0.0
        %931 = vmatpush2.msra.mxu0 0.0
        %932 = vmatprep.subr.mxu0 0.0
        %933 = vmatpush2.msra.mxu0 0.0
        %934 = vmatprep.subr.mxu0 0.0
        %935 = vmatpush2.msra.mxu0 0.0
        %936 = vmatprep.subr.mxu0 0.0
        %937 = vmatpush2.msra.mxu0 0.0
        %938 = vmatprep.subr.mxu0 0.0
        %939 = vmatpush2.msra.mxu0 0.0
        %940 = vmatprep.subr.mxu0 0.0
        %941 = vmatpush2.msra.mxu0 0.0
        %942 = vmatprep.subr.mxu0 0.0
        %943 = vmatpush2.msra.mxu0 0.0
        %944 = vmatprep.subr.mxu0 0.0
        %945 = vmatpush2.msra.mxu0 0.0
        %946 = vmatprep.subr.mxu0 0.0
        %947 = vmatpush2.msra.mxu0 0.0
        %948 = vmatprep.subr.mxu0 0.0
        %949 = vmatpush2.msra.mxu0 0.0
        %950 = vmatprep.subr.mxu0 0.0
        %951 = vmatpush2.msra.mxu0 0.0
        %952 = vmatprep.mubr.f32.mxu0 0.0
        %953 = vmatmul.mubr.f32.gmra.mxu0 %v809
        %v954 = vpop.f32.mrf.mxu0
        %v955 = vadd.f32 0.0, %v954
        %v956 = vpop.f32.mrf.mxu0
        %957 = vdwg.mxu0
        %v958 = vadd.f32 %v789, %v884
        %v959 = vadd.f32 %v790, %v886
        %v960 = vadd.f32 %v791, %v955
        %v961 = vld [vmem:[%s303] sm:$0xff]
        %v962 = vld [vmem:[%s303 + $0x8] sm:$0xf]
        %s963 = scalar_lea.vmem %s2, 32
        %v964 = vld [vmem:[%s963] sm:$0xff]
        %v967 = vcombine.high %v961, %v961
        %968 = vrot.lane.b32.xlu0 %v961, 91
        %v969 = vpop.permute.xlu0 %968
        %970 = vrot.lane.b32.xlu0 %v967, 91
        %v971 = vpop.permute.xlu0 %970
        %972 = vrot.lane.b32.xlu0 %v962, 91
        %v973 = vpop.permute.xlu0 %972
        %vm974 = vcmask 744448
        %v975 = vsel %vm974, %v969, %v971
        %v976 = vsel %vm974, %v971, %v973
        %v978 = vsel %vm321, %v964, 0
        %v980 = vsel %vm325, %v975, 0
        %v982 = vsel %vm325, %v976, 0
        %v984 = vsel %vm325, %v973, 0
        %986 = vmatprep.subr.mxu0 0.0
        %987 = vmatpush1.msra.mxu0 0.0
        %988 = vmatprep.subr.mxu0 0.0
        %989 = vmatpush1.msra.mxu0 0.0
        %990 = vmatprep.subr.mxu0 0.0
        %991 = vmatpush1.msra.mxu0 0.0
        %992 = vmatprep.subr.mxu0 0.0
        %993 = vmatpush1.msra.mxu0 0.0
        %994 = vmatprep.subr.mxu0 0.0
        %995 = vmatpush1.msra.mxu0 0.0
        %996 = vmatprep.subr.mxu0 0.0
        %997 = vmatpush1.msra.mxu0 0.0
        %998 = vmatprep.subr.mxu0 0.0
        %999 = vmatpush1.msra.mxu0 0.0
        %1000 = vmatprep.subr.mxu0 0.0
        %1001 = vmatpush1.msra.mxu0 0.0
        %1002 = vmatprep.subr.mxu0 0.0
        %1003 = vmatpush1.msra.mxu0 0.0
        %1004 = vmatprep.subr.mxu0 0.0
        %1005 = vmatpush1.msra.mxu0 0.0
        %1006 = vmatprep.subr.mxu0 0.0
        %1007 = vmatpush1.msra.mxu0 0.0
        %1008 = vmatprep.subr.mxu0 0.0
        %1009 = vmatpush1.msra.mxu0 0.0
        %1010 = vmatprep.subr.mxu0 0.0
        %1011 = vmatpush1.msra.mxu0 0.0
        %1012 = vmatprep.subr.mxu0 0.0
        %1013 = vmatpush1.msra.mxu0 0.0
        %1014 = vmatprep.subr.mxu0 0.0
        %1015 = vmatpush1.msra.mxu0 0.0
        %1016 = vmatprep.subr.mxu0 %v982
        %1017 = vmatpush1.msra.mxu0 %v980
        %1018 = vmatprep.subr.mxu0 0.0
        %1019 = vmatpush2.msra.mxu0 0.0
        %1020 = vmatprep.subr.mxu0 0.0
        %1021 = vmatpush2.msra.mxu0 0.0
        %1022 = vmatprep.subr.mxu0 0.0
        %1023 = vmatpush2.msra.mxu0 0.0
        %1024 = vmatprep.subr.mxu0 0.0
        %1025 = vmatpush2.msra.mxu0 0.0
        %1026 = vmatprep.subr.mxu0 0.0
        %1027 = vmatpush2.msra.mxu0 0.0
        %1028 = vmatprep.subr.mxu0 0.0
        %1029 = vmatpush2.msra.mxu0 0.0
        %1030 = vmatprep.subr.mxu0 0.0
        %1031 = vmatpush2.msra.mxu0 0.0
        %1032 = vmatprep.subr.mxu0 0.0
        %1033 = vmatpush2.msra.mxu0 0.0
        %1034 = vmatprep.subr.mxu0 0.0
        %1035 = vmatpush2.msra.mxu0 0.0
        %1036 = vmatprep.subr.mxu0 0.0
        %1037 = vmatpush2.msra.mxu0 0.0
        %1038 = vmatprep.subr.mxu0 0.0
        %1039 = vmatpush2.msra.mxu0 0.0
        %1040 = vmatprep.subr.mxu0 0.0
        %1041 = vmatpush2.msra.mxu0 0.0
        %1042 = vmatprep.subr.mxu0 0.0
        %1043 = vmatpush2.msra.mxu0 0.0
        %1044 = vmatprep.subr.mxu0 0.0
        %1045 = vmatpush2.msra.mxu0 0.0
        %1046 = vmatprep.subr.mxu0 0.0
        %1047 = vmatpush2.msra.mxu0 0.0
        %1048 = vmatprep.subr.mxu0 0.0
        %1049 = vmatpush2.msra.mxu0 0.0
        %1050 = vmatprep.mubr.f32.mxu0 0.0
        %1051 = vmatmul.mubr.f32.gmra.mxu0 %v978
        %v1052 = vpop.f32.mrf.mxu0
        %v1053 = vadd.f32 0.0, %v1052
        %v1054 = vpop.f32.mrf.mxu0
        %v1055 = vadd.f32 0.0, %v1054
        %1056 = vdwg.mxu0
        %1057 = vmatprep.subr.mxu0 0.0
        %1058 = vmatpush1.msra.mxu0 0.0
        %1059 = vmatprep.subr.mxu0 0.0
        %1060 = vmatpush1.msra.mxu0 0.0
        %1061 = vmatprep.subr.mxu0 0.0
        %1062 = vmatpush1.msra.mxu0 0.0
        %1063 = vmatprep.subr.mxu0 0.0
        %1064 = vmatpush1.msra.mxu0 0.0
        %1065 = vmatprep.subr.mxu0 0.0
        %1066 = vmatpush1.msra.mxu0 0.0
        %1067 = vmatprep.subr.mxu0 0.0
        %1068 = vmatpush1.msra.mxu0 0.0
        %1069 = vmatprep.subr.mxu0 0.0
        %1070 = vmatpush1.msra.mxu0 0.0
        %1071 = vmatprep.subr.mxu0 0.0
        %1072 = vmatpush1.msra.mxu0 0.0
        %1073 = vmatprep.subr.mxu0 0.0
        %1074 = vmatpush1.msra.mxu0 0.0
        %1075 = vmatprep.subr.mxu0 0.0
        %1076 = vmatpush1.msra.mxu0 0.0
        %1077 = vmatprep.subr.mxu0 0.0
        %1078 = vmatpush1.msra.mxu0 0.0
        %1079 = vmatprep.subr.mxu0 0.0
        %1080 = vmatpush1.msra.mxu0 0.0
        %1081 = vmatprep.subr.mxu0 0.0
        %1082 = vmatpush1.msra.mxu0 0.0
        %1083 = vmatprep.subr.mxu0 0.0
        %1084 = vmatpush1.msra.mxu0 0.0
        %1085 = vmatprep.subr.mxu0 0.0
        %1086 = vmatpush1.msra.mxu0 0.0
        %1087 = vmatprep.subr.mxu0 0.0
        %1088 = vmatpush1.msra.mxu0 %v984
        %1089 = vmatprep.subr.mxu0 0.0
        %1090 = vmatpush2.msra.mxu0 0.0
        %1091 = vmatprep.subr.mxu0 0.0
        %1092 = vmatpush2.msra.mxu0 0.0
        %1093 = vmatprep.subr.mxu0 0.0
        %1094 = vmatpush2.msra.mxu0 0.0
        %1095 = vmatprep.subr.mxu0 0.0
        %1096 = vmatpush2.msra.mxu0 0.0
        %1097 = vmatprep.subr.mxu0 0.0
        %1098 = vmatpush2.msra.mxu0 0.0
        %1099 = vmatprep.subr.mxu0 0.0
        %1100 = vmatpush2.msra.mxu0 0.0
        %1101 = vmatprep.subr.mxu0 0.0
        %1102 = vmatpush2.msra.mxu0 0.0
        %1103 = vmatprep.subr.mxu0 0.0
        %1104 = vmatpush2.msra.mxu0 0.0
        %1105 = vmatprep.subr.mxu0 0.0
        %1106 = vmatpush2.msra.mxu0 0.0
        %1107 = vmatprep.subr.mxu0 0.0
        %1108 = vmatpush2.msra.mxu0 0.0
        %1109 = vmatprep.subr.mxu0 0.0
        %1110 = vmatpush2.msra.mxu0 0.0
        %1111 = vmatprep.subr.mxu0 0.0
        %1112 = vmatpush2.msra.mxu0 0.0
        %1113 = vmatprep.subr.mxu0 0.0
        %1114 = vmatpush2.msra.mxu0 0.0
        %1115 = vmatprep.subr.mxu0 0.0
        %1116 = vmatpush2.msra.mxu0 0.0
        %1117 = vmatprep.subr.mxu0 0.0
        %1118 = vmatpush2.msra.mxu0 0.0
        %1119 = vmatprep.subr.mxu0 0.0
        %1120 = vmatpush2.msra.mxu0 0.0
        %1121 = vmatprep.mubr.f32.mxu0 0.0
        %1122 = vmatmul.mubr.f32.gmra.mxu0 %v978
        %v1123 = vpop.f32.mrf.mxu0
        %v1124 = vadd.f32 0.0, %v1123
        %v1125 = vpop.f32.mrf.mxu0
        %1126 = vdwg.mxu0
        %v1127 = vadd.f32 %v958, %v1053
        %v1128 = vadd.f32 %v959, %v1055
        %v1129 = vadd.f32 %v960, %v1124
        %v1130 = vld [vmem:[%s303] sm:$0xff]
        %v1131 = vld [vmem:[%s303 + $0x8] sm:$0xf]
        %s1132 = scalar_lea.vmem %s2, 40
        %v1133 = vld [vmem:[%s1132] sm:$0xff]
        %v1136 = vcombine.high %v1130, %v1130
        %1137 = vrot.lane.b32.xlu0 %v1130, 90
        %v1138 = vpop.permute.xlu0 %1137
        %1139 = vrot.lane.b32.xlu0 %v1136, 90
        %v1140 = vpop.permute.xlu0 %1139
        %1141 = vrot.lane.b32.xlu0 %v1131, 90
        %v1142 = vpop.permute.xlu0 %1141
        %vm1143 = vcmask 736256
        %v1144 = vsel %vm1143, %v1138, %v1140
        %v1145 = vsel %vm1143, %v1140, %v1142
        %v1147 = vsel %vm321, %v1133, 0
        %v1149 = vsel %vm325, %v1144, 0
        %v1151 = vsel %vm325, %v1145, 0
        %v1153 = vsel %vm325, %v1142, 0
        %1155 = vmatprep.subr.mxu0 0.0
        %1156 = vmatpush1.msra.mxu0 0.0
        %1157 = vmatprep.subr.mxu0 0.0
        %1158 = vmatpush1.msra.mxu0 0.0
        %1159 = vmatprep.subr.mxu0 0.0
        %1160 = vmatpush1.msra.mxu0 0.0
        %1161 = vmatprep.subr.mxu0 0.0
        %1162 = vmatpush1.msra.mxu0 0.0
        %1163 = vmatprep.subr.mxu0 0.0
        %1164 = vmatpush1.msra.mxu0 0.0
        %1165 = vmatprep.subr.mxu0 0.0
        %1166 = vmatpush1.msra.mxu0 0.0
        %1167 = vmatprep.subr.mxu0 0.0
        %1168 = vmatpush1.msra.mxu0 0.0
        %1169 = vmatprep.subr.mxu0 0.0
        %1170 = vmatpush1.msra.mxu0 0.0
        %1171 = vmatprep.subr.mxu0 0.0
        %1172 = vmatpush1.msra.mxu0 0.0
        %1173 = vmatprep.subr.mxu0 0.0
        %1174 = vmatpush1.msra.mxu0 0.0
        %1175 = vmatprep.subr.mxu0 0.0
        %1176 = vmatpush1.msra.mxu0 0.0
        %1177 = vmatprep.subr.mxu0 0.0
        %1178 = vmatpush1.msra.mxu0 0.0
        %1179 = vmatprep.subr.mxu0 0.0
        %1180 = vmatpush1.msra.mxu0 0.0
        %1181 = vmatprep.subr.mxu0 0.0
        %1182 = vmatpush1.msra.mxu0 0.0
        %1183 = vmatprep.subr.mxu0 0.0
        %1184 = vmatpush1.msra.mxu0 0.0
        %1185 = vmatprep.subr.mxu0 %v1151
        %1186 = vmatpush1.msra.mxu0 %v1149
        %1187 = vmatprep.subr.mxu0 0.0
        %1188 = vmatpush2.msra.mxu0 0.0
        %1189 = vmatprep.subr.mxu0 0.0
        %1190 = vmatpush2.msra.mxu0 0.0
        %1191 = vmatprep.subr.mxu0 0.0
        %1192 = vmatpush2.msra.mxu0 0.0
        %1193 = vmatprep.subr.mxu0 0.0
        %1194 = vmatpush2.msra.mxu0 0.0
        %1195 = vmatprep.subr.mxu0 0.0
        %1196 = vmatpush2.msra.mxu0 0.0
        %1197 = vmatprep.subr.mxu0 0.0
        %1198 = vmatpush2.msra.mxu0 0.0
        %1199 = vmatprep.subr.mxu0 0.0
        %1200 = vmatpush2.msra.mxu0 0.0
        %1201 = vmatprep.subr.mxu0 0.0
        %1202 = vmatpush2.msra.mxu0 0.0
        %1203 = vmatprep.subr.mxu0 0.0
        %1204 = vmatpush2.msra.mxu0 0.0
        %1205 = vmatprep.subr.mxu0 0.0
        %1206 = vmatpush2.msra.mxu0 0.0
        %1207 = vmatprep.subr.mxu0 0.0
        %1208 = vmatpush2.msra.mxu0 0.0
        %1209 = vmatprep.subr.mxu0 0.0
        %1210 = vmatpush2.msra.mxu0 0.0
        %1211 = vmatprep.subr.mxu0 0.0
        %1212 = vmatpush2.msra.mxu0 0.0
        %1213 = vmatprep.subr.mxu0 0.0
        %1214 = vmatpush2.msra.mxu0 0.0
        %1215 = vmatprep.subr.mxu0 0.0
        %1216 = vmatpush2.msra.mxu0 0.0
        %1217 = vmatprep.subr.mxu0 0.0
        %1218 = vmatpush2.msra.mxu0 0.0
        %1219 = vmatprep.mubr.f32.mxu0 0.0
        %1220 = vmatmul.mubr.f32.gmra.mxu0 %v1147
        %v1221 = vpop.f32.mrf.mxu0
        %v1222 = vadd.f32 0.0, %v1221
        %v1223 = vpop.f32.mrf.mxu0
        %v1224 = vadd.f32 0.0, %v1223
        %1225 = vdwg.mxu0
        %1226 = vmatprep.subr.mxu0 0.0
        %1227 = vmatpush1.msra.mxu0 0.0
        %1228 = vmatprep.subr.mxu0 0.0
        %1229 = vmatpush1.msra.mxu0 0.0
        %1230 = vmatprep.subr.mxu0 0.0
        %1231 = vmatpush1.msra.mxu0 0.0
        %1232 = vmatprep.subr.mxu0 0.0
        %1233 = vmatpush1.msra.mxu0 0.0
        %1234 = vmatprep.subr.mxu0 0.0
        %1235 = vmatpush1.msra.mxu0 0.0
        %1236 = vmatprep.subr.mxu0 0.0
        %1237 = vmatpush1.msra.mxu0 0.0
        %1238 = vmatprep.subr.mxu0 0.0
        %1239 = vmatpush1.msra.mxu0 0.0
        %1240 = vmatprep.subr.mxu0 0.0
        %1241 = vmatpush1.msra.mxu0 0.0
        %1242 = vmatprep.subr.mxu0 0.0
        %1243 = vmatpush1.msra.mxu0 0.0
        %1244 = vmatprep.subr.mxu0 0.0
        %1245 = vmatpush1.msra.mxu0 0.0
        %1246 = vmatprep.subr.mxu0 0.0
        %1247 = vmatpush1.msra.mxu0 0.0
        %1248 = vmatprep.subr.mxu0 0.0
        %1249 = vmatpush1.msra.mxu0 0.0
        %1250 = vmatprep.subr.mxu0 0.0
        %1251 = vmatpush1.msra.mxu0 0.0
        %1252 = vmatprep.subr.mxu0 0.0
        %1253 = vmatpush1.msra.mxu0 0.0
        %1254 = vmatprep.subr.mxu0 0.0
        %1255 = vmatpush1.msra.mxu0 0.0
        %1256 = vmatprep.subr.mxu0 0.0
        %1257 = vmatpush1.msra.mxu0 %v1153
        %1258 = vmatprep.subr.mxu0 0.0
        %1259 = vmatpush2.msra.mxu0 0.0
        %1260 = vmatprep.subr.mxu0 0.0
        %1261 = vmatpush2.msra.mxu0 0.0
        %1262 = vmatprep.subr.mxu0 0.0
        %1263 = vmatpush2.msra.mxu0 0.0
        %1264 = vmatprep.subr.mxu0 0.0
        %1265 = vmatpush2.msra.mxu0 0.0
        %1266 = vmatprep.subr.mxu0 0.0
        %1267 = vmatpush2.msra.mxu0 0.0
        %1268 = vmatprep.subr.mxu0 0.0
        %1269 = vmatpush2.msra.mxu0 0.0
        %1270 = vmatprep.subr.mxu0 0.0
        %1271 = vmatpush2.msra.mxu0 0.0
        %1272 = vmatprep.subr.mxu0 0.0
        %1273 = vmatpush2.msra.mxu0 0.0
        %1274 = vmatprep.subr.mxu0 0.0
        %1275 = vmatpush2.msra.mxu0 0.0
        %1276 = vmatprep.subr.mxu0 0.0
        %1277 = vmatpush2.msra.mxu0 0.0
        %1278 = vmatprep.subr.mxu0 0.0
        %1279 = vmatpush2.msra.mxu0 0.0
        %1280 = vmatprep.subr.mxu0 0.0
        %1281 = vmatpush2.msra.mxu0 0.0
        %1282 = vmatprep.subr.mxu0 0.0
        %1283 = vmatpush2.msra.mxu0 0.0
        %1284 = vmatprep.subr.mxu0 0.0
        %1285 = vmatpush2.msra.mxu0 0.0
        %1286 = vmatprep.subr.mxu0 0.0
        %1287 = vmatpush2.msra.mxu0 0.0
        %1288 = vmatprep.subr.mxu0 0.0
        %1289 = vmatpush2.msra.mxu0 0.0
        %1290 = vmatprep.mubr.f32.mxu0 0.0
        %1291 = vmatmul.mubr.f32.gmra.mxu0 %v1147
        %v1292 = vpop.f32.mrf.mxu0
        %v1293 = vadd.f32 0.0, %v1292
        %v1294 = vpop.f32.mrf.mxu0
        %1295 = vdwg.mxu0
        %v1296 = vadd.f32 %v1127, %v1222
        %v1297 = vadd.f32 %v1128, %v1224
        %v1298 = vadd.f32 %v1129, %v1293
        %v1299 = vld [vmem:[%s303] sm:$0xff]
        %v1300 = vld [vmem:[%s303 + $0x8] sm:$0xf]
        %s1301 = scalar_lea.vmem %s2, 48
        %v1302 = vld [vmem:[%s1301] sm:$0xff]
        %v1305 = vcombine.high %v1299, %v1299
        %1306 = vrot.lane.b32.xlu0 %v1299, 56
        %v1307 = vpop.permute.xlu0 %1306
        %1308 = vrot.lane.b32.xlu0 %v1305, 56
        %v1309 = vpop.permute.xlu0 %1308
        %1310 = vrot.lane.b32.xlu0 %v1300, 56
        %v1311 = vpop.permute.xlu0 %1310
        %vm1312 = vcmask 457728
        %v1313 = vsel %vm1312, %v1307, %v1309
        %v1314 = vsel %vm1312, %v1309, %v1311
        %v1316 = vsel %vm321, %v1302, 0
        %v1318 = vsel %vm325, %v1313, 0
        %v1320 = vsel %vm325, %v1314, 0
        %v1322 = vsel %vm325, %v1311, 0
        %1324 = vmatprep.subr.mxu0 0.0
        %1325 = vmatpush1.msra.mxu0 0.0
        %1326 = vmatprep.subr.mxu0 0.0
        %1327 = vmatpush1.msra.mxu0 0.0
        %1328 = vmatprep.subr.mxu0 0.0
        %1329 = vmatpush1.msra.mxu0 0.0
        %1330 = vmatprep.subr.mxu0 0.0
        %1331 = vmatpush1.msra.mxu0 0.0
        %1332 = vmatprep.subr.mxu0 0.0
        %1333 = vmatpush1.msra.mxu0 0.0
        %1334 = vmatprep.subr.mxu0 0.0
        %1335 = vmatpush1.msra.mxu0 0.0
        %1336 = vmatprep.subr.mxu0 0.0
        %1337 = vmatpush1.msra.mxu0 0.0
        %1338 = vmatprep.subr.mxu0 0.0
        %1339 = vmatpush1.msra.mxu0 0.0
        %1340 = vmatprep.subr.mxu0 0.0
        %1341 = vmatpush1.msra.mxu0 0.0
        %1342 = vmatprep.subr.mxu0 0.0
        %1343 = vmatpush1.msra.mxu0 0.0
        %1344 = vmatprep.subr.mxu0 0.0
        %1345 = vmatpush1.msra.mxu0 0.0
        %1346 = vmatprep.subr.mxu0 0.0
        %1347 = vmatpush1.msra.mxu0 0.0
        %1348 = vmatprep.subr.mxu0 0.0
        %1349 = vmatpush1.msra.mxu0 0.0
        %1350 = vmatprep.subr.mxu0 0.0
        %1351 = vmatpush1.msra.mxu0 0.0
        %1352 = vmatprep.subr.mxu0 0.0
        %1353 = vmatpush1.msra.mxu0 0.0
        %1354 = vmatprep.subr.mxu0 %v1320
        %1355 = vmatpush1.msra.mxu0 %v1318
        %1356 = vmatprep.subr.mxu0 0.0
        %1357 = vmatpush2.msra.mxu0 0.0
        %1358 = vmatprep.subr.mxu0 0.0
        %1359 = vmatpush2.msra.mxu0 0.0
        %1360 = vmatprep.subr.mxu0 0.0
        %1361 = vmatpush2.msra.mxu0 0.0
        %1362 = vmatprep.subr.mxu0 0.0
        %1363 = vmatpush2.msra.mxu0 0.0
        %1364 = vmatprep.subr.mxu0 0.0
        %1365 = vmatpush2.msra.mxu0 0.0
        %1366 = vmatprep.subr.mxu0 0.0
        %1367 = vmatpush2.msra.mxu0 0.0
        %1368 = vmatprep.subr.mxu0 0.0
        %1369 = vmatpush2.msra.mxu0 0.0
        %1370 = vmatprep.subr.mxu0 0.0
        %1371 = vmatpush2.msra.mxu0 0.0
        %1372 = vmatprep.subr.mxu0 0.0
        %1373 = vmatpush2.msra.mxu0 0.0
        %1374 = vmatprep.subr.mxu0 0.0
        %1375 = vmatpush2.msra.mxu0 0.0
        %1376 = vmatprep.subr.mxu0 0.0
        %1377 = vmatpush2.msra.mxu0 0.0
        %1378 = vmatprep.subr.mxu0 0.0
        %1379 = vmatpush2.msra.mxu0 0.0
        %1380 = vmatprep.subr.mxu0 0.0
        %1381 = vmatpush2.msra.mxu0 0.0
        %1382 = vmatprep.subr.mxu0 0.0
        %1383 = vmatpush2.msra.mxu0 0.0
        %1384 = vmatprep.subr.mxu0 0.0
        %1385 = vmatpush2.msra.mxu0 0.0
        %1386 = vmatprep.subr.mxu0 0.0
        %1387 = vmatpush2.msra.mxu0 0.0
        %1388 = vmatprep.mubr.f32.mxu0 0.0
        %1389 = vmatmul.mubr.f32.gmra.mxu0 %v1316
        %v1390 = vpop.f32.mrf.mxu0
        %v1391 = vadd.f32 0.0, %v1390
        %v1392 = vpop.f32.mrf.mxu0
        %v1393 = vadd.f32 0.0, %v1392
        %1394 = vdwg.mxu0
        %1395 = vmatprep.subr.mxu0 0.0
        %1396 = vmatpush1.msra.mxu0 0.0
        %1397 = vmatprep.subr.mxu0 0.0
        %1398 = vmatpush1.msra.mxu0 0.0
        %1399 = vmatprep.subr.mxu0 0.0
        %1400 = vmatpush1.msra.mxu0 0.0
        %1401 = vmatprep.subr.mxu0 0.0
        %1402 = vmatpush1.msra.mxu0 0.0
        %1403 = vmatprep.subr.mxu0 0.0
        %1404 = vmatpush1.msra.mxu0 0.0
        %1405 = vmatprep.subr.mxu0 0.0
        %1406 = vmatpush1.msra.mxu0 0.0
        %1407 = vmatprep.subr.mxu0 0.0
        %1408 = vmatpush1.msra.mxu0 0.0
        %1409 = vmatprep.subr.mxu0 0.0
        %1410 = vmatpush1.msra.mxu0 0.0
        %1411 = vmatprep.subr.mxu0 0.0
        %1412 = vmatpush1.msra.mxu0 0.0
        %1413 = vmatprep.subr.mxu0 0.0
        %1414 = vmatpush1.msra.mxu0 0.0
        %1415 = vmatprep.subr.mxu0 0.0
        %1416 = vmatpush1.msra.mxu0 0.0
        %1417 = vmatprep.subr.mxu0 0.0
        %1418 = vmatpush1.msra.mxu0 0.0
        %1419 = vmatprep.subr.mxu0 0.0
        %1420 = vmatpush1.msra.mxu0 0.0
        %1421 = vmatprep.subr.mxu0 0.0
        %1422 = vmatpush1.msra.mxu0 0.0
        %1423 = vmatprep.subr.mxu0 0.0
        %1424 = vmatpush1.msra.mxu0 0.0
        %1425 = vmatprep.subr.mxu0 0.0
        %1426 = vmatpush1.msra.mxu0 %v1322
        %1427 = vmatprep.subr.mxu0 0.0
        %1428 = vmatpush2.msra.mxu0 0.0
        %1429 = vmatprep.subr.mxu0 0.0
        %1430 = vmatpush2.msra.mxu0 0.0
        %1431 = vmatprep.subr.mxu0 0.0
        %1432 = vmatpush2.msra.mxu0 0.0
        %1433 = vmatprep.subr.mxu0 0.0
        %1434 = vmatpush2.msra.mxu0 0.0
        %1435 = vmatprep.subr.mxu0 0.0
        %1436 = vmatpush2.msra.mxu0 0.0
        %1437 = vmatprep.subr.mxu0 0.0
        %1438 = vmatpush2.msra.mxu0 0.0
        %1439 = vmatprep.subr.mxu0 0.0
        %1440 = vmatpush2.msra.mxu0 0.0
        %1441 = vmatprep.subr.mxu0 0.0
        %1442 = vmatpush2.msra.mxu0 0.0
        %1443 = vmatprep.subr.mxu0 0.0
        %1444 = vmatpush2.msra.mxu0 0.0
        %1445 = vmatprep.subr.mxu0 0.0
        %1446 = vmatpush2.msra.mxu0 0.0
        %1447 = vmatprep.subr.mxu0 0.0
        %1448 = vmatpush2.msra.mxu0 0.0
        %1449 = vmatprep.subr.mxu0 0.0
        %1450 = vmatpush2.msra.mxu0 0.0
        %1451 = vmatprep.subr.mxu0 0.0
        %1452 = vmatpush2.msra.mxu0 0.0
        %1453 = vmatprep.subr.mxu0 0.0
        %1454 = vmatpush2.msra.mxu0 0.0
        %1455 = vmatprep.subr.mxu0 0.0
        %1456 = vmatpush2.msra.mxu0 0.0
        %1457 = vmatprep.subr.mxu0 0.0
        %1458 = vmatpush2.msra.mxu0 0.0
        %1459 = vmatprep.mubr.f32.mxu0 0.0
        %1460 = vmatmul.mubr.f32.gmra.mxu0 %v1316
        %v1461 = vpop.f32.mrf.mxu0
        %v1462 = vadd.f32 0.0, %v1461
        %v1463 = vpop.f32.mrf.mxu0
        %1464 = vdwg.mxu0
        %v1465 = vadd.f32 %v1296, %v1391
        %v1466 = vadd.f32 %v1297, %v1393
        %v1467 = vadd.f32 %v1298, %v1462
        %v1468 = vld [vmem:[%s303] sm:$0xff]
        %v1469 = vld [vmem:[%s303 + $0x8] sm:$0xf]
        %s1470 = scalar_lea.vmem %s2, 56
        %v1471 = vld [vmem:[%s1470] sm:$0xff]
        %v1474 = vcombine.high %v1468, %v1468
        %1475 = vrot.lane.b32.xlu0 %v1468, 55
        %v1476 = vpop.permute.xlu0 %1475
        %1477 = vrot.lane.b32.xlu0 %v1474, 55
        %v1478 = vpop.permute.xlu0 %1477
        %1479 = vrot.lane.b32.xlu0 %v1469, 55
        %v1480 = vpop.permute.xlu0 %1479
        %vm1481 = vcmask 449536
        %v1482 = vsel %vm1481, %v1476, %v1478
        %v1483 = vsel %vm1481, %v1478, %v1480
        %v1485 = vsel %vm321, %v1471, 0
        %v1487 = vsel %vm325, %v1482, 0
        %v1489 = vsel %vm325, %v1483, 0
        %v1491 = vsel %vm325, %v1480, 0
        %1493 = vmatprep.subr.mxu0 0.0
        %1494 = vmatpush1.msra.mxu0 0.0
        %1495 = vmatprep.subr.mxu0 0.0
        %1496 = vmatpush1.msra.mxu0 0.0
        %1497 = vmatprep.subr.mxu0 0.0
        %1498 = vmatpush1.msra.mxu0 0.0
        %1499 = vmatprep.subr.mxu0 0.0
        %1500 = vmatpush1.msra.mxu0 0.0
        %1501 = vmatprep.subr.mxu0 0.0
        %1502 = vmatpush1.msra.mxu0 0.0
        %1503 = vmatprep.subr.mxu0 0.0
        %1504 = vmatpush1.msra.mxu0 0.0
        %1505 = vmatprep.subr.mxu0 0.0
        %1506 = vmatpush1.msra.mxu0 0.0
        %1507 = vmatprep.subr.mxu0 0.0
        %1508 = vmatpush1.msra.mxu0 0.0
        %1509 = vmatprep.subr.mxu0 0.0
        %1510 = vmatpush1.msra.mxu0 0.0
        %1511 = vmatprep.subr.mxu0 0.0
        %1512 = vmatpush1.msra.mxu0 0.0
        %1513 = vmatprep.subr.mxu0 0.0
        %1514 = vmatpush1.msra.mxu0 0.0
        %1515 = vmatprep.subr.mxu0 0.0
        %1516 = vmatpush1.msra.mxu0 0.0
        %1517 = vmatprep.subr.mxu0 0.0
        %1518 = vmatpush1.msra.mxu0 0.0
        %1519 = vmatprep.subr.mxu0 0.0
        %1520 = vmatpush1.msra.mxu0 0.0
        %1521 = vmatprep.subr.mxu0 0.0
        %1522 = vmatpush1.msra.mxu0 0.0
        %1523 = vmatprep.subr.mxu0 %v1489
        %1524 = vmatpush1.msra.mxu0 %v1487
        %1525 = vmatprep.subr.mxu0 0.0
        %1526 = vmatpush2.msra.mxu0 0.0
        %1527 = vmatprep.subr.mxu0 0.0
        %1528 = vmatpush2.msra.mxu0 0.0
        %1529 = vmatprep.subr.mxu0 0.0
        %1530 = vmatpush2.msra.mxu0 0.0
        %1531 = vmatprep.subr.mxu0 0.0
        %1532 = vmatpush2.msra.mxu0 0.0
        %1533 = vmatprep.subr.mxu0 0.0
        %1534 = vmatpush2.msra.mxu0 0.0
        %1535 = vmatprep.subr.mxu0 0.0
        %1536 = vmatpush2.msra.mxu0 0.0
        %1537 = vmatprep.subr.mxu0 0.0
        %1538 = vmatpush2.msra.mxu0 0.0
        %1539 = vmatprep.subr.mxu0 0.0
        %1540 = vmatpush2.msra.mxu0 0.0
        %1541 = vmatprep.subr.mxu0 0.0
        %1542 = vmatpush2.msra.mxu0 0.0
        %1543 = vmatprep.subr.mxu0 0.0
        %1544 = vmatpush2.msra.mxu0 0.0
        %1545 = vmatprep.subr.mxu0 0.0
        %1546 = vmatpush2.msra.mxu0 0.0
        %1547 = vmatprep.subr.mxu0 0.0
        %1548 = vmatpush2.msra.mxu0 0.0
        %1549 = vmatprep.subr.mxu0 0.0
        %1550 = vmatpush2.msra.mxu0 0.0
        %1551 = vmatprep.subr.mxu0 0.0
        %1552 = vmatpush2.msra.mxu0 0.0
        %1553 = vmatprep.subr.mxu0 0.0
        %1554 = vmatpush2.msra.mxu0 0.0
        %1555 = vmatprep.subr.mxu0 0.0
        %1556 = vmatpush2.msra.mxu0 0.0
        %1557 = vmatprep.mubr.f32.mxu0 0.0
        %1558 = vmatmul.mubr.f32.gmra.mxu0 %v1485
        %v1559 = vpop.f32.mrf.mxu0
        %v1560 = vadd.f32 0.0, %v1559
        %v1561 = vpop.f32.mrf.mxu0
        %v1562 = vadd.f32 0.0, %v1561
        %1563 = vdwg.mxu0
        %1564 = vmatprep.subr.mxu0 0.0
        %1565 = vmatpush1.msra.mxu0 0.0
        %1566 = vmatprep.subr.mxu0 0.0
        %1567 = vmatpush1.msra.mxu0 0.0
        %1568 = vmatprep.subr.mxu0 0.0
        %1569 = vmatpush1.msra.mxu0 0.0
        %1570 = vmatprep.subr.mxu0 0.0
        %1571 = vmatpush1.msra.mxu0 0.0
        %1572 = vmatprep.subr.mxu0 0.0
        %1573 = vmatpush1.msra.mxu0 0.0
        %1574 = vmatprep.subr.mxu0 0.0
        %1575 = vmatpush1.msra.mxu0 0.0
        %1576 = vmatprep.subr.mxu0 0.0
        %1577 = vmatpush1.msra.mxu0 0.0
        %1578 = vmatprep.subr.mxu0 0.0
        %1579 = vmatpush1.msra.mxu0 0.0
        %1580 = vmatprep.subr.mxu0 0.0
        %1581 = vmatpush1.msra.mxu0 0.0
        %1582 = vmatprep.subr.mxu0 0.0
        %1583 = vmatpush1.msra.mxu0 0.0
        %1584 = vmatprep.subr.mxu0 0.0
        %1585 = vmatpush1.msra.mxu0 0.0
        %1586 = vmatprep.subr.mxu0 0.0
        %1587 = vmatpush1.msra.mxu0 0.0
        %1588 = vmatprep.subr.mxu0 0.0
        %1589 = vmatpush1.msra.mxu0 0.0
        %1590 = vmatprep.subr.mxu0 0.0
        %1591 = vmatpush1.msra.mxu0 0.0
        %1592 = vmatprep.subr.mxu0 0.0
        %1593 = vmatpush1.msra.mxu0 0.0
        %1594 = vmatprep.subr.mxu0 0.0
        %1595 = vmatpush1.msra.mxu0 %v1491
        %1596 = vmatprep.subr.mxu0 0.0
        %1597 = vmatpush2.msra.mxu0 0.0
        %1598 = vmatprep.subr.mxu0 0.0
        %1599 = vmatpush2.msra.mxu0 0.0
        %1600 = vmatprep.subr.mxu0 0.0
        %1601 = vmatpush2.msra.mxu0 0.0
        %1602 = vmatprep.subr.mxu0 0.0
        %1603 = vmatpush2.msra.mxu0 0.0
        %1604 = vmatprep.subr.mxu0 0.0
        %1605 = vmatpush2.msra.mxu0 0.0
        %1606 = vmatprep.subr.mxu0 0.0
        %1607 = vmatpush2.msra.mxu0 0.0
        %1608 = vmatprep.subr.mxu0 0.0
        %1609 = vmatpush2.msra.mxu0 0.0
        %1610 = vmatprep.subr.mxu0 0.0
        %1611 = vmatpush2.msra.mxu0 0.0
        %1612 = vmatprep.subr.mxu0 0.0
        %1613 = vmatpush2.msra.mxu0 0.0
        %1614 = vmatprep.subr.mxu0 0.0
        %1615 = vmatpush2.msra.mxu0 0.0
        %1616 = vmatprep.subr.mxu0 0.0
        %1617 = vmatpush2.msra.mxu0 0.0
        %1618 = vmatprep.subr.mxu0 0.0
        %1619 = vmatpush2.msra.mxu0 0.0
        %1620 = vmatprep.subr.mxu0 0.0
        %1621 = vmatpush2.msra.mxu0 0.0
        %1622 = vmatprep.subr.mxu0 0.0
        %1623 = vmatpush2.msra.mxu0 0.0
        %1624 = vmatprep.subr.mxu0 0.0
        %1625 = vmatpush2.msra.mxu0 0.0
        %1626 = vmatprep.subr.mxu0 0.0
        %1627 = vmatpush2.msra.mxu0 0.0
        %1628 = vmatprep.mubr.f32.mxu0 0.0
        %1629 = vmatmul.mubr.f32.gmra.mxu0 %v1485
        %v1630 = vpop.f32.mrf.mxu0
        %v1631 = vadd.f32 0.0, %v1630
        %v1632 = vpop.f32.mrf.mxu0
        %1633 = vdwg.mxu0
        %v1634 = vadd.f32 %v1465, %v1560
        %v1635 = vadd.f32 %v1466, %v1562
        %v1636 = vadd.f32 %v1467, %v1631
        %v1637 = vld [vmem:[%s303] sm:$0xff]
        %v1638 = vld [vmem:[%s303 + $0x8] sm:$0xf]
        %s1639 = scalar_lea.vmem %s2, 64
        %v1640 = vld [vmem:[%s1639] sm:$0xff]
        %v1643 = vcombine.high %v1637, %v1637
        %1644 = vrot.lane.b32.xlu0 %v1637, 54
        %v1645 = vpop.permute.xlu0 %1644
        %1646 = vrot.lane.b32.xlu0 %v1643, 54
        %v1647 = vpop.permute.xlu0 %1646
        %1648 = vrot.lane.b32.xlu0 %v1638, 54
        %v1649 = vpop.permute.xlu0 %1648
        %vm1650 = vcmask 441344
        %v1651 = vsel %vm1650, %v1645, %v1647
        %v1652 = vsel %vm1650, %v1647, %v1649
        %v1654 = vsel %vm321, %v1640, 0
        %v1656 = vsel %vm325, %v1651, 0
        %v1658 = vsel %vm325, %v1652, 0
        %v1660 = vsel %vm325, %v1649, 0
        %1662 = vmatprep.subr.mxu0 0.0
        %1663 = vmatpush1.msra.mxu0 0.0
        %1664 = vmatprep.subr.mxu0 0.0
        %1665 = vmatpush1.msra.mxu0 0.0
        %1666 = vmatprep.subr.mxu0 0.0
        %1667 = vmatpush1.msra.mxu0 0.0
        %1668 = vmatprep.subr.mxu0 0.0
        %1669 = vmatpush1.msra.mxu0 0.0
        %1670 = vmatprep.subr.mxu0 0.0
        %1671 = vmatpush1.msra.mxu0 0.0
        %1672 = vmatprep.subr.mxu0 0.0
        %1673 = vmatpush1.msra.mxu0 0.0
        %1674 = vmatprep.subr.mxu0 0.0
        %1675 = vmatpush1.msra.mxu0 0.0
        %1676 = vmatprep.subr.mxu0 0.0
        %1677 = vmatpush1.msra.mxu0 0.0
        %1678 = vmatprep.subr.mxu0 0.0
        %1679 = vmatpush1.msra.mxu0 0.0
        %1680 = vmatprep.subr.mxu0 0.0
        %1681 = vmatpush1.msra.mxu0 0.0
        %1682 = vmatprep.subr.mxu0 0.0
        %1683 = vmatpush1.msra.mxu0 0.0
        %1684 = vmatprep.subr.mxu0 0.0
        %1685 = vmatpush1.msra.mxu0 0.0
        %1686 = vmatprep.subr.mxu0 0.0
        %1687 = vmatpush1.msra.mxu0 0.0
        %1688 = vmatprep.subr.mxu0 0.0
        %1689 = vmatpush1.msra.mxu0 0.0
        %1690 = vmatprep.subr.mxu0 0.0
        %1691 = vmatpush1.msra.mxu0 0.0
        %1692 = vmatprep.subr.mxu0 %v1658
        %1693 = vmatpush1.msra.mxu0 %v1656
        %1694 = vmatprep.subr.mxu0 0.0
        %1695 = vmatpush2.msra.mxu0 0.0
        %1696 = vmatprep.subr.mxu0 0.0
        %1697 = vmatpush2.msra.mxu0 0.0
        %1698 = vmatprep.subr.mxu0 0.0
        %1699 = vmatpush2.msra.mxu0 0.0
        %1700 = vmatprep.subr.mxu0 0.0
        %1701 = vmatpush2.msra.mxu0 0.0
        %1702 = vmatprep.subr.mxu0 0.0
        %1703 = vmatpush2.msra.mxu0 0.0
        %1704 = vmatprep.subr.mxu0 0.0
        %1705 = vmatpush2.msra.mxu0 0.0
        %1706 = vmatprep.subr.mxu0 0.0
        %1707 = vmatpush2.msra.mxu0 0.0
        %1708 = vmatprep.subr.mxu0 0.0
        %1709 = vmatpush2.msra.mxu0 0.0
        %1710 = vmatprep.subr.mxu0 0.0
        %1711 = vmatpush2.msra.mxu0 0.0
        %1712 = vmatprep.subr.mxu0 0.0
        %1713 = vmatpush2.msra.mxu0 0.0
        %1714 = vmatprep.subr.mxu0 0.0
        %1715 = vmatpush2.msra.mxu0 0.0
        %1716 = vmatprep.subr.mxu0 0.0
        %1717 = vmatpush2.msra.mxu0 0.0
        %1718 = vmatprep.subr.mxu0 0.0
        %1719 = vmatpush2.msra.mxu0 0.0
        %1720 = vmatprep.subr.mxu0 0.0
        %1721 = vmatpush2.msra.mxu0 0.0
        %1722 = vmatprep.subr.mxu0 0.0
        %1723 = vmatpush2.msra.mxu0 0.0
        %1724 = vmatprep.subr.mxu0 0.0
        %1725 = vmatpush2.msra.mxu0 0.0
        %1726 = vmatprep.mubr.f32.mxu0 0.0
        %1727 = vmatmul.mubr.f32.gmra.mxu0 %v1654
        %v1728 = vpop.f32.mrf.mxu0
        %v1729 = vadd.f32 0.0, %v1728
        %v1730 = vpop.f32.mrf.mxu0
        %v1731 = vadd.f32 0.0, %v1730
        %1732 = vdwg.mxu0
        %1733 = vmatprep.subr.mxu0 0.0
        %1734 = vmatpush1.msra.mxu0 0.0
        %1735 = vmatprep.subr.mxu0 0.0
        %1736 = vmatpush1.msra.mxu0 0.0
        %1737 = vmatprep.subr.mxu0 0.0
        %1738 = vmatpush1.msra.mxu0 0.0
        %1739 = vmatprep.subr.mxu0 0.0
        %1740 = vmatpush1.msra.mxu0 0.0
        %1741 = vmatprep.subr.mxu0 0.0
        %1742 = vmatpush1.msra.mxu0 0.0
        %1743 = vmatprep.subr.mxu0 0.0
        %1744 = vmatpush1.msra.mxu0 0.0
        %1745 = vmatprep.subr.mxu0 0.0
        %1746 = vmatpush1.msra.mxu0 0.0
        %1747 = vmatprep.subr.mxu0 0.0
        %1748 = vmatpush1.msra.mxu0 0.0
        %1749 = vmatprep.subr.mxu0 0.0
        %1750 = vmatpush1.msra.mxu0 0.0
        %1751 = vmatprep.subr.mxu0 0.0
        %1752 = vmatpush1.msra.mxu0 0.0
        %1753 = vmatprep.subr.mxu0 0.0
        %1754 = vmatpush1.msra.mxu0 0.0
        %1755 = vmatprep.subr.mxu0 0.0
        %1756 = vmatpush1.msra.mxu0 0.0
        %1757 = vmatprep.subr.mxu0 0.0
        %1758 = vmatpush1.msra.mxu0 0.0
        %1759 = vmatprep.subr.mxu0 0.0
        %1760 = vmatpush1.msra.mxu0 0.0
        %1761 = vmatprep.subr.mxu0 0.0
        %1762 = vmatpush1.msra.mxu0 0.0
        %1763 = vmatprep.subr.mxu0 0.0
        %1764 = vmatpush1.msra.mxu0 %v1660
        %1765 = vmatprep.subr.mxu0 0.0
        %1766 = vmatpush2.msra.mxu0 0.0
        %1767 = vmatprep.subr.mxu0 0.0
        %1768 = vmatpush2.msra.mxu0 0.0
        %1769 = vmatprep.subr.mxu0 0.0
        %1770 = vmatpush2.msra.mxu0 0.0
        %1771 = vmatprep.subr.mxu0 0.0
        %1772 = vmatpush2.msra.mxu0 0.0
        %1773 = vmatprep.subr.mxu0 0.0
        %1774 = vmatpush2.msra.mxu0 0.0
        %1775 = vmatprep.subr.mxu0 0.0
        %1776 = vmatpush2.msra.mxu0 0.0
        %1777 = vmatprep.subr.mxu0 0.0
        %1778 = vmatpush2.msra.mxu0 0.0
        %1779 = vmatprep.subr.mxu0 0.0
        %1780 = vmatpush2.msra.mxu0 0.0
        %1781 = vmatprep.subr.mxu0 0.0
        %1782 = vmatpush2.msra.mxu0 0.0
        %1783 = vmatprep.subr.mxu0 0.0
        %1784 = vmatpush2.msra.mxu0 0.0
        %1785 = vmatprep.subr.mxu0 0.0
        %1786 = vmatpush2.msra.mxu0 0.0
        %1787 = vmatprep.subr.mxu0 0.0
        %1788 = vmatpush2.msra.mxu0 0.0
        %1789 = vmatprep.subr.mxu0 0.0
        %1790 = vmatpush2.msra.mxu0 0.0
        %1791 = vmatprep.subr.mxu0 0.0
        %1792 = vmatpush2.msra.mxu0 0.0
        %1793 = vmatprep.subr.mxu0 0.0
        %1794 = vmatpush2.msra.mxu0 0.0
        %1795 = vmatprep.subr.mxu0 0.0
        %1796 = vmatpush2.msra.mxu0 0.0
        %1797 = vmatprep.mubr.f32.mxu0 0.0
        %1798 = vmatmul.mubr.f32.gmra.mxu0 %v1654
        %v1799 = vpop.f32.mrf.mxu0
        %v1800 = vadd.f32 0.0, %v1799
        %v1801 = vpop.f32.mrf.mxu0
        %1802 = vdwg.mxu0
        %v1803 = vadd.f32 %v1634, %v1729
        %v1804 = vadd.f32 %v1635, %v1731
        %v1805 = vadd.f32 %v1636, %v1800
        %v1806 = vld [vmem:[%s3] sm:$0xff]
        %1808 = vset.pattern.permute.xlu0 0
        %1809 = vperm.xlu0 %1808, %v1806
        %v1810 = vpop.permute.xlu0 %1809
        %v1812 = vadd.f32 %v1803, %v1810
        %v1813 = vadd.f32 %v1804, %v1810
        %v1814 = vadd.f32 %v1805, %v1810
        %v1815 = vmax.f32 %v1812, 0.0
        %v1816 = vmax.f32 %v1813, 0.0
        %v1817 = vmax.f32 %v1814, 0.0
        %v1818 = vld [vmem:[%s1] sm:$0x7]
        %v1820 = vlaneseq
        %v1821 = vshrl.u32 %v1820, 7
        %v1822 = vsub.s32 0, %v1821
        %v1823 = vrot.slane %v1818, %v1822
        %v1824 = vlaneseq
        %v1825 = vshrl.u32 %v1824, 7
        %v1826 = vsub.s32 1, %v1825
        %v1827 = vrot.slane %v1818, %v1826
        %v1828 = vlaneseq
        %v1829 = vshrl.u32 %v1828, 7
        %v1830 = vsub.s32 2, %v1829
        %v1831 = vrot.slane %v1818, %v1830
        %v1835 = vmul.f32 %v1815, %v1823
        %v1836 = vmul.f32 %v1816, %v1827
        %v1837 = vmul.f32 %v1817, %v1831
        %1838 = vst [vmem:[#allocation2] sm:$0xff] 0.0
        %1839 = vst [vmem:[#allocation2 + $0x8] sm:$0xff] 0.0
        %1840 = vst [vmem:[#allocation2 + $0x10] sm:$0xff] 0.0
        %1841 = vst [vmem:[#allocation2 + $0x18] sm:$0xff] 0.0
        %1842 = vst [vmem:[#allocation2 + $0x8] sm:$0xff] %v1835
        %1843 = vst [vmem:[#allocation2 + $0x10] sm:$0xff] %v1836
        %vm1844 = vcmask 261120
        %1845 = vst.msk [vmem:[#allocation2 + $0x18] sm:$0xff] %vm1844, %v1837
        %v1846 = vld [vmem:[#allocation2] sm:$0xff]
        %v1847 = vld [vmem:[#allocation2 + $0x8] sm:$0xff]
        %v1848 = vld [vmem:[#allocation2 + $0x10] sm:$0xff]
        %v1849 = vld [vmem:[%s4] sm:$0xff]
        %s1850 = scalar_lea.vmem %s4, 8
        %v1851 = vld [vmem:[%s1850] sm:$0xff]
        %1855 = vrot.lane.b32.xlu0 %v1846, 72
        %v1856 = vpop.permute.xlu0 %1855
        %1857 = vrot.lane.b32.xlu0 %v1847, 72
        %v1858 = vpop.permute.xlu0 %1857
        %1859 = vrot.lane.b32.xlu0 %v1848, 72
        %v1860 = vpop.permute.xlu0 %1859
        %vm1861 = vcmask 588800
        %v1862 = vsel %vm1861, %v1856, %v1858
        %v1863 = vsel %vm1861, %v1858, %v1860
        %vm1867 = vcmask 64512
        %v1869 = vsel %vm1867, %v1851, 0
        %1871 = vmatprep.subr.mxu0 0.0
        %1872 = vmatpush1.msra.mxu0 0.0
        %1873 = vmatprep.subr.mxu0 0.0
        %1874 = vmatpush1.msra.mxu0 0.0
        %1875 = vmatprep.subr.mxu0 0.0
        %1876 = vmatpush1.msra.mxu0 0.0
        %1877 = vmatprep.subr.mxu0 0.0
        %1878 = vmatpush1.msra.mxu0 0.0
        %1879 = vmatprep.subr.mxu0 0.0
        %1880 = vmatpush1.msra.mxu0 0.0
        %1881 = vmatprep.subr.mxu0 0.0
        %1882 = vmatpush1.msra.mxu0 0.0
        %1883 = vmatprep.subr.mxu0 0.0
        %1884 = vmatpush1.msra.mxu0 0.0
        %1885 = vmatprep.subr.mxu0 0.0
        %1886 = vmatpush1.msra.mxu0 0.0
        %1887 = vmatprep.subr.mxu0 0.0
        %1888 = vmatpush1.msra.mxu0 0.0
        %1889 = vmatprep.subr.mxu0 0.0
        %1890 = vmatpush1.msra.mxu0 0.0
        %1891 = vmatprep.subr.mxu0 0.0
        %1892 = vmatpush1.msra.mxu0 0.0
        %1893 = vmatprep.subr.mxu0 0.0
        %1894 = vmatpush1.msra.mxu0 0.0
        %1895 = vmatprep.subr.mxu0 0.0
        %1896 = vmatpush1.msra.mxu0 0.0
        %1897 = vmatprep.subr.mxu0 0.0
        %1898 = vmatpush1.msra.mxu0 0.0
        %1899 = vmatprep.subr.mxu0 0.0
        %1900 = vmatpush1.msra.mxu0 0.0
        %1901 = vmatprep.subr.mxu0 %v1863
        %1902 = vmatpush1.msra.mxu0 %v1862
        %1903 = vmatprep.subr.mxu0 0.0
        %1904 = vmatpush2.msra.mxu0 0.0
        %1905 = vmatprep.subr.mxu0 0.0
        %1906 = vmatpush2.msra.mxu0 0.0
        %1907 = vmatprep.subr.mxu0 0.0
        %1908 = vmatpush2.msra.mxu0 0.0
        %1909 = vmatprep.subr.mxu0 0.0
        %1910 = vmatpush2.msra.mxu0 0.0
        %1911 = vmatprep.subr.mxu0 0.0
        %1912 = vmatpush2.msra.mxu0 0.0
        %1913 = vmatprep.subr.mxu0 0.0
        %1914 = vmatpush2.msra.mxu0 0.0
        %1915 = vmatprep.subr.mxu0 0.0
        %1916 = vmatpush2.msra.mxu0 0.0
        %1917 = vmatprep.subr.mxu0 0.0
        %1918 = vmatpush2.msra.mxu0 0.0
        %1919 = vmatprep.subr.mxu0 0.0
        %1920 = vmatpush2.msra.mxu0 0.0
        %1921 = vmatprep.subr.mxu0 0.0
        %1922 = vmatpush2.msra.mxu0 0.0
        %1923 = vmatprep.subr.mxu0 0.0
        %1924 = vmatpush2.msra.mxu0 0.0
        %1925 = vmatprep.subr.mxu0 0.0
        %1926 = vmatpush2.msra.mxu0 0.0
        %1927 = vmatprep.subr.mxu0 0.0
        %1928 = vmatpush2.msra.mxu0 0.0
        %1929 = vmatprep.subr.mxu0 0.0
        %1930 = vmatpush2.msra.mxu0 0.0
        %1931 = vmatprep.subr.mxu0 0.0
        %1932 = vmatpush2.msra.mxu0 0.0
        %1933 = vmatprep.subr.mxu0 0.0
        %1934 = vmatpush2.msra.mxu0 0.0
        %1935 = vmatprep.mubr.f32.mxu0 0.0
        %1936 = vmatmul.mubr.f32.gmra.mxu0 %v1869
        %v1937 = vpop.f32.mrf.mxu0
        %v1938 = vadd.f32 0.0, %v1937
        %v1939 = vpop.f32.mrf.mxu0
        %v1940 = vadd.f32 0.0, %v1939
        %1941 = vdwg.mxu0
        %1942 = vmatprep.subr.mxu0 0.0
        %1943 = vmatpush1.msra.mxu0 0.0
        %1944 = vmatprep.subr.mxu0 0.0
        %1945 = vmatpush1.msra.mxu0 0.0
        %1946 = vmatprep.subr.mxu0 0.0
        %1947 = vmatpush1.msra.mxu0 0.0
        %1948 = vmatprep.subr.mxu0 0.0
        %1949 = vmatpush1.msra.mxu0 0.0
        %1950 = vmatprep.subr.mxu0 0.0
        %1951 = vmatpush1.msra.mxu0 0.0
        %1952 = vmatprep.subr.mxu0 0.0
        %1953 = vmatpush1.msra.mxu0 0.0
        %1954 = vmatprep.subr.mxu0 0.0
        %1955 = vmatpush1.msra.mxu0 0.0
        %1956 = vmatprep.subr.mxu0 0.0
        %1957 = vmatpush1.msra.mxu0 0.0
        %1958 = vmatprep.subr.mxu0 0.0
        %1959 = vmatpush1.msra.mxu0 0.0
        %1960 = vmatprep.subr.mxu0 0.0
        %1961 = vmatpush1.msra.mxu0 0.0
        %1962 = vmatprep.subr.mxu0 0.0
        %1963 = vmatpush1.msra.mxu0 0.0
        %1964 = vmatprep.subr.mxu0 0.0
        %1965 = vmatpush1.msra.mxu0 0.0
        %1966 = vmatprep.subr.mxu0 0.0
        %1967 = vmatpush1.msra.mxu0 0.0
        %1968 = vmatprep.subr.mxu0 0.0
        %1969 = vmatpush1.msra.mxu0 0.0
        %1970 = vmatprep.subr.mxu0 0.0
        %1971 = vmatpush1.msra.mxu0 0.0
        %1972 = vmatprep.subr.mxu0 0.0
        %1973 = vmatpush1.msra.mxu0 %v1860
        %1974 = vmatprep.subr.mxu0 0.0
        %1975 = vmatpush2.msra.mxu0 0.0
        %1976 = vmatprep.subr.mxu0 0.0
        %1977 = vmatpush2.msra.mxu0 0.0
        %1978 = vmatprep.subr.mxu0 0.0
        %1979 = vmatpush2.msra.mxu0 0.0
        %1980 = vmatprep.subr.mxu0 0.0
        %1981 = vmatpush2.msra.mxu0 0.0
        %1982 = vmatprep.subr.mxu0 0.0
        %1983 = vmatpush2.msra.mxu0 0.0
        %1984 = vmatprep.subr.mxu0 0.0
        %1985 = vmatpush2.msra.mxu0 0.0
        %1986 = vmatprep.subr.mxu0 0.0
        %1987 = vmatpush2.msra.mxu0 0.0
        %1988 = vmatprep.subr.mxu0 0.0
        %1989 = vmatpush2.msra.mxu0 0.0
        %1990 = vmatprep.subr.mxu0 0.0
        %1991 = vmatpush2.msra.mxu0 0.0
        %1992 = vmatprep.subr.mxu0 0.0
        %1993 = vmatpush2.msra.mxu0 0.0
        %1994 = vmatprep.subr.mxu0 0.0
        %1995 = vmatpush2.msra.mxu0 0.0
        %1996 = vmatprep.subr.mxu0 0.0
        %1997 = vmatpush2.msra.mxu0 0.0
        %1998 = vmatprep.subr.mxu0 0.0
        %1999 = vmatpush2.msra.mxu0 0.0
        %2000 = vmatprep.subr.mxu0 0.0
        %2001 = vmatpush2.msra.mxu0 0.0
        %2002 = vmatprep.subr.mxu0 0.0
        %2003 = vmatpush2.msra.mxu0 0.0
        %2004 = vmatprep.subr.mxu0 0.0
        %2005 = vmatpush2.msra.mxu0 0.0
        %2006 = vmatprep.mubr.f32.mxu0 0.0
        %2007 = vmatmul.mubr.f32.gmra.mxu0 %v1869
        %v2008 = vpop.f32.mrf.mxu0
        %v2009 = vadd.f32 0.0, %v2008
        %v2010 = vpop.f32.mrf.mxu0
        %2011 = vdwg.mxu0
        %2012 = vrot.lane.b32.xlu0 %v1846, 73
        %v2013 = vpop.permute.xlu0 %2012
        %2014 = vrot.lane.b32.xlu0 %v1847, 73
        %v2015 = vpop.permute.xlu0 %2014
        %2016 = vrot.lane.b32.xlu0 %v1848, 73
        %v2017 = vpop.permute.xlu0 %2016
        %vm2018 = vcmask 596992
        %v2019 = vsel %vm2018, %v2013, %v2015
        %v2020 = vsel %vm2018, %v2015, %v2017
        %v2025 = vsel %vm1867, %v1849, 0
        %2027 = vmatprep.subr.mxu0 0.0
        %2028 = vmatpush1.msra.mxu0 0.0
        %2029 = vmatprep.subr.mxu0 0.0
        %2030 = vmatpush1.msra.mxu0 0.0
        %2031 = vmatprep.subr.mxu0 0.0
        %2032 = vmatpush1.msra.mxu0 0.0
        %2033 = vmatprep.subr.mxu0 0.0
        %2034 = vmatpush1.msra.mxu0 0.0
        %2035 = vmatprep.subr.mxu0 0.0
        %2036 = vmatpush1.msra.mxu0 0.0
        %2037 = vmatprep.subr.mxu0 0.0
        %2038 = vmatpush1.msra.mxu0 0.0
        %2039 = vmatprep.subr.mxu0 0.0
        %2040 = vmatpush1.msra.mxu0 0.0
        %2041 = vmatprep.subr.mxu0 0.0
        %2042 = vmatpush1.msra.mxu0 0.0
        %2043 = vmatprep.subr.mxu0 0.0
        %2044 = vmatpush1.msra.mxu0 0.0
        %2045 = vmatprep.subr.mxu0 0.0
        %2046 = vmatpush1.msra.mxu0 0.0
        %2047 = vmatprep.subr.mxu0 0.0
        %2048 = vmatpush1.msra.mxu0 0.0
        %2049 = vmatprep.subr.mxu0 0.0
        %2050 = vmatpush1.msra.mxu0 0.0
        %2051 = vmatprep.subr.mxu0 0.0
        %2052 = vmatpush1.msra.mxu0 0.0
        %2053 = vmatprep.subr.mxu0 0.0
        %2054 = vmatpush1.msra.mxu0 0.0
        %2055 = vmatprep.subr.mxu0 0.0
        %2056 = vmatpush1.msra.mxu0 0.0
        %2057 = vmatprep.subr.mxu0 %v2020
        %2058 = vmatpush1.msra.mxu0 %v2019
        %2059 = vmatprep.subr.mxu0 0.0
        %2060 = vmatpush2.msra.mxu0 0.0
        %2061 = vmatprep.subr.mxu0 0.0
        %2062 = vmatpush2.msra.mxu0 0.0
        %2063 = vmatprep.subr.mxu0 0.0
        %2064 = vmatpush2.msra.mxu0 0.0
        %2065 = vmatprep.subr.mxu0 0.0
        %2066 = vmatpush2.msra.mxu0 0.0
        %2067 = vmatprep.subr.mxu0 0.0
        %2068 = vmatpush2.msra.mxu0 0.0
        %2069 = vmatprep.subr.mxu0 0.0
        %2070 = vmatpush2.msra.mxu0 0.0
        %2071 = vmatprep.subr.mxu0 0.0
        %2072 = vmatpush2.msra.mxu0 0.0
        %2073 = vmatprep.subr.mxu0 0.0
        %2074 = vmatpush2.msra.mxu0 0.0
        %2075 = vmatprep.subr.mxu0 0.0
        %2076 = vmatpush2.msra.mxu0 0.0
        %2077 = vmatprep.subr.mxu0 0.0
        %2078 = vmatpush2.msra.mxu0 0.0
        %2079 = vmatprep.subr.mxu0 0.0
        %2080 = vmatpush2.msra.mxu0 0.0
        %2081 = vmatprep.subr.mxu0 0.0
        %2082 = vmatpush2.msra.mxu0 0.0
        %2083 = vmatprep.subr.mxu0 0.0
        %2084 = vmatpush2.msra.mxu0 0.0
        %2085 = vmatprep.subr.mxu0 0.0
        %2086 = vmatpush2.msra.mxu0 0.0
        %2087 = vmatprep.subr.mxu0 0.0
        %2088 = vmatpush2.msra.mxu0 0.0
        %2089 = vmatprep.subr.mxu0 0.0
        %2090 = vmatpush2.msra.mxu0 0.0
        %2091 = vmatprep.mubr.f32.mxu0 0.0
        %2092 = vmatmul.mubr.f32.gmra.mxu0 %v2025
        %v2093 = vpop.f32.mrf.mxu0
        %v2094 = vadd.f32 %v1938, %v2093
        %v2095 = vpop.f32.mrf.mxu0
        %v2096 = vadd.f32 %v1940, %v2095
        %2097 = vdwg.mxu0
        %2098 = vmatprep.subr.mxu0 0.0
        %2099 = vmatpush1.msra.mxu0 0.0
        %2100 = vmatprep.subr.mxu0 0.0
        %2101 = vmatpush1.msra.mxu0 0.0
        %2102 = vmatprep.subr.mxu0 0.0
        %2103 = vmatpush1.msra.mxu0 0.0
        %2104 = vmatprep.subr.mxu0 0.0
        %2105 = vmatpush1.msra.mxu0 0.0
        %2106 = vmatprep.subr.mxu0 0.0
        %2107 = vmatpush1.msra.mxu0 0.0
        %2108 = vmatprep.subr.mxu0 0.0
        %2109 = vmatpush1.msra.mxu0 0.0
        %2110 = vmatprep.subr.mxu0 0.0
        %2111 = vmatpush1.msra.mxu0 0.0
        %2112 = vmatprep.subr.mxu0 0.0
        %2113 = vmatpush1.msra.mxu0 0.0
        %2114 = vmatprep.subr.mxu0 0.0
        %2115 = vmatpush1.msra.mxu0 0.0
        %2116 = vmatprep.subr.mxu0 0.0
        %2117 = vmatpush1.msra.mxu0 0.0
        %2118 = vmatprep.subr.mxu0 0.0
        %2119 = vmatpush1.msra.mxu0 0.0
        %2120 = vmatprep.subr.mxu0 0.0
        %2121 = vmatpush1.msra.mxu0 0.0
        %2122 = vmatprep.subr.mxu0 0.0
        %2123 = vmatpush1.msra.mxu0 0.0
        %2124 = vmatprep.subr.mxu0 0.0
        %2125 = vmatpush1.msra.mxu0 0.0
        %2126 = vmatprep.subr.mxu0 0.0
        %2127 = vmatpush1.msra.mxu0 0.0
        %2128 = vmatprep.subr.mxu0 0.0
        %2129 = vmatpush1.msra.mxu0 %v2017
        %2130 = vmatprep.subr.mxu0 0.0
        %2131 = vmatpush2.msra.mxu0 0.0
        %2132 = vmatprep.subr.mxu0 0.0
        %2133 = vmatpush2.msra.mxu0 0.0
        %2134 = vmatprep.subr.mxu0 0.0
        %2135 = vmatpush2.msra.mxu0 0.0
        %2136 = vmatprep.subr.mxu0 0.0
        %2137 = vmatpush2.msra.mxu0 0.0
        %2138 = vmatprep.subr.mxu0 0.0
        %2139 = vmatpush2.msra.mxu0 0.0
        %2140 = vmatprep.subr.mxu0 0.0
        %2141 = vmatpush2.msra.mxu0 0.0
        %2142 = vmatprep.subr.mxu0 0.0
        %2143 = vmatpush2.msra.mxu0 0.0
        %2144 = vmatprep.subr.mxu0 0.0
        %2145 = vmatpush2.msra.mxu0 0.0
        %2146 = vmatprep.subr.mxu0 0.0
        %2147 = vmatpush2.msra.mxu0 0.0
        %2148 = vmatprep.subr.mxu0 0.0
        %2149 = vmatpush2.msra.mxu0 0.0
        %2150 = vmatprep.subr.mxu0 0.0
        %2151 = vmatpush2.msra.mxu0 0.0
        %2152 = vmatprep.subr.mxu0 0.0
        %2153 = vmatpush2.msra.mxu0 0.0
        %2154 = vmatprep.subr.mxu0 0.0
        %2155 = vmatpush2.msra.mxu0 0.0
        %2156 = vmatprep.subr.mxu0 0.0
        %2157 = vmatpush2.msra.mxu0 0.0
        %2158 = vmatprep.subr.mxu0 0.0
        %2159 = vmatpush2.msra.mxu0 0.0
        %2160 = vmatprep.subr.mxu0 0.0
        %2161 = vmatpush2.msra.mxu0 0.0
        %2162 = vmatprep.mubr.f32.mxu0 0.0
        %2163 = vmatmul.mubr.f32.gmra.mxu0 %v2025
        %v2164 = vpop.f32.mrf.mxu0
        %v2165 = vadd.f32 %v2009, %v2164
        %v2166 = vpop.f32.mrf.mxu0
        %2167 = vdwg.mxu0
        %s2168 = scalar_lea.vmem %s4, 16
        %v2169 = vld [vmem:[%s2168] sm:$0xff]
        %2170 = vrot.lane.b32.xlu0 %v1846, 71
        %v2171 = vpop.permute.xlu0 %2170
        %2172 = vrot.lane.b32.xlu0 %v1847, 71
        %v2173 = vpop.permute.xlu0 %2172
        %2174 = vrot.lane.b32.xlu0 %v1848, 71
        %v2175 = vpop.permute.xlu0 %2174
        %vm2176 = vcmask 580608
        %v2177 = vsel %vm2176, %v2171, %v2173
        %v2178 = vsel %vm2176, %v2173, %v2175
        %v2183 = vsel %vm1867, %v2169, 0
        %2185 = vmatprep.subr.mxu0 0.0
        %2186 = vmatpush1.msra.mxu0 0.0
        %2187 = vmatprep.subr.mxu0 0.0
        %2188 = vmatpush1.msra.mxu0 0.0
        %2189 = vmatprep.subr.mxu0 0.0
        %2190 = vmatpush1.msra.mxu0 0.0
        %2191 = vmatprep.subr.mxu0 0.0
        %2192 = vmatpush1.msra.mxu0 0.0
        %2193 = vmatprep.subr.mxu0 0.0
        %2194 = vmatpush1.msra.mxu0 0.0
        %2195 = vmatprep.subr.mxu0 0.0
        %2196 = vmatpush1.msra.mxu0 0.0
        %2197 = vmatprep.subr.mxu0 0.0
        %2198 = vmatpush1.msra.mxu0 0.0
        %2199 = vmatprep.subr.mxu0 0.0
        %2200 = vmatpush1.msra.mxu0 0.0
        %2201 = vmatprep.subr.mxu0 0.0
        %2202 = vmatpush1.msra.mxu0 0.0
        %2203 = vmatprep.subr.mxu0 0.0
        %2204 = vmatpush1.msra.mxu0 0.0
        %2205 = vmatprep.subr.mxu0 0.0
        %2206 = vmatpush1.msra.mxu0 0.0
        %2207 = vmatprep.subr.mxu0 0.0
        %2208 = vmatpush1.msra.mxu0 0.0
        %2209 = vmatprep.subr.mxu0 0.0
        %2210 = vmatpush1.msra.mxu0 0.0
        %2211 = vmatprep.subr.mxu0 0.0
        %2212 = vmatpush1.msra.mxu0 0.0
        %2213 = vmatprep.subr.mxu0 0.0
        %2214 = vmatpush1.msra.mxu0 0.0
        %2215 = vmatprep.subr.mxu0 %v2178
        %2216 = vmatpush1.msra.mxu0 %v2177
        %2217 = vmatprep.subr.mxu0 0.0
        %2218 = vmatpush2.msra.mxu0 0.0
        %2219 = vmatprep.subr.mxu0 0.0
        %2220 = vmatpush2.msra.mxu0 0.0
        %2221 = vmatprep.subr.mxu0 0.0
        %2222 = vmatpush2.msra.mxu0 0.0
        %2223 = vmatprep.subr.mxu0 0.0
        %2224 = vmatpush2.msra.mxu0 0.0
        %2225 = vmatprep.subr.mxu0 0.0
        %2226 = vmatpush2.msra.mxu0 0.0
        %2227 = vmatprep.subr.mxu0 0.0
        %2228 = vmatpush2.msra.mxu0 0.0
        %2229 = vmatprep.subr.mxu0 0.0
        %2230 = vmatpush2.msra.mxu0 0.0
        %2231 = vmatprep.subr.mxu0 0.0
        %2232 = vmatpush2.msra.mxu0 0.0
        %2233 = vmatprep.subr.mxu0 0.0
        %2234 = vmatpush2.msra.mxu0 0.0
        %2235 = vmatprep.subr.mxu0 0.0
        %2236 = vmatpush2.msra.mxu0 0.0
        %2237 = vmatprep.subr.mxu0 0.0
        %2238 = vmatpush2.msra.mxu0 0.0
        %2239 = vmatprep.subr.mxu0 0.0
        %2240 = vmatpush2.msra.mxu0 0.0
        %2241 = vmatprep.subr.mxu0 0.0
        %2242 = vmatpush2.msra.mxu0 0.0
        %2243 = vmatprep.subr.mxu0 0.0
        %2244 = vmatpush2.msra.mxu0 0.0
        %2245 = vmatprep.subr.mxu0 0.0
        %2246 = vmatpush2.msra.mxu0 0.0
        %2247 = vmatprep.subr.mxu0 0.0
        %2248 = vmatpush2.msra.mxu0 0.0
        %2249 = vmatprep.mubr.f32.mxu0 0.0
        %2250 = vmatmul.mubr.f32.gmra.mxu0 %v2183
        %v2251 = vpop.f32.mrf.mxu0
        %v2252 = vadd.f32 0.0, %v2251
        %v2253 = vpop.f32.mrf.mxu0
        %v2254 = vadd.f32 0.0, %v2253
        %2255 = vdwg.mxu0
        %2256 = vmatprep.subr.mxu0 0.0
        %2257 = vmatpush1.msra.mxu0 0.0
        %2258 = vmatprep.subr.mxu0 0.0
        %2259 = vmatpush1.msra.mxu0 0.0
        %2260 = vmatprep.subr.mxu0 0.0
        %2261 = vmatpush1.msra.mxu0 0.0
        %2262 = vmatprep.subr.mxu0 0.0
        %2263 = vmatpush1.msra.mxu0 0.0
        %2264 = vmatprep.subr.mxu0 0.0
        %2265 = vmatpush1.msra.mxu0 0.0
        %2266 = vmatprep.subr.mxu0 0.0
        %2267 = vmatpush1.msra.mxu0 0.0
        %2268 = vmatprep.subr.mxu0 0.0
        %2269 = vmatpush1.msra.mxu0 0.0
        %2270 = vmatprep.subr.mxu0 0.0
        %2271 = vmatpush1.msra.mxu0 0.0
        %2272 = vmatprep.subr.mxu0 0.0
        %2273 = vmatpush1.msra.mxu0 0.0
        %2274 = vmatprep.subr.mxu0 0.0
        %2275 = vmatpush1.msra.mxu0 0.0
        %2276 = vmatprep.subr.mxu0 0.0
        %2277 = vmatpush1.msra.mxu0 0.0
        %2278 = vmatprep.subr.mxu0 0.0
        %2279 = vmatpush1.msra.mxu0 0.0
        %2280 = vmatprep.subr.mxu0 0.0
        %2281 = vmatpush1.msra.mxu0 0.0
        %2282 = vmatprep.subr.mxu0 0.0
        %2283 = vmatpush1.msra.mxu0 0.0
        %2284 = vmatprep.subr.mxu0 0.0
        %2285 = vmatpush1.msra.mxu0 0.0
        %2286 = vmatprep.subr.mxu0 0.0
        %2287 = vmatpush1.msra.mxu0 %v2175
        %2288 = vmatprep.subr.mxu0 0.0
        %2289 = vmatpush2.msra.mxu0 0.0
        %2290 = vmatprep.subr.mxu0 0.0
        %2291 = vmatpush2.msra.mxu0 0.0
        %2292 = vmatprep.subr.mxu0 0.0
        %2293 = vmatpush2.msra.mxu0 0.0
        %2294 = vmatprep.subr.mxu0 0.0
        %2295 = vmatpush2.msra.mxu0 0.0
        %2296 = vmatprep.subr.mxu0 0.0
        %2297 = vmatpush2.msra.mxu0 0.0
        %2298 = vmatprep.subr.mxu0 0.0
        %2299 = vmatpush2.msra.mxu0 0.0
        %2300 = vmatprep.subr.mxu0 0.0
        %2301 = vmatpush2.msra.mxu0 0.0
        %2302 = vmatprep.subr.mxu0 0.0
        %2303 = vmatpush2.msra.mxu0 0.0
        %2304 = vmatprep.subr.mxu0 0.0
        %2305 = vmatpush2.msra.mxu0 0.0
        %2306 = vmatprep.subr.mxu0 0.0
        %2307 = vmatpush2.msra.mxu0 0.0
        %2308 = vmatprep.subr.mxu0 0.0
        %2309 = vmatpush2.msra.mxu0 0.0
        %2310 = vmatprep.subr.mxu0 0.0
        %2311 = vmatpush2.msra.mxu0 0.0
        %2312 = vmatprep.subr.mxu0 0.0
        %2313 = vmatpush2.msra.mxu0 0.0
        %2314 = vmatprep.subr.mxu0 0.0
        %2315 = vmatpush2.msra.mxu0 0.0
        %2316 = vmatprep.subr.mxu0 0.0
        %2317 = vmatpush2.msra.mxu0 0.0
        %2318 = vmatprep.subr.mxu0 0.0
        %2319 = vmatpush2.msra.mxu0 0.0
        %2320 = vmatprep.mubr.f32.mxu0 0.0
        %2321 = vmatmul.mubr.f32.gmra.mxu0 %v2183
        %v2322 = vpop.f32.mrf.mxu0
        %v2323 = vadd.f32 0.0, %v2322
        %v2324 = vpop.f32.mrf.mxu0
        %2325 = vdwg.mxu0
        %v2326 = vadd.f32 %v2094, %v2252
        %v2327 = vadd.f32 %v2096, %v2254
        %v2328 = vadd.f32 %v2165, %v2323
        %s2329 = scalar_lea.vmem %s4, 24
        %v2330 = vld [vmem:[%s2329] sm:$0xff]
        %2331 = vrot.lane.b32.xlu0 %v1846, 37
        %v2332 = vpop.permute.xlu0 %2331
        %2333 = vrot.lane.b32.xlu0 %v1847, 37
        %v2334 = vpop.permute.xlu0 %2333
        %2335 = vrot.lane.b32.xlu0 %v1848, 37
        %v2336 = vpop.permute.xlu0 %2335
        %vm2337 = vcmask 302080
        %v2338 = vsel %vm2337, %v2332, %v2334
        %v2339 = vsel %vm2337, %v2334, %v2336
        %v2344 = vsel %vm1867, %v2330, 0
        %2346 = vmatprep.subr.mxu0 0.0
        %2347 = vmatpush1.msra.mxu0 0.0
        %2348 = vmatprep.subr.mxu0 0.0
        %2349 = vmatpush1.msra.mxu0 0.0
        %2350 = vmatprep.subr.mxu0 0.0
        %2351 = vmatpush1.msra.mxu0 0.0
        %2352 = vmatprep.subr.mxu0 0.0
        %2353 = vmatpush1.msra.mxu0 0.0
        %2354 = vmatprep.subr.mxu0 0.0
        %2355 = vmatpush1.msra.mxu0 0.0
        %2356 = vmatprep.subr.mxu0 0.0
        %2357 = vmatpush1.msra.mxu0 0.0
        %2358 = vmatprep.subr.mxu0 0.0
        %2359 = vmatpush1.msra.mxu0 0.0
        %2360 = vmatprep.subr.mxu0 0.0
        %2361 = vmatpush1.msra.mxu0 0.0
        %2362 = vmatprep.subr.mxu0 0.0
        %2363 = vmatpush1.msra.mxu0 0.0
        %2364 = vmatprep.subr.mxu0 0.0
        %2365 = vmatpush1.msra.mxu0 0.0
        %2366 = vmatprep.subr.mxu0 0.0
        %2367 = vmatpush1.msra.mxu0 0.0
        %2368 = vmatprep.subr.mxu0 0.0
        %2369 = vmatpush1.msra.mxu0 0.0
        %2370 = vmatprep.subr.mxu0 0.0
        %2371 = vmatpush1.msra.mxu0 0.0
        %2372 = vmatprep.subr.mxu0 0.0
        %2373 = vmatpush1.msra.mxu0 0.0
        %2374 = vmatprep.subr.mxu0 0.0
        %2375 = vmatpush1.msra.mxu0 0.0
        %2376 = vmatprep.subr.mxu0 %v2339
        %2377 = vmatpush1.msra.mxu0 %v2338
        %2378 = vmatprep.subr.mxu0 0.0
        %2379 = vmatpush2.msra.mxu0 0.0
        %2380 = vmatprep.subr.mxu0 0.0
        %2381 = vmatpush2.msra.mxu0 0.0
        %2382 = vmatprep.subr.mxu0 0.0
        %2383 = vmatpush2.msra.mxu0 0.0
        %2384 = vmatprep.subr.mxu0 0.0
        %2385 = vmatpush2.msra.mxu0 0.0
        %2386 = vmatprep.subr.mxu0 0.0
        %2387 = vmatpush2.msra.mxu0 0.0
        %2388 = vmatprep.subr.mxu0 0.0
        %2389 = vmatpush2.msra.mxu0 0.0
        %2390 = vmatprep.subr.mxu0 0.0
        %2391 = vmatpush2.msra.mxu0 0.0
        %2392 = vmatprep.subr.mxu0 0.0
        %2393 = vmatpush2.msra.mxu0 0.0
        %2394 = vmatprep.subr.mxu0 0.0
        %2395 = vmatpush2.msra.mxu0 0.0
        %2396 = vmatprep.subr.mxu0 0.0
        %2397 = vmatpush2.msra.mxu0 0.0
        %2398 = vmatprep.subr.mxu0 0.0
        %2399 = vmatpush2.msra.mxu0 0.0
        %2400 = vmatprep.subr.mxu0 0.0
        %2401 = vmatpush2.msra.mxu0 0.0
        %2402 = vmatprep.subr.mxu0 0.0
        %2403 = vmatpush2.msra.mxu0 0.0
        %2404 = vmatprep.subr.mxu0 0.0
        %2405 = vmatpush2.msra.mxu0 0.0
        %2406 = vmatprep.subr.mxu0 0.0
        %2407 = vmatpush2.msra.mxu0 0.0
        %2408 = vmatprep.subr.mxu0 0.0
        %2409 = vmatpush2.msra.mxu0 0.0
        %2410 = vmatprep.mubr.f32.mxu0 0.0
        %2411 = vmatmul.mubr.f32.gmra.mxu0 %v2344
        %v2412 = vpop.f32.mrf.mxu0
        %v2413 = vadd.f32 0.0, %v2412
        %v2414 = vpop.f32.mrf.mxu0
        %v2415 = vadd.f32 0.0, %v2414
        %2416 = vdwg.mxu0
        %2417 = vmatprep.subr.mxu0 0.0
        %2418 = vmatpush1.msra.mxu0 0.0
        %2419 = vmatprep.subr.mxu0 0.0
        %2420 = vmatpush1.msra.mxu0 0.0
        %2421 = vmatprep.subr.mxu0 0.0
        %2422 = vmatpush1.msra.mxu0 0.0
        %2423 = vmatprep.subr.mxu0 0.0
        %2424 = vmatpush1.msra.mxu0 0.0
        %2425 = vmatprep.subr.mxu0 0.0
        %2426 = vmatpush1.msra.mxu0 0.0
        %2427 = vmatprep.subr.mxu0 0.0
        %2428 = vmatpush1.msra.mxu0 0.0
        %2429 = vmatprep.subr.mxu0 0.0
        %2430 = vmatpush1.msra.mxu0 0.0
        %2431 = vmatprep.subr.mxu0 0.0
        %2432 = vmatpush1.msra.mxu0 0.0
        %2433 = vmatprep.subr.mxu0 0.0
        %2434 = vmatpush1.msra.mxu0 0.0
        %2435 = vmatprep.subr.mxu0 0.0
        %2436 = vmatpush1.msra.mxu0 0.0
        %2437 = vmatprep.subr.mxu0 0.0
        %2438 = vmatpush1.msra.mxu0 0.0
        %2439 = vmatprep.subr.mxu0 0.0
        %2440 = vmatpush1.msra.mxu0 0.0
        %2441 = vmatprep.subr.mxu0 0.0
        %2442 = vmatpush1.msra.mxu0 0.0
        %2443 = vmatprep.subr.mxu0 0.0
        %2444 = vmatpush1.msra.mxu0 0.0
        %2445 = vmatprep.subr.mxu0 0.0
        %2446 = vmatpush1.msra.mxu0 0.0
        %2447 = vmatprep.subr.mxu0 0.0
        %2448 = vmatpush1.msra.mxu0 %v2336
        %2449 = vmatprep.subr.mxu0 0.0
        %2450 = vmatpush2.msra.mxu0 0.0
        %2451 = vmatprep.subr.mxu0 0.0
        %2452 = vmatpush2.msra.mxu0 0.0
        %2453 = vmatprep.subr.mxu0 0.0
        %2454 = vmatpush2.msra.mxu0 0.0
        %2455 = vmatprep.subr.mxu0 0.0
        %2456 = vmatpush2.msra.mxu0 0.0
        %2457 = vmatprep.subr.mxu0 0.0
        %2458 = vmatpush2.msra.mxu0 0.0
        %2459 = vmatprep.subr.mxu0 0.0
        %2460 = vmatpush2.msra.mxu0 0.0
        %2461 = vmatprep.subr.mxu0 0.0
        %2462 = vmatpush2.msra.mxu0 0.0
        %2463 = vmatprep.subr.mxu0 0.0
        %2464 = vmatpush2.msra.mxu0 0.0
        %2465 = vmatprep.subr.mxu0 0.0
        %2466 = vmatpush2.msra.mxu0 0.0
        %2467 = vmatprep.subr.mxu0 0.0
        %2468 = vmatpush2.msra.mxu0 0.0
        %2469 = vmatprep.subr.mxu0 0.0
        %2470 = vmatpush2.msra.mxu0 0.0
        %2471 = vmatprep.subr.mxu0 0.0
        %2472 = vmatpush2.msra.mxu0 0.0
        %2473 = vmatprep.subr.mxu0 0.0
        %2474 = vmatpush2.msra.mxu0 0.0
        %2475 = vmatprep.subr.mxu0 0.0
        %2476 = vmatpush2.msra.mxu0 0.0
        %2477 = vmatprep.subr.mxu0 0.0
        %2478 = vmatpush2.msra.mxu0 0.0
        %2479 = vmatprep.subr.mxu0 0.0
        %2480 = vmatpush2.msra.mxu0 0.0
        %2481 = vmatprep.mubr.f32.mxu0 0.0
        %2482 = vmatmul.mubr.f32.gmra.mxu0 %v2344
        %v2483 = vpop.f32.mrf.mxu0
        %v2484 = vadd.f32 0.0, %v2483
        %v2485 = vpop.f32.mrf.mxu0
        %2486 = vdwg.mxu0
        %v2487 = vadd.f32 %v2326, %v2413
        %v2488 = vadd.f32 %v2327, %v2415
        %v2489 = vadd.f32 %v2328, %v2484
        %s2490 = scalar_lea.vmem %s4, 32
        %v2491 = vld [vmem:[%s2490] sm:$0xff]
        %2492 = vrot.lane.b32.xlu0 %v1846, 36
        %v2493 = vpop.permute.xlu0 %2492
        %2494 = vrot.lane.b32.xlu0 %v1847, 36
        %v2495 = vpop.permute.xlu0 %2494
        %2496 = vrot.lane.b32.xlu0 %v1848, 36
        %v2497 = vpop.permute.xlu0 %2496
        %vm2498 = vcmask 293888
        %v2499 = vsel %vm2498, %v2493, %v2495
        %v2500 = vsel %vm2498, %v2495, %v2497
        %v2505 = vsel %vm1867, %v2491, 0
        %2507 = vmatprep.subr.mxu0 0.0
        %2508 = vmatpush1.msra.mxu0 0.0
        %2509 = vmatprep.subr.mxu0 0.0
        %2510 = vmatpush1.msra.mxu0 0.0
        %2511 = vmatprep.subr.mxu0 0.0
        %2512 = vmatpush1.msra.mxu0 0.0
        %2513 = vmatprep.subr.mxu0 0.0
        %2514 = vmatpush1.msra.mxu0 0.0
        %2515 = vmatprep.subr.mxu0 0.0
        %2516 = vmatpush1.msra.mxu0 0.0
        %2517 = vmatprep.subr.mxu0 0.0
        %2518 = vmatpush1.msra.mxu0 0.0
        %2519 = vmatprep.subr.mxu0 0.0
        %2520 = vmatpush1.msra.mxu0 0.0
        %2521 = vmatprep.subr.mxu0 0.0
        %2522 = vmatpush1.msra.mxu0 0.0
        %2523 = vmatprep.subr.mxu0 0.0
        %2524 = vmatpush1.msra.mxu0 0.0
        %2525 = vmatprep.subr.mxu0 0.0
        %2526 = vmatpush1.msra.mxu0 0.0
        %2527 = vmatprep.subr.mxu0 0.0
        %2528 = vmatpush1.msra.mxu0 0.0
        %2529 = vmatprep.subr.mxu0 0.0
        %2530 = vmatpush1.msra.mxu0 0.0
        %2531 = vmatprep.subr.mxu0 0.0
        %2532 = vmatpush1.msra.mxu0 0.0
        %2533 = vmatprep.subr.mxu0 0.0
        %2534 = vmatpush1.msra.mxu0 0.0
        %2535 = vmatprep.subr.mxu0 0.0
        %2536 = vmatpush1.msra.mxu0 0.0
        %2537 = vmatprep.subr.mxu0 %v2500
        %2538 = vmatpush1.msra.mxu0 %v2499
        %2539 = vmatprep.subr.mxu0 0.0
        %2540 = vmatpush2.msra.mxu0 0.0
        %2541 = vmatprep.subr.mxu0 0.0
        %2542 = vmatpush2.msra.mxu0 0.0
        %2543 = vmatprep.subr.mxu0 0.0
        %2544 = vmatpush2.msra.mxu0 0.0
        %2545 = vmatprep.subr.mxu0 0.0
        %2546 = vmatpush2.msra.mxu0 0.0
        %2547 = vmatprep.subr.mxu0 0.0
        %2548 = vmatpush2.msra.mxu0 0.0
        %2549 = vmatprep.subr.mxu0 0.0
        %2550 = vmatpush2.msra.mxu0 0.0
        %2551 = vmatprep.subr.mxu0 0.0
        %2552 = vmatpush2.msra.mxu0 0.0
        %2553 = vmatprep.subr.mxu0 0.0
        %2554 = vmatpush2.msra.mxu0 0.0
        %2555 = vmatprep.subr.mxu0 0.0
        %2556 = vmatpush2.msra.mxu0 0.0
        %2557 = vmatprep.subr.mxu0 0.0
        %2558 = vmatpush2.msra.mxu0 0.0
        %2559 = vmatprep.subr.mxu0 0.0
        %2560 = vmatpush2.msra.mxu0 0.0
        %2561 = vmatprep.subr.mxu0 0.0
        %2562 = vmatpush2.msra.mxu0 0.0
        %2563 = vmatprep.subr.mxu0 0.0
        %2564 = vmatpush2.msra.mxu0 0.0
        %2565 = vmatprep.subr.mxu0 0.0
        %2566 = vmatpush2.msra.mxu0 0.0
        %2567 = vmatprep.subr.mxu0 0.0
        %2568 = vmatpush2.msra.mxu0 0.0
        %2569 = vmatprep.subr.mxu0 0.0
        %2570 = vmatpush2.msra.mxu0 0.0
        %2571 = vmatprep.mubr.f32.mxu0 0.0
        %2572 = vmatmul.mubr.f32.gmra.mxu0 %v2505
        %v2573 = vpop.f32.mrf.mxu0
        %v2574 = vadd.f32 0.0, %v2573
        %v2575 = vpop.f32.mrf.mxu0
        %v2576 = vadd.f32 0.0, %v2575
        %2577 = vdwg.mxu0
        %2578 = vmatprep.subr.mxu0 0.0
        %2579 = vmatpush1.msra.mxu0 0.0
        %2580 = vmatprep.subr.mxu0 0.0
        %2581 = vmatpush1.msra.mxu0 0.0
        %2582 = vmatprep.subr.mxu0 0.0
        %2583 = vmatpush1.msra.mxu0 0.0
        %2584 = vmatprep.subr.mxu0 0.0
        %2585 = vmatpush1.msra.mxu0 0.0
        %2586 = vmatprep.subr.mxu0 0.0
        %2587 = vmatpush1.msra.mxu0 0.0
        %2588 = vmatprep.subr.mxu0 0.0
        %2589 = vmatpush1.msra.mxu0 0.0
        %2590 = vmatprep.subr.mxu0 0.0
        %2591 = vmatpush1.msra.mxu0 0.0
        %2592 = vmatprep.subr.mxu0 0.0
        %2593 = vmatpush1.msra.mxu0 0.0
        %2594 = vmatprep.subr.mxu0 0.0
        %2595 = vmatpush1.msra.mxu0 0.0
        %2596 = vmatprep.subr.mxu0 0.0
        %2597 = vmatpush1.msra.mxu0 0.0
        %2598 = vmatprep.subr.mxu0 0.0
        %2599 = vmatpush1.msra.mxu0 0.0
        %2600 = vmatprep.subr.mxu0 0.0
        %2601 = vmatpush1.msra.mxu0 0.0
        %2602 = vmatprep.subr.mxu0 0.0
        %2603 = vmatpush1.msra.mxu0 0.0
        %2604 = vmatprep.subr.mxu0 0.0
        %2605 = vmatpush1.msra.mxu0 0.0
        %2606 = vmatprep.subr.mxu0 0.0
        %2607 = vmatpush1.msra.mxu0 0.0
        %2608 = vmatprep.subr.mxu0 0.0
        %2609 = vmatpush1.msra.mxu0 %v2497
        %2610 = vmatprep.subr.mxu0 0.0
        %2611 = vmatpush2.msra.mxu0 0.0
        %2612 = vmatprep.subr.mxu0 0.0
        %2613 = vmatpush2.msra.mxu0 0.0
        %2614 = vmatprep.subr.mxu0 0.0
        %2615 = vmatpush2.msra.mxu0 0.0
        %2616 = vmatprep.subr.mxu0 0.0
        %2617 = vmatpush2.msra.mxu0 0.0
        %2618 = vmatprep.subr.mxu0 0.0
        %2619 = vmatpush2.msra.mxu0 0.0
        %2620 = vmatprep.subr.mxu0 0.0
        %2621 = vmatpush2.msra.mxu0 0.0
        %2622 = vmatprep.subr.mxu0 0.0
        %2623 = vmatpush2.msra.mxu0 0.0
        %2624 = vmatprep.subr.mxu0 0.0
        %2625 = vmatpush2.msra.mxu0 0.0
        %2626 = vmatprep.subr.mxu0 0.0
        %2627 = vmatpush2.msra.mxu0 0.0
        %2628 = vmatprep.subr.mxu0 0.0
        %2629 = vmatpush2.msra.mxu0 0.0
        %2630 = vmatprep.subr.mxu0 0.0
        %2631 = vmatpush2.msra.mxu0 0.0
        %2632 = vmatprep.subr.mxu0 0.0
        %2633 = vmatpush2.msra.mxu0 0.0
        %2634 = vmatprep.subr.mxu0 0.0
        %2635 = vmatpush2.msra.mxu0 0.0
        %2636 = vmatprep.subr.mxu0 0.0
        %2637 = vmatpush2.msra.mxu0 0.0
        %2638 = vmatprep.subr.mxu0 0.0
        %2639 = vmatpush2.msra.mxu0 0.0
        %2640 = vmatprep.subr.mxu0 0.0
        %2641 = vmatpush2.msra.mxu0 0.0
        %2642 = vmatprep.mubr.f32.mxu0 0.0
        %2643 = vmatmul.mubr.f32.gmra.mxu0 %v2505
        %v2644 = vpop.f32.mrf.mxu0
        %v2645 = vadd.f32 0.0, %v2644
        %v2646 = vpop.f32.mrf.mxu0
        %2647 = vdwg.mxu0
        %v2648 = vadd.f32 %v2487, %v2574
        %v2649 = vadd.f32 %v2488, %v2576
        %v2650 = vadd.f32 %v2489, %v2645
        %s2651 = scalar_lea.vmem %s4, 40
        %v2652 = vld [vmem:[%s2651] sm:$0xff]
        %2653 = vrot.lane.b32.xlu0 %v1846, 35
        %v2654 = vpop.permute.xlu0 %2653
        %2655 = vrot.lane.b32.xlu0 %v1847, 35
        %v2656 = vpop.permute.xlu0 %2655
        %2657 = vrot.lane.b32.xlu0 %v1848, 35
        %v2658 = vpop.permute.xlu0 %2657
        %vm2659 = vcmask 285696
        %v2660 = vsel %vm2659, %v2654, %v2656
        %v2661 = vsel %vm2659, %v2656, %v2658
        %v2666 = vsel %vm1867, %v2652, 0
        %2668 = vmatprep.subr.mxu0 0.0
        %2669 = vmatpush1.msra.mxu0 0.0
        %2670 = vmatprep.subr.mxu0 0.0
        %2671 = vmatpush1.msra.mxu0 0.0
        %2672 = vmatprep.subr.mxu0 0.0
        %2673 = vmatpush1.msra.mxu0 0.0
        %2674 = vmatprep.subr.mxu0 0.0
        %2675 = vmatpush1.msra.mxu0 0.0
        %2676 = vmatprep.subr.mxu0 0.0
        %2677 = vmatpush1.msra.mxu0 0.0
        %2678 = vmatprep.subr.mxu0 0.0
        %2679 = vmatpush1.msra.mxu0 0.0
        %2680 = vmatprep.subr.mxu0 0.0
        %2681 = vmatpush1.msra.mxu0 0.0
        %2682 = vmatprep.subr.mxu0 0.0
        %2683 = vmatpush1.msra.mxu0 0.0
        %2684 = vmatprep.subr.mxu0 0.0
        %2685 = vmatpush1.msra.mxu0 0.0
        %2686 = vmatprep.subr.mxu0 0.0
        %2687 = vmatpush1.msra.mxu0 0.0
        %2688 = vmatprep.subr.mxu0 0.0
        %2689 = vmatpush1.msra.mxu0 0.0
        %2690 = vmatprep.subr.mxu0 0.0
        %2691 = vmatpush1.msra.mxu0 0.0
        %2692 = vmatprep.subr.mxu0 0.0
        %2693 = vmatpush1.msra.mxu0 0.0
        %2694 = vmatprep.subr.mxu0 0.0
        %2695 = vmatpush1.msra.mxu0 0.0
        %2696 = vmatprep.subr.mxu0 0.0
        %2697 = vmatpush1.msra.mxu0 0.0
        %2698 = vmatprep.subr.mxu0 %v2661
        %2699 = vmatpush1.msra.mxu0 %v2660
        %2700 = vmatprep.subr.mxu0 0.0
        %2701 = vmatpush2.msra.mxu0 0.0
        %2702 = vmatprep.subr.mxu0 0.0
        %2703 = vmatpush2.msra.mxu0 0.0
        %2704 = vmatprep.subr.mxu0 0.0
        %2705 = vmatpush2.msra.mxu0 0.0
        %2706 = vmatprep.subr.mxu0 0.0
        %2707 = vmatpush2.msra.mxu0 0.0
        %2708 = vmatprep.subr.mxu0 0.0
        %2709 = vmatpush2.msra.mxu0 0.0
        %2710 = vmatprep.subr.mxu0 0.0
        %2711 = vmatpush2.msra.mxu0 0.0
        %2712 = vmatprep.subr.mxu0 0.0
        %2713 = vmatpush2.msra.mxu0 0.0
        %2714 = vmatprep.subr.mxu0 0.0
        %2715 = vmatpush2.msra.mxu0 0.0
        %2716 = vmatprep.subr.mxu0 0.0
        %2717 = vmatpush2.msra.mxu0 0.0
        %2718 = vmatprep.subr.mxu0 0.0
        %2719 = vmatpush2.msra.mxu0 0.0
        %2720 = vmatprep.subr.mxu0 0.0
        %2721 = vmatpush2.msra.mxu0 0.0
        %2722 = vmatprep.subr.mxu0 0.0
        %2723 = vmatpush2.msra.mxu0 0.0
        %2724 = vmatprep.subr.mxu0 0.0
        %2725 = vmatpush2.msra.mxu0 0.0
        %2726 = vmatprep.subr.mxu0 0.0
        %2727 = vmatpush2.msra.mxu0 0.0
        %2728 = vmatprep.subr.mxu0 0.0
        %2729 = vmatpush2.msra.mxu0 0.0
        %2730 = vmatprep.subr.mxu0 0.0
        %2731 = vmatpush2.msra.mxu0 0.0
        %2732 = vmatprep.mubr.f32.mxu0 0.0
        %2733 = vmatmul.mubr.f32.gmra.mxu0 %v2666
        %v2734 = vpop.f32.mrf.mxu0
        %v2735 = vadd.f32 0.0, %v2734
        %v2736 = vpop.f32.mrf.mxu0
        %v2737 = vadd.f32 0.0, %v2736
        %2738 = vdwg.mxu0
        %2739 = vmatprep.subr.mxu0 0.0
        %2740 = vmatpush1.msra.mxu0 0.0
        %2741 = vmatprep.subr.mxu0 0.0
        %2742 = vmatpush1.msra.mxu0 0.0
        %2743 = vmatprep.subr.mxu0 0.0
        %2744 = vmatpush1.msra.mxu0 0.0
        %2745 = vmatprep.subr.mxu0 0.0
        %2746 = vmatpush1.msra.mxu0 0.0
        %2747 = vmatprep.subr.mxu0 0.0
        %2748 = vmatpush1.msra.mxu0 0.0
        %2749 = vmatprep.subr.mxu0 0.0
        %2750 = vmatpush1.msra.mxu0 0.0
        %2751 = vmatprep.subr.mxu0 0.0
        %2752 = vmatpush1.msra.mxu0 0.0
        %2753 = vmatprep.subr.mxu0 0.0
        %2754 = vmatpush1.msra.mxu0 0.0
        %2755 = vmatprep.subr.mxu0 0.0
        %2756 = vmatpush1.msra.mxu0 0.0
        %2757 = vmatprep.subr.mxu0 0.0
        %2758 = vmatpush1.msra.mxu0 0.0
        %2759 = vmatprep.subr.mxu0 0.0
        %2760 = vmatpush1.msra.mxu0 0.0
        %2761 = vmatprep.subr.mxu0 0.0
        %2762 = vmatpush1.msra.mxu0 0.0
        %2763 = vmatprep.subr.mxu0 0.0
        %2764 = vmatpush1.msra.mxu0 0.0
        %2765 = vmatprep.subr.mxu0 0.0
        %2766 = vmatpush1.msra.mxu0 0.0
        %2767 = vmatprep.subr.mxu0 0.0
        %2768 = vmatpush1.msra.mxu0 0.0
        %2769 = vmatprep.subr.mxu0 0.0
        %2770 = vmatpush1.msra.mxu0 %v2658
        %2771 = vmatprep.subr.mxu0 0.0
        %2772 = vmatpush2.msra.mxu0 0.0
        %2773 = vmatprep.subr.mxu0 0.0
        %2774 = vmatpush2.msra.mxu0 0.0
        %2775 = vmatprep.subr.mxu0 0.0
        %2776 = vmatpush2.msra.mxu0 0.0
        %2777 = vmatprep.subr.mxu0 0.0
        %2778 = vmatpush2.msra.mxu0 0.0
        %2779 = vmatprep.subr.mxu0 0.0
        %2780 = vmatpush2.msra.mxu0 0.0
        %2781 = vmatprep.subr.mxu0 0.0
        %2782 = vmatpush2.msra.mxu0 0.0
        %2783 = vmatprep.subr.mxu0 0.0
        %2784 = vmatpush2.msra.mxu0 0.0
        %2785 = vmatprep.subr.mxu0 0.0
        %2786 = vmatpush2.msra.mxu0 0.0
        %2787 = vmatprep.subr.mxu0 0.0
        %2788 = vmatpush2.msra.mxu0 0.0
        %2789 = vmatprep.subr.mxu0 0.0
        %2790 = vmatpush2.msra.mxu0 0.0
        %2791 = vmatprep.subr.mxu0 0.0
        %2792 = vmatpush2.msra.mxu0 0.0
        %2793 = vmatprep.subr.mxu0 0.0
        %2794 = vmatpush2.msra.mxu0 0.0
        %2795 = vmatprep.subr.mxu0 0.0
        %2796 = vmatpush2.msra.mxu0 0.0
        %2797 = vmatprep.subr.mxu0 0.0
        %2798 = vmatpush2.msra.mxu0 0.0
        %2799 = vmatprep.subr.mxu0 0.0
        %2800 = vmatpush2.msra.mxu0 0.0
        %2801 = vmatprep.subr.mxu0 0.0
        %2802 = vmatpush2.msra.mxu0 0.0
        %2803 = vmatprep.mubr.f32.mxu0 0.0
        %2804 = vmatmul.mubr.f32.gmra.mxu0 %v2666
        %v2805 = vpop.f32.mrf.mxu0
        %v2806 = vadd.f32 0.0, %v2805
        %v2807 = vpop.f32.mrf.mxu0
        %2808 = vdwg.mxu0
        %v2809 = vadd.f32 %v2648, %v2735
        %v2810 = vadd.f32 %v2649, %v2737
        %v2811 = vadd.f32 %v2650, %v2806
        %v2812 = vld [vmem:[#allocation2] sm:$0xff]
        %v2813 = vld [vmem:[#allocation2 + $0x8] sm:$0xff]
        %v2814 = vld [vmem:[#allocation2 + $0x10] sm:$0xff]
        %v2815 = vld [vmem:[#allocation2 + $0x18] sm:$0xff]
        %s2816 = scalar_lea.vmem %s4, 48
        %v2817 = vld [vmem:[%s2816] sm:$0xff]
        %2822 = vrot.lane.b32.xlu0 %v2812, 1
        %v2823 = vpop.permute.xlu0 %2822
        %2824 = vrot.lane.b32.xlu0 %v2813, 1
        %v2825 = vpop.permute.xlu0 %2824
        %2826 = vrot.lane.b32.xlu0 %v2814, 1
        %v2827 = vpop.permute.xlu0 %2826
        %2828 = vrot.lane.b32.xlu0 %v2815, 1
        %v2829 = vpop.permute.xlu0 %2828
        %vm2830 = vcmask 7168
        %v2831 = vsel %vm2830, %v2823, %v2825
        %v2832 = vsel %vm2830, %v2825, %v2827
        %v2833 = vsel %vm2830, %v2827, %v2829
        %v2838 = vsel %vm1867, %v2817, 0
        %2840 = vmatprep.subr.mxu0 0.0
        %2841 = vmatpush1.msra.mxu0 0.0
        %2842 = vmatprep.subr.mxu0 0.0
        %2843 = vmatpush1.msra.mxu0 0.0
        %2844 = vmatprep.subr.mxu0 0.0
        %2845 = vmatpush1.msra.mxu0 0.0
        %2846 = vmatprep.subr.mxu0 0.0
        %2847 = vmatpush1.msra.mxu0 0.0
        %2848 = vmatprep.subr.mxu0 0.0
        %2849 = vmatpush1.msra.mxu0 0.0
        %2850 = vmatprep.subr.mxu0 0.0
        %2851 = vmatpush1.msra.mxu0 0.0
        %2852 = vmatprep.subr.mxu0 0.0
        %2853 = vmatpush1.msra.mxu0 0.0
        %2854 = vmatprep.subr.mxu0 0.0
        %2855 = vmatpush1.msra.mxu0 0.0
        %2856 = vmatprep.subr.mxu0 0.0
        %2857 = vmatpush1.msra.mxu0 0.0
        %2858 = vmatprep.subr.mxu0 0.0
        %2859 = vmatpush1.msra.mxu0 0.0
        %2860 = vmatprep.subr.mxu0 0.0
        %2861 = vmatpush1.msra.mxu0 0.0
        %2862 = vmatprep.subr.mxu0 0.0
        %2863 = vmatpush1.msra.mxu0 0.0
        %2864 = vmatprep.subr.mxu0 0.0
        %2865 = vmatpush1.msra.mxu0 0.0
        %2866 = vmatprep.subr.mxu0 0.0
        %2867 = vmatpush1.msra.mxu0 0.0
        %2868 = vmatprep.subr.mxu0 0.0
        %2869 = vmatpush1.msra.mxu0 0.0
        %2870 = vmatprep.subr.mxu0 %v2832
        %2871 = vmatpush1.msra.mxu0 %v2831
        %2872 = vmatprep.subr.mxu0 0.0
        %2873 = vmatpush2.msra.mxu0 0.0
        %2874 = vmatprep.subr.mxu0 0.0
        %2875 = vmatpush2.msra.mxu0 0.0
        %2876 = vmatprep.subr.mxu0 0.0
        %2877 = vmatpush2.msra.mxu0 0.0
        %2878 = vmatprep.subr.mxu0 0.0
        %2879 = vmatpush2.msra.mxu0 0.0
        %2880 = vmatprep.subr.mxu0 0.0
        %2881 = vmatpush2.msra.mxu0 0.0
        %2882 = vmatprep.subr.mxu0 0.0
        %2883 = vmatpush2.msra.mxu0 0.0
        %2884 = vmatprep.subr.mxu0 0.0
        %2885 = vmatpush2.msra.mxu0 0.0
        %2886 = vmatprep.subr.mxu0 0.0
        %2887 = vmatpush2.msra.mxu0 0.0
        %2888 = vmatprep.subr.mxu0 0.0
        %2889 = vmatpush2.msra.mxu0 0.0
        %2890 = vmatprep.subr.mxu0 0.0
        %2891 = vmatpush2.msra.mxu0 0.0
        %2892 = vmatprep.subr.mxu0 0.0
        %2893 = vmatpush2.msra.mxu0 0.0
        %2894 = vmatprep.subr.mxu0 0.0
        %2895 = vmatpush2.msra.mxu0 0.0
        %2896 = vmatprep.subr.mxu0 0.0
        %2897 = vmatpush2.msra.mxu0 0.0
        %2898 = vmatprep.subr.mxu0 0.0
        %2899 = vmatpush2.msra.mxu0 0.0
        %2900 = vmatprep.subr.mxu0 0.0
        %2901 = vmatpush2.msra.mxu0 0.0
        %2902 = vmatprep.subr.mxu0 0.0
        %2903 = vmatpush2.msra.mxu0 0.0
        %2904 = vmatprep.mubr.f32.mxu0 0.0
        %2905 = vmatmul.mubr.f32.gmra.mxu0 %v2838
        %v2906 = vpop.f32.mrf.mxu0
        %v2907 = vadd.f32 0.0, %v2906
        %v2908 = vpop.f32.mrf.mxu0
        %v2909 = vadd.f32 0.0, %v2908
        %2910 = vdwg.mxu0
        %2911 = vmatprep.subr.mxu0 0.0
        %2912 = vmatpush1.msra.mxu0 0.0
        %2913 = vmatprep.subr.mxu0 0.0
        %2914 = vmatpush1.msra.mxu0 0.0
        %2915 = vmatprep.subr.mxu0 0.0
        %2916 = vmatpush1.msra.mxu0 0.0
        %2917 = vmatprep.subr.mxu0 0.0
        %2918 = vmatpush1.msra.mxu0 0.0
        %2919 = vmatprep.subr.mxu0 0.0
        %2920 = vmatpush1.msra.mxu0 0.0
        %2921 = vmatprep.subr.mxu0 0.0
        %2922 = vmatpush1.msra.mxu0 0.0
        %2923 = vmatprep.subr.mxu0 0.0
        %2924 = vmatpush1.msra.mxu0 0.0
        %2925 = vmatprep.subr.mxu0 0.0
        %2926 = vmatpush1.msra.mxu0 0.0
        %2927 = vmatprep.subr.mxu0 0.0
        %2928 = vmatpush1.msra.mxu0 0.0
        %2929 = vmatprep.subr.mxu0 0.0
        %2930 = vmatpush1.msra.mxu0 0.0
        %2931 = vmatprep.subr.mxu0 0.0
        %2932 = vmatpush1.msra.mxu0 0.0
        %2933 = vmatprep.subr.mxu0 0.0
        %2934 = vmatpush1.msra.mxu0 0.0
        %2935 = vmatprep.subr.mxu0 0.0
        %2936 = vmatpush1.msra.mxu0 0.0
        %2937 = vmatprep.subr.mxu0 0.0
        %2938 = vmatpush1.msra.mxu0 0.0
        %2939 = vmatprep.subr.mxu0 0.0
        %2940 = vmatpush1.msra.mxu0 0.0
        %2941 = vmatprep.subr.mxu0 0.0
        %2942 = vmatpush1.msra.mxu0 %v2833
        %2943 = vmatprep.subr.mxu0 0.0
        %2944 = vmatpush2.msra.mxu0 0.0
        %2945 = vmatprep.subr.mxu0 0.0
        %2946 = vmatpush2.msra.mxu0 0.0
        %2947 = vmatprep.subr.mxu0 0.0
        %2948 = vmatpush2.msra.mxu0 0.0
        %2949 = vmatprep.subr.mxu0 0.0
        %2950 = vmatpush2.msra.mxu0 0.0
        %2951 = vmatprep.subr.mxu0 0.0
        %2952 = vmatpush2.msra.mxu0 0.0
        %2953 = vmatprep.subr.mxu0 0.0
        %2954 = vmatpush2.msra.mxu0 0.0
        %2955 = vmatprep.subr.mxu0 0.0
        %2956 = vmatpush2.msra.mxu0 0.0
        %2957 = vmatprep.subr.mxu0 0.0
        %2958 = vmatpush2.msra.mxu0 0.0
        %2959 = vmatprep.subr.mxu0 0.0
        %2960 = vmatpush2.msra.mxu0 0.0
        %2961 = vmatprep.subr.mxu0 0.0
        %2962 = vmatpush2.msra.mxu0 0.0
        %2963 = vmatprep.subr.mxu0 0.0
        %2964 = vmatpush2.msra.mxu0 0.0
        %2965 = vmatprep.subr.mxu0 0.0
        %2966 = vmatpush2.msra.mxu0 0.0
        %2967 = vmatprep.subr.mxu0 0.0
        %2968 = vmatpush2.msra.mxu0 0.0
        %2969 = vmatprep.subr.mxu0 0.0
        %2970 = vmatpush2.msra.mxu0 0.0
        %2971 = vmatprep.subr.mxu0 0.0
        %2972 = vmatpush2.msra.mxu0 0.0
        %2973 = vmatprep.subr.mxu0 0.0
        %2974 = vmatpush2.msra.mxu0 0.0
        %2975 = vmatprep.mubr.f32.mxu0 0.0
        %2976 = vmatmul.mubr.f32.gmra.mxu0 %v2838
        %v2977 = vpop.f32.mrf.mxu0
        %v2978 = vadd.f32 0.0, %v2977
        %v2979 = vpop.f32.mrf.mxu0
        %2980 = vdwg.mxu0
        %v2981 = vadd.f32 %v2809, %v2907
        %v2982 = vadd.f32 %v2810, %v2909
        %v2983 = vadd.f32 %v2811, %v2978
        %s2984 = scalar_lea.vmem %s4, 56
        %v2985 = vld [vmem:[%s2984] sm:$0xff]
        %v2987 = vsel %vm1867, %v2985, 0
        %2989 = vmatprep.subr.mxu0 0.0
        %2990 = vmatpush1.msra.mxu0 0.0
        %2991 = vmatprep.subr.mxu0 0.0
        %2992 = vmatpush1.msra.mxu0 0.0
        %2993 = vmatprep.subr.mxu0 0.0
        %2994 = vmatpush1.msra.mxu0 0.0
        %2995 = vmatprep.subr.mxu0 0.0
        %2996 = vmatpush1.msra.mxu0 0.0
        %2997 = vmatprep.subr.mxu0 0.0
        %2998 = vmatpush1.msra.mxu0 0.0
        %2999 = vmatprep.subr.mxu0 0.0
        %3000 = vmatpush1.msra.mxu0 0.0
        %3001 = vmatprep.subr.mxu0 0.0
        %3002 = vmatpush1.msra.mxu0 0.0
        %3003 = vmatprep.subr.mxu0 0.0
        %3004 = vmatpush1.msra.mxu0 0.0
        %3005 = vmatprep.subr.mxu0 0.0
        %3006 = vmatpush1.msra.mxu0 0.0
        %3007 = vmatprep.subr.mxu0 0.0
        %3008 = vmatpush1.msra.mxu0 0.0
        %3009 = vmatprep.subr.mxu0 0.0
        %3010 = vmatpush1.msra.mxu0 0.0
        %3011 = vmatprep.subr.mxu0 0.0
        %3012 = vmatpush1.msra.mxu0 0.0
        %3013 = vmatprep.subr.mxu0 0.0
        %3014 = vmatpush1.msra.mxu0 0.0
        %3015 = vmatprep.subr.mxu0 0.0
        %3016 = vmatpush1.msra.mxu0 0.0
        %3017 = vmatprep.subr.mxu0 0.0
        %3018 = vmatpush1.msra.mxu0 0.0
        %3019 = vmatprep.subr.mxu0 %v2814
        %3020 = vmatpush1.msra.mxu0 %v2813
        %3021 = vmatprep.subr.mxu0 0.0
        %3022 = vmatpush2.msra.mxu0 0.0
        %3023 = vmatprep.subr.mxu0 0.0
        %3024 = vmatpush2.msra.mxu0 0.0
        %3025 = vmatprep.subr.mxu0 0.0
        %3026 = vmatpush2.msra.mxu0 0.0
        %3027 = vmatprep.subr.mxu0 0.0
        %3028 = vmatpush2.msra.mxu0 0.0
        %3029 = vmatprep.subr.mxu0 0.0
        %3030 = vmatpush2.msra.mxu0 0.0
        %3031 = vmatprep.subr.mxu0 0.0
        %3032 = vmatpush2.msra.mxu0 0.0
        %3033 = vmatprep.subr.mxu0 0.0
        %3034 = vmatpush2.msra.mxu0 0.0
        %3035 = vmatprep.subr.mxu0 0.0
        %3036 = vmatpush2.msra.mxu0 0.0
        %3037 = vmatprep.subr.mxu0 0.0
        %3038 = vmatpush2.msra.mxu0 0.0
        %3039 = vmatprep.subr.mxu0 0.0
        %3040 = vmatpush2.msra.mxu0 0.0
        %3041 = vmatprep.subr.mxu0 0.0
        %3042 = vmatpush2.msra.mxu0 0.0
        %3043 = vmatprep.subr.mxu0 0.0
        %3044 = vmatpush2.msra.mxu0 0.0
        %3045 = vmatprep.subr.mxu0 0.0
        %3046 = vmatpush2.msra.mxu0 0.0
        %3047 = vmatprep.subr.mxu0 0.0
        %3048 = vmatpush2.msra.mxu0 0.0
        %3049 = vmatprep.subr.mxu0 0.0
        %3050 = vmatpush2.msra.mxu0 0.0
        %3051 = vmatprep.subr.mxu0 0.0
        %3052 = vmatpush2.msra.mxu0 0.0
        %3053 = vmatprep.mubr.f32.mxu0 0.0
        %3054 = vmatmul.mubr.f32.gmra.mxu0 %v2987
        %v3055 = vpop.f32.mrf.mxu0
        %v3056 = vadd.f32 0.0, %v3055
        %v3057 = vpop.f32.mrf.mxu0
        %v3058 = vadd.f32 0.0, %v3057
        %3059 = vdwg.mxu0
        %3060 = vmatprep.subr.mxu0 0.0
        %3061 = vmatpush1.msra.mxu0 0.0
        %3062 = vmatprep.subr.mxu0 0.0
        %3063 = vmatpush1.msra.mxu0 0.0
        %3064 = vmatprep.subr.mxu0 0.0
        %3065 = vmatpush1.msra.mxu0 0.0
        %3066 = vmatprep.subr.mxu0 0.0
        %3067 = vmatpush1.msra.mxu0 0.0
        %3068 = vmatprep.subr.mxu0 0.0
        %3069 = vmatpush1.msra.mxu0 0.0
        %3070 = vmatprep.subr.mxu0 0.0
        %3071 = vmatpush1.msra.mxu0 0.0
        %3072 = vmatprep.subr.mxu0 0.0
        %3073 = vmatpush1.msra.mxu0 0.0
        %3074 = vmatprep.subr.mxu0 0.0
        %3075 = vmatpush1.msra.mxu0 0.0
        %3076 = vmatprep.subr.mxu0 0.0
        %3077 = vmatpush1.msra.mxu0 0.0
        %3078 = vmatprep.subr.mxu0 0.0
        %3079 = vmatpush1.msra.mxu0 0.0
        %3080 = vmatprep.subr.mxu0 0.0
        %3081 = vmatpush1.msra.mxu0 0.0
        %3082 = vmatprep.subr.mxu0 0.0
        %3083 = vmatpush1.msra.mxu0 0.0
        %3084 = vmatprep.subr.mxu0 0.0
        %3085 = vmatpush1.msra.mxu0 0.0
        %3086 = vmatprep.subr.mxu0 0.0
        %3087 = vmatpush1.msra.mxu0 0.0
        %3088 = vmatprep.subr.mxu0 0.0
        %3089 = vmatpush1.msra.mxu0 0.0
        %3090 = vmatprep.subr.mxu0 0.0
        %3091 = vmatpush1.msra.mxu0 %v2815
        %3092 = vmatprep.subr.mxu0 0.0
        %3093 = vmatpush2.msra.mxu0 0.0
        %3094 = vmatprep.subr.mxu0 0.0
        %3095 = vmatpush2.msra.mxu0 0.0
        %3096 = vmatprep.subr.mxu0 0.0
        %3097 = vmatpush2.msra.mxu0 0.0
        %3098 = vmatprep.subr.mxu0 0.0
        %3099 = vmatpush2.msra.mxu0 0.0
        %3100 = vmatprep.subr.mxu0 0.0
        %3101 = vmatpush2.msra.mxu0 0.0
        %3102 = vmatprep.subr.mxu0 0.0
        %3103 = vmatpush2.msra.mxu0 0.0
        %3104 = vmatprep.subr.mxu0 0.0
        %3105 = vmatpush2.msra.mxu0 0.0
        %3106 = vmatprep.subr.mxu0 0.0
        %3107 = vmatpush2.msra.mxu0 0.0
        %3108 = vmatprep.subr.mxu0 0.0
        %3109 = vmatpush2.msra.mxu0 0.0
        %3110 = vmatprep.subr.mxu0 0.0
        %3111 = vmatpush2.msra.mxu0 0.0
        %3112 = vmatprep.subr.mxu0 0.0
        %3113 = vmatpush2.msra.mxu0 0.0
        %3114 = vmatprep.subr.mxu0 0.0
        %3115 = vmatpush2.msra.mxu0 0.0
        %3116 = vmatprep.subr.mxu0 0.0
        %3117 = vmatpush2.msra.mxu0 0.0
        %3118 = vmatprep.subr.mxu0 0.0
        %3119 = vmatpush2.msra.mxu0 0.0
        %3120 = vmatprep.subr.mxu0 0.0
        %3121 = vmatpush2.msra.mxu0 0.0
        %3122 = vmatprep.subr.mxu0 0.0
        %3123 = vmatpush2.msra.mxu0 0.0
        %3124 = vmatprep.mubr.f32.mxu0 0.0
        %3125 = vmatmul.mubr.f32.gmra.mxu0 %v2987
        %v3126 = vpop.f32.mrf.mxu0
        %v3127 = vadd.f32 0.0, %v3126
        %v3128 = vpop.f32.mrf.mxu0
        %3129 = vdwg.mxu0
        %v3130 = vadd.f32 %v2981, %v3056
        %v3131 = vadd.f32 %v2982, %v3058
        %v3132 = vadd.f32 %v2983, %v3127
        %s3133 = scalar_lea.vmem %s4, 64
        %v3134 = vld [vmem:[%s3133] sm:$0xff]
        %3135 = vrot.lane.b32.xlu0 %v2813, 127
        %v3136 = vpop.permute.xlu0 %3135
        %3137 = vrot.lane.b32.xlu0 %v2814, 127
        %v3138 = vpop.permute.xlu0 %3137
        %3139 = vrot.lane.b32.xlu0 %v2815, 127
        %v3140 = vpop.permute.xlu0 %3139
        %v3141 = vsel %vm318, %v3136, %v3138
        %v3142 = vsel %vm318, %v3138, %v3140
        %v3147 = vsel %vm1867, %v3134, 0
        %3149 = vmatprep.subr.mxu0 0.0
        %3150 = vmatpush1.msra.mxu0 0.0
        %3151 = vmatprep.subr.mxu0 0.0
        %3152 = vmatpush1.msra.mxu0 0.0
        %3153 = vmatprep.subr.mxu0 0.0
        %3154 = vmatpush1.msra.mxu0 0.0
        %3155 = vmatprep.subr.mxu0 0.0
        %3156 = vmatpush1.msra.mxu0 0.0
        %3157 = vmatprep.subr.mxu0 0.0
        %3158 = vmatpush1.msra.mxu0 0.0
        %3159 = vmatprep.subr.mxu0 0.0
        %3160 = vmatpush1.msra.mxu0 0.0
        %3161 = vmatprep.subr.mxu0 0.0
        %3162 = vmatpush1.msra.mxu0 0.0
        %3163 = vmatprep.subr.mxu0 0.0
        %3164 = vmatpush1.msra.mxu0 0.0
        %3165 = vmatprep.subr.mxu0 0.0
        %3166 = vmatpush1.msra.mxu0 0.0
        %3167 = vmatprep.subr.mxu0 0.0
        %3168 = vmatpush1.msra.mxu0 0.0
        %3169 = vmatprep.subr.mxu0 0.0
        %3170 = vmatpush1.msra.mxu0 0.0
        %3171 = vmatprep.subr.mxu0 0.0
        %3172 = vmatpush1.msra.mxu0 0.0
        %3173 = vmatprep.subr.mxu0 0.0
        %3174 = vmatpush1.msra.mxu0 0.0
        %3175 = vmatprep.subr.mxu0 0.0
        %3176 = vmatpush1.msra.mxu0 0.0
        %3177 = vmatprep.subr.mxu0 0.0
        %3178 = vmatpush1.msra.mxu0 0.0
        %3179 = vmatprep.subr.mxu0 %v3142
        %3180 = vmatpush1.msra.mxu0 %v3141
        %3181 = vmatprep.subr.mxu0 0.0
        %3182 = vmatpush2.msra.mxu0 0.0
        %3183 = vmatprep.subr.mxu0 0.0
        %3184 = vmatpush2.msra.mxu0 0.0
        %3185 = vmatprep.subr.mxu0 0.0
        %3186 = vmatpush2.msra.mxu0 0.0
        %3187 = vmatprep.subr.mxu0 0.0
        %3188 = vmatpush2.msra.mxu0 0.0
        %3189 = vmatprep.subr.mxu0 0.0
        %3190 = vmatpush2.msra.mxu0 0.0
        %3191 = vmatprep.subr.mxu0 0.0
        %3192 = vmatpush2.msra.mxu0 0.0
        %3193 = vmatprep.subr.mxu0 0.0
        %3194 = vmatpush2.msra.mxu0 0.0
        %3195 = vmatprep.subr.mxu0 0.0
        %3196 = vmatpush2.msra.mxu0 0.0
        %3197 = vmatprep.subr.mxu0 0.0
        %3198 = vmatpush2.msra.mxu0 0.0
        %3199 = vmatprep.subr.mxu0 0.0
        %3200 = vmatpush2.msra.mxu0 0.0
        %3201 = vmatprep.subr.mxu0 0.0
        %3202 = vmatpush2.msra.mxu0 0.0
        %3203 = vmatprep.subr.mxu0 0.0
        %3204 = vmatpush2.msra.mxu0 0.0
        %3205 = vmatprep.subr.mxu0 0.0
        %3206 = vmatpush2.msra.mxu0 0.0
        %3207 = vmatprep.subr.mxu0 0.0
        %3208 = vmatpush2.msra.mxu0 0.0
        %3209 = vmatprep.subr.mxu0 0.0
        %3210 = vmatpush2.msra.mxu0 0.0
        %3211 = vmatprep.subr.mxu0 0.0
        %3212 = vmatpush2.msra.mxu0 0.0
        %3213 = vmatprep.mubr.f32.mxu0 0.0
        %3214 = vmatmul.mubr.f32.gmra.mxu0 %v3147
        %v3215 = vpop.f32.mrf.mxu0
        %v3216 = vadd.f32 0.0, %v3215
        %v3217 = vpop.f32.mrf.mxu0
        %v3218 = vadd.f32 0.0, %v3217
        %3219 = vdwg.mxu0
        %3220 = vmatprep.subr.mxu0 0.0
        %3221 = vmatpush1.msra.mxu0 0.0
        %3222 = vmatprep.subr.mxu0 0.0
        %3223 = vmatpush1.msra.mxu0 0.0
        %3224 = vmatprep.subr.mxu0 0.0
        %3225 = vmatpush1.msra.mxu0 0.0
        %3226 = vmatprep.subr.mxu0 0.0
        %3227 = vmatpush1.msra.mxu0 0.0
        %3228 = vmatprep.subr.mxu0 0.0
        %3229 = vmatpush1.msra.mxu0 0.0
        %3230 = vmatprep.subr.mxu0 0.0
        %3231 = vmatpush1.msra.mxu0 0.0
        %3232 = vmatprep.subr.mxu0 0.0
        %3233 = vmatpush1.msra.mxu0 0.0
        %3234 = vmatprep.subr.mxu0 0.0
        %3235 = vmatpush1.msra.mxu0 0.0
        %3236 = vmatprep.subr.mxu0 0.0
        %3237 = vmatpush1.msra.mxu0 0.0
        %3238 = vmatprep.subr.mxu0 0.0
        %3239 = vmatpush1.msra.mxu0 0.0
        %3240 = vmatprep.subr.mxu0 0.0
        %3241 = vmatpush1.msra.mxu0 0.0
        %3242 = vmatprep.subr.mxu0 0.0
        %3243 = vmatpush1.msra.mxu0 0.0
        %3244 = vmatprep.subr.mxu0 0.0
        %3245 = vmatpush1.msra.mxu0 0.0
        %3246 = vmatprep.subr.mxu0 0.0
        %3247 = vmatpush1.msra.mxu0 0.0
        %3248 = vmatprep.subr.mxu0 0.0
        %3249 = vmatpush1.msra.mxu0 0.0
        %3250 = vmatprep.subr.mxu0 0.0
        %3251 = vmatpush1.msra.mxu0 %v3140
        %3252 = vmatprep.subr.mxu0 0.0
        %3253 = vmatpush2.msra.mxu0 0.0
        %3254 = vmatprep.subr.mxu0 0.0
        %3255 = vmatpush2.msra.mxu0 0.0
        %3256 = vmatprep.subr.mxu0 0.0
        %3257 = vmatpush2.msra.mxu0 0.0
        %3258 = vmatprep.subr.mxu0 0.0
        %3259 = vmatpush2.msra.mxu0 0.0
        %3260 = vmatprep.subr.mxu0 0.0
        %3261 = vmatpush2.msra.mxu0 0.0
        %3262 = vmatprep.subr.mxu0 0.0
        %3263 = vmatpush2.msra.mxu0 0.0
        %3264 = vmatprep.subr.mxu0 0.0
        %3265 = vmatpush2.msra.mxu0 0.0
        %3266 = vmatprep.subr.mxu0 0.0
        %3267 = vmatpush2.msra.mxu0 0.0
        %3268 = vmatprep.subr.mxu0 0.0
        %3269 = vmatpush2.msra.mxu0 0.0
        %3270 = vmatprep.subr.mxu0 0.0
        %3271 = vmatpush2.msra.mxu0 0.0
        %3272 = vmatprep.subr.mxu0 0.0
        %3273 = vmatpush2.msra.mxu0 0.0
        %3274 = vmatprep.subr.mxu0 0.0
        %3275 = vmatpush2.msra.mxu0 0.0
        %3276 = vmatprep.subr.mxu0 0.0
        %3277 = vmatpush2.msra.mxu0 0.0
        %3278 = vmatprep.subr.mxu0 0.0
        %3279 = vmatpush2.msra.mxu0 0.0
        %3280 = vmatprep.subr.mxu0 0.0
        %3281 = vmatpush2.msra.mxu0 0.0
        %3282 = vmatprep.subr.mxu0 0.0
        %3283 = vmatpush2.msra.mxu0 0.0
        %3284 = vmatprep.mubr.f32.mxu0 0.0
        %3285 = vmatmul.mubr.f32.gmra.mxu0 %v3147
        %v3286 = vpop.f32.mrf.mxu0
        %v3287 = vadd.f32 0.0, %v3286
        %v3288 = vpop.f32.mrf.mxu0
        %3289 = vdwg.mxu0
        %v3290 = vadd.f32 %v3130, %v3216
        %v3291 = vadd.f32 %v3131, %v3218
        %v3292 = vadd.f32 %v3132, %v3287
        %v3293 = vld [vmem:[%s5] sm:$0xff]
        %3295 = vset.pattern.permute.xlu0 0
        %3296 = vperm.xlu0 %3295, %v3293
        %v3297 = vpop.permute.xlu0 %3296
        %v3299 = vadd.f32 %v3290, %v3297
        %v3300 = vadd.f32 %v3291, %v3297
        %v3301 = vadd.f32 %v3292, %v3297
        %v3302 = vld [vmem:[%s303] sm:$0xff]
        %v3303 = vld [vmem:[%s303 + $0x8] sm:$0xf]
        %v3304 = vld [vmem:[%s6] sm:$0xff]
        %v3307 = vcombine.high %v3302, %v3302
        %3308 = vrot.lane.b32.xlu0 %v3302, 55
        %v3309 = vpop.permute.xlu0 %3308
        %3310 = vrot.lane.b32.xlu0 %v3307, 55
        %v3311 = vpop.permute.xlu0 %3310
        %3312 = vrot.lane.b32.xlu0 %v3303, 55
        %v3313 = vpop.permute.xlu0 %3312
        %v3314 = vsel %vm1481, %v3309, %v3311
        %v3315 = vsel %vm1481, %v3311, %v3313
        %v3317 = vsel %vm321, %v3304, 0
        %v3319 = vsel %vm325, %v3314, 0
        %v3321 = vsel %vm325, %v3315, 0
        %v3323 = vsel %vm325, %v3313, 0
        %3325 = vmatprep.subr.mxu0 0.0
        %3326 = vmatpush1.msra.mxu0 0.0
        %3327 = vmatprep.subr.mxu0 0.0
        %3328 = vmatpush1.msra.mxu0 0.0
        %3329 = vmatprep.subr.mxu0 0.0
        %3330 = vmatpush1.msra.mxu0 0.0
        %3331 = vmatprep.subr.mxu0 0.0
        %3332 = vmatpush1.msra.mxu0 0.0
        %3333 = vmatprep.subr.mxu0 0.0
        %3334 = vmatpush1.msra.mxu0 0.0
        %3335 = vmatprep.subr.mxu0 0.0
        %3336 = vmatpush1.msra.mxu0 0.0
        %3337 = vmatprep.subr.mxu0 0.0
        %3338 = vmatpush1.msra.mxu0 0.0
        %3339 = vmatprep.subr.mxu0 0.0
        %3340 = vmatpush1.msra.mxu0 0.0
        %3341 = vmatprep.subr.mxu0 0.0
        %3342 = vmatpush1.msra.mxu0 0.0
        %3343 = vmatprep.subr.mxu0 0.0
        %3344 = vmatpush1.msra.mxu0 0.0
        %3345 = vmatprep.subr.mxu0 0.0
        %3346 = vmatpush1.msra.mxu0 0.0
        %3347 = vmatprep.subr.mxu0 0.0
        %3348 = vmatpush1.msra.mxu0 0.0
        %3349 = vmatprep.subr.mxu0 0.0
        %3350 = vmatpush1.msra.mxu0 0.0
        %3351 = vmatprep.subr.mxu0 0.0
        %3352 = vmatpush1.msra.mxu0 0.0
        %3353 = vmatprep.subr.mxu0 0.0
        %3354 = vmatpush1.msra.mxu0 0.0
        %3355 = vmatprep.subr.mxu0 %v3321
        %3356 = vmatpush1.msra.mxu0 %v3319
        %3357 = vmatprep.subr.mxu0 0.0
        %3358 = vmatpush2.msra.mxu0 0.0
        %3359 = vmatprep.subr.mxu0 0.0
        %3360 = vmatpush2.msra.mxu0 0.0
        %3361 = vmatprep.subr.mxu0 0.0
        %3362 = vmatpush2.msra.mxu0 0.0
        %3363 = vmatprep.subr.mxu0 0.0
        %3364 = vmatpush2.msra.mxu0 0.0
        %3365 = vmatprep.subr.mxu0 0.0
        %3366 = vmatpush2.msra.mxu0 0.0
        %3367 = vmatprep.subr.mxu0 0.0
        %3368 = vmatpush2.msra.mxu0 0.0
        %3369 = vmatprep.subr.mxu0 0.0
        %3370 = vmatpush2.msra.mxu0 0.0
        %3371 = vmatprep.subr.mxu0 0.0
        %3372 = vmatpush2.msra.mxu0 0.0
        %3373 = vmatprep.subr.mxu0 0.0
        %3374 = vmatpush2.msra.mxu0 0.0
        %3375 = vmatprep.subr.mxu0 0.0
        %3376 = vmatpush2.msra.mxu0 0.0
        %3377 = vmatprep.subr.mxu0 0.0
        %3378 = vmatpush2.msra.mxu0 0.0
        %3379 = vmatprep.subr.mxu0 0.0
        %3380 = vmatpush2.msra.mxu0 0.0
        %3381 = vmatprep.subr.mxu0 0.0
        %3382 = vmatpush2.msra.mxu0 0.0
        %3383 = vmatprep.subr.mxu0 0.0
        %3384 = vmatpush2.msra.mxu0 0.0
        %3385 = vmatprep.subr.mxu0 0.0
        %3386 = vmatpush2.msra.mxu0 0.0
        %3387 = vmatprep.subr.mxu0 0.0
        %3388 = vmatpush2.msra.mxu0 0.0
        %3389 = vmatprep.mubr.f32.mxu0 0.0
        %3390 = vmatmul.mubr.f32.gmra.mxu0 %v3317
        %v3391 = vpop.f32.mrf.mxu0
        %v3392 = vadd.f32 0.0, %v3391
        %v3393 = vpop.f32.mrf.mxu0
        %v3394 = vadd.f32 0.0, %v3393
        %3395 = vdwg.mxu0
        %3396 = vmatprep.subr.mxu0 0.0
        %3397 = vmatpush1.msra.mxu0 0.0
        %3398 = vmatprep.subr.mxu0 0.0
        %3399 = vmatpush1.msra.mxu0 0.0
        %3400 = vmatprep.subr.mxu0 0.0
        %3401 = vmatpush1.msra.mxu0 0.0
        %3402 = vmatprep.subr.mxu0 0.0
        %3403 = vmatpush1.msra.mxu0 0.0
        %3404 = vmatprep.subr.mxu0 0.0
        %3405 = vmatpush1.msra.mxu0 0.0
        %3406 = vmatprep.subr.mxu0 0.0
        %3407 = vmatpush1.msra.mxu0 0.0
        %3408 = vmatprep.subr.mxu0 0.0
        %3409 = vmatpush1.msra.mxu0 0.0
        %3410 = vmatprep.subr.mxu0 0.0
        %3411 = vmatpush1.msra.mxu0 0.0
        %3412 = vmatprep.subr.mxu0 0.0
        %3413 = vmatpush1.msra.mxu0 0.0
        %3414 = vmatprep.subr.mxu0 0.0
        %3415 = vmatpush1.msra.mxu0 0.0
        %3416 = vmatprep.subr.mxu0 0.0
        %3417 = vmatpush1.msra.mxu0 0.0
        %3418 = vmatprep.subr.mxu0 0.0
        %3419 = vmatpush1.msra.mxu0 0.0
        %3420 = vmatprep.subr.mxu0 0.0
        %3421 = vmatpush1.msra.mxu0 0.0
        %3422 = vmatprep.subr.mxu0 0.0
        %3423 = vmatpush1.msra.mxu0 0.0
        %3424 = vmatprep.subr.mxu0 0.0
        %3425 = vmatpush1.msra.mxu0 0.0
        %3426 = vmatprep.subr.mxu0 0.0
        %3427 = vmatpush1.msra.mxu0 %v3323
        %3428 = vmatprep.subr.mxu0 0.0
        %3429 = vmatpush2.msra.mxu0 0.0
        %3430 = vmatprep.subr.mxu0 0.0
        %3431 = vmatpush2.msra.mxu0 0.0
        %3432 = vmatprep.subr.mxu0 0.0
        %3433 = vmatpush2.msra.mxu0 0.0
        %3434 = vmatprep.subr.mxu0 0.0
        %3435 = vmatpush2.msra.mxu0 0.0
        %3436 = vmatprep.subr.mxu0 0.0
        %3437 = vmatpush2.msra.mxu0 0.0
        %3438 = vmatprep.subr.mxu0 0.0
        %3439 = vmatpush2.msra.mxu0 0.0
        %3440 = vmatprep.subr.mxu0 0.0
        %3441 = vmatpush2.msra.mxu0 0.0
        %3442 = vmatprep.subr.mxu0 0.0
        %3443 = vmatpush2.msra.mxu0 0.0
        %3444 = vmatprep.subr.mxu0 0.0
        %3445 = vmatpush2.msra.mxu0 0.0
        %3446 = vmatprep.subr.mxu0 0.0
        %3447 = vmatpush2.msra.mxu0 0.0
        %3448 = vmatprep.subr.mxu0 0.0
        %3449 = vmatpush2.msra.mxu0 0.0
        %3450 = vmatprep.subr.mxu0 0.0
        %3451 = vmatpush2.msra.mxu0 0.0
        %3452 = vmatprep.subr.mxu0 0.0
        %3453 = vmatpush2.msra.mxu0 0.0
        %3454 = vmatprep.subr.mxu0 0.0
        %3455 = vmatpush2.msra.mxu0 0.0
        %3456 = vmatprep.subr.mxu0 0.0
        %3457 = vmatpush2.msra.mxu0 0.0
        %3458 = vmatprep.subr.mxu0 0.0
        %3459 = vmatpush2.msra.mxu0 0.0
        %3460 = vmatprep.mubr.f32.mxu0 0.0
        %3461 = vmatmul.mubr.f32.gmra.mxu0 %v3317
        %v3462 = vpop.f32.mrf.mxu0
        %v3463 = vadd.f32 0.0, %v3462
        %v3464 = vpop.f32.mrf.mxu0
        %3465 = vdwg.mxu0
        %v3466 = vadd.f32 %v3299, %v3392
        %v3467 = vadd.f32 %v3300, %v3394
        %v3468 = vadd.f32 %v3301, %v3463
        %v3469 = vld [vmem:[%s7] sm:$0xff]
        %3471 = vset.pattern.permute.xlu0 0
        %3472 = vperm.xlu0 %3471, %v3469
        %v3473 = vpop.permute.xlu0 %3472
        %v3475 = vadd.f32 %v3466, %v3473
        %v3476 = vadd.f32 %v3467, %v3473
        %v3477 = vadd.f32 %v3468, %v3473
        %v3478 = vmax.f32 %v3475, 0.0
        %v3479 = vmax.f32 %v3476, 0.0
        %v3480 = vmax.f32 %v3477, 0.0
        %3481 = vst [vmem:[%s298] sm:$0xff] %v3478
        %3482 = vst [vmem:[%s298 + $0x8] sm:$0xff] %v3479
        %3483 = vst.msk [vmem:[%s298 + $0x10] sm:$0xff] %vm1844, %v3480
        %s3484 = sand.u32 %s203, 1
        %s3485 = scalar_lea.sflag [#allocation4], %s3484
        %s3486 = sand.u32 %s203, 1
        %s3487 = smul.addr %s3486, 24
        %s3488 = scalar_lea.vmem [#allocation3], %s3487
        // Predicated region
        $region53: #{tpu_custom_call.1} parent=51 // pred_check
          %p3489 = pneg %p213
        $region54: #{tpu_custom_call.1} parent=51 // pred_check_branch
          %3491 = sbr.rel (%p3489) target = $region56
        $region55: #{tpu_custom_call.1} parent=51 // pred_region
          %s3493 = ssub.s32 384, 384
          %3494 = vsyncadd %s3485, %s3493
          %s3495 = smul.addr %s22, 3
          %s3496 = smul.addr %s3495, 128
          %s3497 = scalar_lea.hbm %s8, %s3496
          %s3499 = sshll.u32 %s3488, 4
          %s3500 = int_to_ptr.vmem [resolvable:$true] %s3499
          %3502 = dma.vmem_to_hbm [thread:$0]  %s3500, 384, %s3497, %s3485
        $region56: #{tpu_custom_call.1} parent=51 // pred_fallthru
          _
      $region52: #{tpu_custom_call.1} parent=5 // pred_fallthru
        _
      %p3503 = scmp.le.s32.totalorder 2, %s17
      // Predicated region
      $region57: #{tpu_custom_call.1} parent=5 // pred_check
        %p3504 = pneg %p3503
      $region58: #{tpu_custom_call.1} parent=5 // pred_check_branch
        %3506 = sbr.rel (%p3504) target = $region60
      $region59: #{tpu_custom_call.1} parent=5 // pred_region
        %s3507 = ssub.s32 %s17, 2
        // Predicated region
        $region61: #{tpu_custom_call.1} parent=59 // pred_check
          %p3508 = pneg %p219
        $region62: #{tpu_custom_call.1} parent=59 // pred_check_branch
          %3510 = sbr.rel (%p3508) target = $region64
        $region63: #{tpu_custom_call.1} parent=59 // pred_region
          %s3511 = sand.u32 %s204, 1
          %s3512 = scalar_lea.sflag [#allocation4], %s3511
          %s3513 = sand.u32 %s204, 1
          %s3514 = smul.addr %s3513, 24
          %s3515 = scalar_lea.vmem [#allocation3], %s3514
          %3516 = dma.done %s3512, 384
        $region64: #{tpu_custom_call.1} parent=59 // pred_fallthru
          _
      $region60: #{tpu_custom_call.1} parent=5 // pred_fallthru
        _
    $region6: #{tpu_custom_call.1} parent=1 // loop_footer
      %s21 = sadd.s32 1, %s17
    $region7: #{tpu_custom_call.1} parent=1 // loop_footer_branch
      %16 = sbr.rel target = $region3
    $region8: #{tpu_custom_call.1} parent=1 // loop_exit
      _
    %3517 = vsyncpa [#allocation4], 1
    %s3518 = scalar_lea.sflag [#allocation4], 1
    %3519 = vsyncpa %s3518, 1

</llo_original>
